<compile_context>
chip_gen: v7x
topology: tpu7x:2x2x1
jax: 0.10.0
libtpu: 0.0.40
codegen_flags: <defaults>
</compile_context>

<pallas_src>
import functools
import math

import jax
import jax.numpy as jnp
from jax import lax
from jax.experimental import pallas as pl
from jax.experimental.pallas import tpu as pltpu

NEG_INF = -1e30


# ---------------------------------------------------------------------------
# Plain tiled matmul kernel (output projection)
# ---------------------------------------------------------------------------
def _matmul_kernel(a_ref, b_ref, o_ref, acc_ref):
    @pl.when(pl.program_id(2) == 0)
    def _():
        acc_ref[...] = jnp.zeros_like(acc_ref)

    acc_ref[...] += jnp.dot(a_ref[...], b_ref[...],
                            preferred_element_type=jnp.float32)

    @pl.when(pl.program_id(2) == pl.num_programs(2) - 1)
    def _():
        o_ref[...] = acc_ref[...].astype(o_ref.dtype)


def linear(x, w, *, tm=256, tn=256, tk=512):
    """x: (..., K) @ w: (K, N) -> (..., N) via a Pallas tiled matmul."""
    *lead, K = x.shape
    N = w.shape[1]
    M = math.prod(lead)
    a = x.reshape(M, K)

    tm = min(tm, M)
    tn = min(tn, N)
    tk = min(tk, K)
    assert M % tm == 0 and N % tn == 0 and K % tk == 0, (M, N, K, tm, tn, tk)

    out = pl.pallas_call(
        _matmul_kernel,
        out_shape=jax.ShapeDtypeStruct((M, N), x.dtype),
        grid=(M // tm, N // tn, K // tk),
        in_specs=[
            pl.BlockSpec((tm, tk), lambda i, j, k: (i, k)),
            pl.BlockSpec((tk, tn), lambda i, j, k: (k, j)),
        ],
        out_specs=pl.BlockSpec((tm, tn), lambda i, j, k: (i, j)),
        scratch_shapes=[pltpu.VMEM((tm, tn), jnp.float32)],
        compiler_params=pltpu.CompilerParams(
            dimension_semantics=("parallel", "parallel", "arbitrary")),
    )(a, w)
    return out.reshape(*lead, N)


# ---------------------------------------------------------------------------
# Fused QKV projection + RoPE epilogue kernel
#
# RoPE (rotate-half form; interleave pre-folded into weight columns) is applied
# to the q/k column regions of the accumulator in the final-K-step epilogue:
#   out = acc * cos + roll(acc, -d2) * sin_a + roll(acc, +d2) * sin_b
# sin_a is nonzero only on first-half columns (-sin), sin_b only on second-half
# columns (+sin); the v-region columns have cos=1, sin_a=sin_b=0 (identity).
# Rolls are over the lane axis; wrapped positions always land where the sin
# coefficient is zero (tiles are head-aligned), so no per-head reshape is needed.
# ---------------------------------------------------------------------------
def _qkv_rope_kernel(x_ref, w_ref, cos_ref, sina_ref, sinb_ref, o_ref, acc_ref,
                     *, d2):
    @pl.when(pl.program_id(2) == 0)
    def _():
        acc_ref[...] = jnp.zeros_like(acc_ref)

    acc_ref[...] += jnp.dot(x_ref[...], w_ref[...],
                            preferred_element_type=jnp.float32)

    @pl.when(pl.program_id(2) == pl.num_programs(2) - 1)
    def _():
        acc = acc_ref[...]                       # (tm, tn) f32
        tn = acc.shape[-1]
        fwd = pltpu.roll(acc, d2, axis=1)        # acc[:, n - d2]
        bwd = pltpu.roll(acc, tn - d2, axis=1)   # acc[:, n + d2]  (== roll by -d2)
        out = (acc * cos_ref[...].astype(jnp.float32)
               + bwd * sina_ref[...].astype(jnp.float32)
               + fwd * sinb_ref[...].astype(jnp.float32))
        o_ref[...] = out.astype(o_ref.dtype)


def qkv_proj_rope(x2d, w_qkv, cos, sina, sinb, *, seq_len, head_dim,
                  tm=256, tn=256, tk=512):
    """x2d: (b*s, K) @ w_qkv: (K, N_total) with fused RoPE on q/k columns."""
    M, K = x2d.shape
    N = w_qkv.shape[1]
    tm = min(tm, seq_len, M)
    tn = min(tn, N)
    tk = min(tk, K)
    assert seq_len % tm == 0 and M % tm == 0, (M, seq_len, tm)
    assert N % tn == 0 and tn % head_dim == 0, (N, tn, head_dim)
    assert tn % 128 == 0 or tn == N, (tn, N)
    assert K % tk == 0, (K, tk)
    n_s_tiles = seq_len // tm

    rope_map = lambda i, j, k: (i % n_s_tiles, j)
    kernel = functools.partial(_qkv_rope_kernel, d2=head_dim // 2)

    return pl.pallas_call(
        kernel,
        out_shape=jax.ShapeDtypeStruct((M, N), x2d.dtype),
        grid=(M // tm, N // tn, K // tk),
        in_specs=[
            pl.BlockSpec((tm, tk), lambda i, j, k: (i, k)),
            pl.BlockSpec((tk, tn), lambda i, j, k: (k, j)),
            pl.BlockSpec((tm, tn), rope_map),
            pl.BlockSpec((tm, tn), rope_map),
            pl.BlockSpec((tm, tn), rope_map),
        ],
        out_specs=pl.BlockSpec((tm, tn), lambda i, j, k: (i, j)),
        scratch_shapes=[pltpu.VMEM((tm, tn), jnp.float32)],
        compiler_params=pltpu.CompilerParams(
            dimension_semantics=("parallel", "parallel", "arbitrary")),
    )(x2d, w_qkv, cos, sina, sinb)


# ---------------------------------------------------------------------------
# Causal flash attention with GQA, reading q/k/v from the fused QKV buffer.
# Grid: (b, q_tiles, kv_tiles).  K/V tiles are shared by all q heads in-kernel.
# ---------------------------------------------------------------------------
def _flash_kernel(q_ref, k_ref, v_ref, o_ref, m_sc, l_sc, acc_sc,
                  *, n_h, n_kv, h_d, tq, tk):
    qi = pl.program_id(1)
    ki = pl.program_id(2)
    q_per_kv = n_h // n_kv

    @pl.when(ki == 0)
    def _():
        m_sc[...] = jnp.full_like(m_sc, NEG_INF)
        l_sc[...] = jnp.zeros_like(l_sc)
        acc_sc[...] = jnp.zeros_like(acc_sc)

    # Skip compute for kv blocks entirely in the causally-masked future
    # (their DMA is already elided by the clamped index_map).
    @pl.when(ki * tk < (qi + 1) * tq)
    def _():
        row = qi * tq + lax.broadcasted_iota(jnp.int32, (tq, tk), 0)
        col = ki * tk + lax.broadcasted_iota(jnp.int32, (tq, tk), 1)
        causal = col <= row

        for g in range(n_kv):                                 # static, small
            k_g = k_ref[0, :, g * h_d:(g + 1) * h_d]          # (tk, h_d) native dtype
            v_g = v_ref[0, :, g * h_d:(g + 1) * h_d]          # (tk, h_d)
            for p in range(q_per_kv):
                h = g * q_per_kv + p
                q_h = q_ref[0, :, h * h_d:(h + 1) * h_d]      # (tq, h_d)
                s = lax.dot_general(q_h, k_g, (((1,), (1,)), ((), ())),
                                    preferred_element_type=jnp.float32)
                s = jnp.where(causal, s, NEG_INF)

                m_prev = m_sc[h]                               # (tq, 1)
                m_new = jnp.maximum(m_prev,
                                    jnp.max(s, axis=-1, keepdims=True))
                alpha = jnp.exp(m_prev - m_new)
                p_ij = jnp.exp(s - m_new)
                l_sc[h] = alpha * l_sc[h] + jnp.sum(p_ij, axis=-1, keepdims=True)
                acc_sc[:, h * h_d:(h + 1) * h_d] = (
                    alpha * acc_sc[:, h * h_d:(h + 1) * h_d]
                    + jnp.dot(p_ij.astype(v_g.dtype), v_g,
                              preferred_element_type=jnp.float32))
                m_sc[h] = m_new

    @pl.when(ki == pl.num_programs(2) - 1)
    def _():
        for h in range(n_h):
            l_inv = pl.reciprocal(l_sc[h], approx=True)        # (tq, 1)
            o_ref[0, :, h * h_d:(h + 1) * h_d] = (
                acc_sc[:, h * h_d:(h + 1) * h_d] * l_inv).astype(o_ref.dtype)


def flash_attention_fused(qkv, *, b, s, n_h, n_kv, h_d, tq=256, tk=256):
    """qkv: (b*s, (n_h + 2*n_kv)*h_d) fused projection (RoPE already applied).

    Returns the attention output in (b, s, n_h*h_d) layout.
    """
    q_per_kv = n_h // n_kv
    d_q = n_h * h_d
    d_kv = n_kv * h_d
    n_all = n_h + 2 * n_kv
    assert qkv.shape == (b * s, n_all * h_d)
    assert d_kv % 128 == 0, "num_kv_heads * head_dim must be a multiple of 128"

    qkv3 = qkv.reshape(b, s, n_all * h_d)                      # free reshape
    tq = min(tq, s)
    tk = min(tk, s)
    assert s % tq == 0 and s % tk == 0, (s, tq, tk)

    def kv_block(qi, ki):
        # Clamp to the last causally-valid kv block so dead steps re-use the
        # resident block (Pallas elides the DMA when the index is unchanged).
        return jnp.minimum(ki, ((qi + 1) * tq - 1) // tk)

    kernel = functools.partial(_flash_kernel, n_h=n_h, n_kv=n_kv, h_d=h_d,
                               tq=tq, tk=tk)
    return pl.pallas_call(
        kernel,
        out_shape=jax.ShapeDtypeStruct((b, s, d_q), qkv.dtype),
        grid=(b, s // tq, s // tk),
        in_specs=[
            pl.BlockSpec((1, tq, d_q),
                         lambda bi, qi, ki: (bi, qi, 0)),
            pl.BlockSpec((1, tk, d_kv),
                         lambda bi, qi, ki: (bi, kv_block(qi, ki), q_per_kv)),
            pl.BlockSpec((1, tk, d_kv),
                         lambda bi, qi, ki: (bi, kv_block(qi, ki), q_per_kv + 1)),
        ],
        out_specs=pl.BlockSpec((1, tq, d_q), lambda bi, qi, ki: (bi, qi, 0)),
        scratch_shapes=[
            pltpu.VMEM((n_h, tq, 1), jnp.float32),   # running max (per head)
            pltpu.VMEM((n_h, tq, 1), jnp.float32),   # running denom (per head)
            pltpu.VMEM((tq, d_q), jnp.float32),      # accumulator (all heads)
        ],
        compiler_params=pltpu.CompilerParams(
            dimension_semantics=("parallel", "parallel", "arbitrary")),
    )(qkv3, qkv3, qkv3)


# ---------------------------------------------------------------------------
# Module wrapper (bias-free Llama3-style projections)
# ---------------------------------------------------------------------------
class CausalSelfAttention:
    def __init__(self, embed_dim, num_heads, num_kv_heads, head_dim,
                 wq, wk, wv, wo, max_seq_len=4096, rope_base=10000):
        assert num_heads % num_kv_heads == 0
        assert embed_dim % num_heads == 0
        self.embed_dim = embed_dim
        self.num_heads = num_heads
        self.num_kv_heads = num_kv_heads
        self.head_dim = head_dim
        self.max_seq_len = max_seq_len
        d2 = head_dim // 2

        # Fold the interleaved-pair layout of the reference RoPE into the q/k
        # projection weights (per-head even indices first, then odd) and fold
        # 1/sqrt(head_dim) into wq.  Attention scores are invariant to this
        # fixed per-head permutation applied to both q and k.
        def perm_cols(n_heads):
            per_head = jnp.concatenate(
                [jnp.arange(0, head_dim, 2), jnp.arange(1, head_dim, 2)])
            return (jnp.arange(n_heads)[:, None] * head_dim
                    + per_head[None, :]).reshape(-1)

        scale = 1.0 / math.sqrt(head_dim)
        wq_p = wq[:, perm_cols(num_heads)] * scale
        wk_p = wk[:, perm_cols(num_kv_heads)]
        self.w_qkv = jnp.concatenate([wq_p, wk_p, wv], axis=1)
        self.wo = wo

        # RoPE caches expanded to the fused (q|k|v) column layout:
        #   cos:   [cos|cos] per roped head, 1 on v columns
        #   sin_a: [-sin|0 ] per roped head, 0 on v columns  (pairs with roll +d2)
        #   sin_b: [ 0 |sin] per roped head, 0 on v columns  (pairs with roll -d2)
        theta = 1.0 / (rope_base ** (
            jnp.arange(0, head_dim, 2).astype(jnp.float32) / head_dim))
        ang = jnp.arange(max_seq_len, dtype=jnp.float32)[:, None] * theta[None, :]
        cos_h = jnp.concatenate([jnp.cos(ang), jnp.cos(ang)], axis=-1)
        sina_h = jnp.concatenate([-jnp.sin(ang), jnp.zeros_like(ang)], axis=-1)
        sinb_h = jnp.concatenate([jnp.zeros_like(ang), jnp.sin(ang)], axis=-1)
        n_rope = num_heads + num_kv_heads
        ones_v = jnp.ones((max_seq_len, num_kv_heads * head_dim), jnp.float32)
        zeros_v = jnp.zeros_like(ones_v)
        self.cos_full = jnp.concatenate([jnp.tile(cos_h, (1, n_rope)), ones_v], -1)
        self.sina_full = jnp.concatenate([jnp.tile(sina_h, (1, n_rope)), zeros_v], -1)
        self.sinb_full = jnp.concatenate([jnp.tile(sinb_h, (1, n_rope)), zeros_v], -1)
        # Interleaved caches (only for the pure-JAX reference check).
        self._cos_il = jnp.cos(ang)
        self._sin_il = jnp.sin(ang)

    def __call__(self, x):
        # TODO(synk): y / mask / input_pos / kv_cache / dropout paths not implemented.
        b, s, _ = x.shape
        if s > self.max_seq_len:
            raise ValueError(f"seq_len ({s}) > max_seq_len ({self.max_seq_len})")
        n_h, n_kv, h_d = self.num_heads, self.num_kv_heads, self.head_dim

        x2d = x.reshape(b * s, self.embed_dim)
        qkv = qkv_proj_rope(x2d, self.w_qkv,
                            self.cos_full[:s], self.sina_full[:s],
                            self.sinb_full[:s],
                            seq_len=s, head_dim=h_d)           # (b*s, (n_h+2*n_kv)*h_d)

        attn = flash_attention_fused(qkv, b=b, s=s, n_h=n_h, n_kv=n_kv, h_d=h_d)

        return linear(attn, self.wo)                           # (b, s, embed_dim)


# ---------------------------------------------------------------------------
# Pure-JAX reference mirroring the PyTorch forward (interleaved RoPE, GQA, SDPA)
# ---------------------------------------------------------------------------
def _reference_forward(x, wq, wk, wv, wo, n_h, n_kv, h_d, cos_il, sin_il):
    b, s, _ = x.shape
    q_per_kv = n_h // n_kv
    q = (x @ wq).reshape(b, s, n_h, h_d)
    k = (x @ wk).reshape(b, s, n_kv, h_d)
    v = (x @ wv).reshape(b, s, n_kv, h_d)
    k = jnp.repeat(k, q_per_kv, axis=2)
    v = jnp.repeat(v, q_per_kv, axis=2)

    def rope_interleaved(t):
        bb, ss, nh, hd = t.shape
        t2 = t.astype(jnp.float32).reshape(bb, ss, nh, hd // 2, 2)
        cos = cos_il[:ss][None, :, None, :]
        sin = sin_il[:ss][None, :, None, :]
        out = jnp.stack([t2[..., 0] * cos - t2[..., 1] * sin,
                         t2[..., 1] * cos + t2[..., 0] * sin], axis=-1)
        return out.reshape(bb, ss, nh, hd).astype(t.dtype)

    q = rope_interleaved(q)
    k = rope_interleaved(k)
    q, k, v = (jnp.swapaxes(t, 1, 2) for t in (q, k, v))
    scores = jnp.einsum("bhqd,bhkd->bhqk", q, k).astype(jnp.float32)
    scores = scores / math.sqrt(h_d)
    mask = jnp.tril(jnp.ones((s, s), dtype=bool))
    scores = jnp.where(mask[None, None], scores, -jnp.inf)
    probs = jax.nn.softmax(scores, axis=-1).astype(x.dtype)
    o = jnp.einsum("bhqk,bhkd->bhqd", probs, v)
    o = jnp.swapaxes(o, 1, 2).reshape(b, s, n_h * h_d)
    return o @ wo


if __name__ == "__main__":
    jax.config.update("jax_default_matmul_precision", "highest")

    # Production-like head_dim (per perf review), small batch/seq.
    b, s = 2, 128
    num_heads, num_kv_heads, head_dim = 4, 2, 128
    embed_dim = num_heads * head_dim            # 512

    key = jax.random.PRNGKey(0)
    kx, kq, kk, kv_, ko = jax.random.split(key, 5)
    wscale = 1.0 / math.sqrt(embed_dim)
    x = jax.random.normal(kx, (b, s, embed_dim), jnp.float32)
    wq = jax.random.normal(kq, (embed_dim, num_heads * head_dim), jnp.float32) * wscale
    wk = jax.random.normal(kk, (embed_dim, num_kv_heads * head_dim), jnp.float32) * wscale
    wv = jax.random.normal(kv_, (embed_dim, num_kv_heads * head_dim), jnp.float32) * wscale
    wo = jax.random.normal(ko, (num_heads * head_dim, embed_dim), jnp.float32) * wscale

    attn = CausalSelfAttention(embed_dim, num_heads, num_kv_heads, head_dim,
                               wq, wk, wv, wo, max_seq_len=256)

    out = jax.block_until_ready(attn(x))

    ref = _reference_forward(x, wq, wk, wv, wo, num_heads, num_kv_heads,
                             head_dim, attn._cos_il, attn._sin_il)
    assert out.shape == (b, s, embed_dim) and out.dtype == x.dtype
    max_err = float(jnp.max(jnp.abs(out - ref)))
    assert jnp.allclose(out, ref, atol=2e-2, rtol=2e-2), f"mismatch: {max_err}"

    print("KERNEL_OK")
</pallas_src>

<mosaic_0001>
module attributes {stable_mosaic.version = 11 : i64} {
  func.func @_qkv_rope_kernel(%arg0: i32, %arg1: i32, %arg2: i32, %arg3: memref<128x512xf32, #tpu.memory_space<vmem>>, %arg4: memref<512x256xf32, #tpu.memory_space<vmem>>, %arg5: memref<128x256xf32, #tpu.memory_space<vmem>>, %arg6: memref<128x256xf32, #tpu.memory_space<vmem>>, %arg7: memref<128x256xf32, #tpu.memory_space<vmem>>, %arg8: memref<128x256xf32, #tpu.memory_space<vmem>>, %arg9: memref<128x256xf32, #tpu.memory_space<vmem>>) attributes {dimension_semantics = [#tpu.dimension_semantics<parallel>, #tpu.dimension_semantics<parallel>, #tpu.dimension_semantics<arbitrary>], iteration_bounds = array<i64: 2, 4, 1>, scalar_prefetch = 0 : i64, scratch_operands = 1 : i64, tpu.core_type = #tpu.core_type<tc>, window_params = [{transform_indices = @transform_0, window_bounds = array<i64: 128, 512>}, {transform_indices = @transform_1, window_bounds = array<i64: 512, 256>}, {transform_indices = @transform_2, window_bounds = array<i64: 128, 256>}, {transform_indices = @transform_3, window_bounds = array<i64: 128, 256>}, {transform_indices = @transform_4, window_bounds = array<i64: 128, 256>}, {transform_indices = @transform_5, window_bounds = array<i64: 128, 256>}]} {
    %c0_i32 = arith.constant 0 : i32
    %0 = arith.cmpi eq, %arg2, %c0_i32 : i32
    %1 = arith.extui %0 : i1 to i32
    %c0_i32_0 = arith.constant 0 : i32
    %2 = arith.cmpi ne, %1, %c0_i32_0 : i32
    scf.if %2 {
      %cst_10 = arith.constant 0.000000e+00 : f32
      %12 = vector.broadcast %cst_10 : f32 to vector<128x256xf32>
      %c0_11 = arith.constant 0 : index
      %c0_12 = arith.constant 0 : index
      %13 = vector.load %arg9[%c0_11, %c0_12] : memref<128x256xf32, #tpu.memory_space<vmem>>, vector<128x256xf32>
      tpu.vector_store %arg9[%c0_11, %c0_12], %12 {strides = array<i32>} : memref<128x256xf32, #tpu.memory_space<vmem>>, vector<128x256xf32>,
    } else {
    }
    %c0 = arith.constant 0 : index
    %c0_1 = arith.constant 0 : index
    %3 = vector.load %arg9[%c0, %c0_1] : memref<128x256xf32, #tpu.memory_space<vmem>>, vector<128x256xf32>
    %c0_2 = arith.constant 0 : index
    %c0_3 = arith.constant 0 : index
    %4 = vector.load %arg3[%c0_2, %c0_3] : memref<128x512xf32, #tpu.memory_space<vmem>>, vector<128x512xf32>
    %c0_4 = arith.constant 0 : index
    %c0_5 = arith.constant 0 : index
    %5 = vector.load %arg4[%c0_4, %c0_5] : memref<512x256xf32, #tpu.memory_space<vmem>>, vector<512x256xf32>
    %cst = arith.constant dense<0.000000e+00> : vector<128x256xf32>
    %6 = tpu.matmul %4, %5, %cst {dimension_numbers = #tpu.dot_dimension_numbers<[1], [0], [0], [1], [0, 0, 1, 1], [], []>, precision = #tpu.contract_precision<fp32>} : vector<128x512xf32>, vector<512x256xf32>, vector<128x256xf32> -> vector<128x256xf32>
    %7 = arith.addf %3, %6 : vector<128x256xf32>
    %c0_6 = arith.constant 0 : index
    %c0_7 = arith.constant 0 : index
    %8 = vector.load %arg9[%c0_6, %c0_7] : memref<128x256xf32, #tpu.memory_space<vmem>>, vector<128x256xf32>
    tpu.vector_store %arg9[%c0_6, %c0_7], %7 {strides = array<i32>} : memref<128x256xf32, #tpu.memory_space<vmem>>, vector<128x256xf32>,
    %c0_i32_8 = arith.constant 0 : i32
    %9 = arith.cmpi eq, %arg2, %c0_i32_8 : i32
    %10 = arith.extui %9 : i1 to i32
    %c0_i32_9 = arith.constant 0 : i32
    %11 = arith.cmpi ne, %10, %c0_i32_9 : i32
    scf.if %11 {
      %c0_10 = arith.constant 0 : index
      %c0_11 = arith.constant 0 : index
      %12 = vector.load %arg9[%c0_10, %c0_11] : memref<128x256xf32, #tpu.memory_space<vmem>>, vector<128x256xf32>
      %c64_i32 = arith.constant 64 : i32
      %13 = tpu.dynamic_rotate %12 by %c64_i32 dim 1 : vector<128x256xf32>, i32 -> vector<128x256xf32>
      %c192_i32 = arith.constant 192 : i32
      %14 = tpu.dynamic_rotate %12 by %c192_i32 dim 1 : vector<128x256xf32>, i32 -> vector<128x256xf32>
      %c0_12 = arith.constant 0 : index
      %c0_13 = arith.constant 0 : index
      %15 = vector.load %arg5[%c0_12, %c0_13] : memref<128x256xf32, #tpu.memory_space<vmem>>, vector<128x256xf32>
      %16 = arith.mulf %12, %15 : vector<128x256xf32>
      %c0_14 = arith.constant 0 : index
      %c0_15 = arith.constant 0 : index
      %17 = vector.load %arg6[%c0_14, %c0_15] : memref<128x256xf32, #tpu.memory_space<vmem>>, vector<128x256xf32>
      %18 = arith.mulf %14, %17 : vector<128x256xf32>
      %19 = arith.addf %16, %18 : vector<128x256xf32>
      %c0_16 = arith.constant 0 : index
      %c0_17 = arith.constant 0 : index
      %20 = vector.load %arg7[%c0_16, %c0_17] : memref<128x256xf32, #tpu.memory_space<vmem>>, vector<128x256xf32>
      %21 = arith.mulf %13, %20 : vector<128x256xf32>
      %22 = arith.addf %19, %21 : vector<128x256xf32>
      %c0_18 = arith.constant 0 : index
      %c0_19 = arith.constant 0 : index
      %23 = vector.load %arg8[%c0_18, %c0_19] : memref<128x256xf32, #tpu.memory_space<vmem>>, vector<128x256xf32>
      tpu.vector_store %arg8[%c0_18, %c0_19], %22 {strides = array<i32>} : memref<128x256xf32, #tpu.memory_space<vmem>>, vector<128x256xf32>,
    } else {
    }
    return
  }
  func.func @transform_0(%arg0: i32, %arg1: i32, %arg2: i32) -> (i32, i32) {
    %c0_i32 = arith.constant 0 : i32
    return %arg0, %arg2 : i32, i32
  }
  func.func @transform_1(%arg0: i32, %arg1: i32, %arg2: i32) -> (i32, i32) {
    %c0_i32 = arith.constant 0 : i32
    return %arg2, %arg1 : i32, i32
  }
  func.func @transform_2(%arg0: i32, %arg1: i32, %arg2: i32) -> (i32, i32) {
    %c1_i32 = arith.constant 1 : i32
    %c0_i32 = arith.constant 0 : i32
    %0 = arith.cmpi eq, %c1_i32, %c0_i32 : i32
    %c1_i32_0 = arith.constant 1 : i32
    %1 = arith.select %0, %c1_i32_0, %c1_i32 : i32
    %2 = arith.remsi %arg0, %1 : i32
    %c0_i32_1 = arith.constant 0 : i32
    %3 = arith.cmpi ne, %2, %c0_i32_1 : i32
    %c0_i32_2 = arith.constant 0 : i32
    %4 = arith.cmpi slt, %2, %c0_i32_2 : i32
    %c0_i32_3 = arith.constant 0 : i32
    %5 = arith.cmpi slt, %1, %c0_i32_3 : i32
    %6 = arith.xori %4, %5 : i1
    %7 = arith.andi %6, %3 : i1
    %8 = arith.addi %2, %1 : i32
    %9 = arith.select %7, %8, %2 : i32
    %c0_i32_4 = arith.constant 0 : i32
    return %9, %arg1 : i32, i32
  }
  func.func @transform_3(%arg0: i32, %arg1: i32, %arg2: i32) -> (i32, i32) {
    %c1_i32 = arith.constant 1 : i32
    %c0_i32 = arith.constant 0 : i32
    %0 = arith.cmpi eq, %c1_i32, %c0_i32 : i32
    %c1_i32_0 = arith.constant 1 : i32
    %1 = arith.select %0, %c1_i32_0, %c1_i32 : i32
    %2 = arith.remsi %arg0, %1 : i32
    %c0_i32_1 = arith.constant 0 : i32
    %3 = arith.cmpi ne, %2, %c0_i32_1 : i32
    %c0_i32_2 = arith.constant 0 : i32
    %4 = arith.cmpi slt, %2, %c0_i32_2 : i32
    %c0_i32_3 = arith.constant 0 : i32
    %5 = arith.cmpi slt, %1, %c0_i32_3 : i32
    %6 = arith.xori %4, %5 : i1
    %7 = arith.andi %6, %3 : i1
    %8 = arith.addi %2, %1 : i32
    %9 = arith.select %7, %8, %2 : i32
    %c0_i32_4 = arith.constant 0 : i32
    return %9, %arg1 : i32, i32
  }
  func.func @transform_4(%arg0: i32, %arg1: i32, %arg2: i32) -> (i32, i32) {
    %c1_i32 = arith.constant 1 : i32
    %c0_i32 = arith.constant 0 : i32
    %0 = arith.cmpi eq, %c1_i32, %c0_i32 : i32
    %c1_i32_0 = arith.constant 1 : i32
    %1 = arith.select %0, %c1_i32_0, %c1_i32 : i32
    %2 = arith.remsi %arg0, %1 : i32
    %c0_i32_1 = arith.constant 0 : i32
    %3 = arith.cmpi ne, %2, %c0_i32_1 : i32
    %c0_i32_2 = arith.constant 0 : i32
    %4 = arith.cmpi slt, %2, %c0_i32_2 : i32
    %c0_i32_3 = arith.constant 0 : i32
    %5 = arith.cmpi slt, %1, %c0_i32_3 : i32
    %6 = arith.xori %4, %5 : i1
    %7 = arith.andi %6, %3 : i1
    %8 = arith.addi %2, %1 : i32
    %9 = arith.select %7, %8, %2 : i32
    %c0_i32_4 = arith.constant 0 : i32
    return %9, %arg1 : i32, i32
  }
  func.func @transform_5(%arg0: i32, %arg1: i32, %arg2: i32) -> (i32, i32) {
    %c0_i32 = arith.constant 0 : i32
    return %arg0, %arg1 : i32, i32
  }
}

</mosaic_0001>

<llo_original>
// kernel: tpu_custom_call.1
$region0: #{tpu_custom_call.1}
  #allocation0 [shape = 'u32[]', space=smem, size = 0x4, offset = 0x4, fixed_abs, tag = 'smem constant byte address 0x4 - core index']
  #allocation1 [shape = 'u32[144,128]{1,0:T(1,128)}', space=vmem, size = 0x12000, scoped, tag = 'internal scratch']
  #allocation2 [shape = 'f32[128,256]{1,0:T(8,128)}', space=vmem, size = 0x20000, scoped, tag = 'scratch operand']
  %s0 = inlined_call_operand.hbm [shape: f32[256,512], index: 0, kind: input, shape index: {}]
  %s1 = inlined_call_operand.hbm [shape: f32[512,1024], index: 1, kind: input, shape index: {}]
  %s2 = inlined_call_operand.hbm [shape: f32[128,1024], index: 2, kind: input, shape index: {}]
  %s3 = inlined_call_operand.hbm [shape: f32[128,1024], index: 3, kind: input, shape index: {}]
  %s4 = inlined_call_operand.hbm [shape: f32[128,1024], index: 4, kind: input, shape index: {}]
  %s5 = inlined_call_operand.hbm [shape: f32[256,1024], index: 5, kind: output, shape index: {}]
  %s6 = sld [smem:[#allocation0]]
  $region81: #{tpu_custom_call.1} parent=0
    _
  %s8 = ssub.s32 1, %s6
  %s9 = scalar_select 0, %s8, %s6
  $region1: #{tpu_custom_call.1} parent=0
    #allocation3 [shape = 'u8[524288]{0}', space=vmem, size = 0x80000, scoped, tag = 'input window, operand 0']
    #allocation4 [shape = 's32[2]{0}', space=sflag, size = 0x8, scoped, tag = 'scoped memory for tpu_custom_call.1']
    #allocation5 [shape = 's32[2]{0}', space=sflag, size = 0x8, scoped, tag = 'scoped memory for tpu_custom_call.1']
    #allocation6 [shape = 'u8[1048576]{0}', space=vmem, size = 0x100000, scoped, tag = 'input window, operand 1']
    #allocation7 [shape = 's32[2]{0}', space=sflag, size = 0x8, scoped, tag = 'scoped memory for tpu_custom_call.1']
    #allocation8 [shape = 'u8[262144]{0}', space=vmem, size = 0x40000, scoped, tag = 'input window, operand 2']
    #allocation9 [shape = 'u8[262144]{0}', space=vmem, size = 0x40000, scoped, tag = 'input window, operand 3']
    #allocation10 [shape = 's32[2]{0}', space=sflag, size = 0x8, scoped, tag = 'scoped memory for tpu_custom_call.1']
    #allocation11 [shape = 'u8[262144]{0}', space=vmem, size = 0x40000, scoped, tag = 'input window, operand 4']
    #allocation12 [shape = 'u8[262144]{0}', space=vmem, size = 0x40000, scoped, tag = 'output window, operand 0']
    %10 = vsyncpa [#allocation4], 0
    %s11 = scalar_lea.sflag [#allocation4], 1
    %12 = vsyncpa %s11, 0
    %13 = vsyncpa [#allocation7], 0
    %s14 = scalar_lea.sflag [#allocation7], 1
    %15 = vsyncpa %s14, 0
    %16 = vsyncpa [#allocation10], 0
    %s17 = scalar_lea.sflag [#allocation10], 1
    %18 = vsyncpa %s17, 0
    %19 = vsyncpa [#allocation5], 0
    %s20 = scalar_lea.sflag [#allocation5], 1
    %21 = vsyncpa %s20, 0
    loop: start=0, step=1, limit=10
    $region2: #{tpu_custom_call.1} parent=1 // loop_pre_header
      _
    $region3: #{tpu_custom_call.1} parent=1 // loop_header
      %s23 = sphi 0, %s27
      %p24 = scmp.ge.s32.totalorder %s23, 10
      %s30 = sphi 0, %s49
      %s31 = sphi 0, %s45
      %s32 = sphi 0, %s41
      %s33 = sphi 0, %s30
      %s34 = sphi 0, %s31
      %s35 = sphi 0, %s32
      %s36 = sphi 0, %s33
      %s37 = sphi 0, %s34
      %s38 = sphi 0, %s35
      %s54 = sphi 0, %s56
      %s57 = sphi 0, %s54
      %s58 = sphi 0, %s57
      %s74 = sphi 0, %s58
      %s82 = sphi 0, %s84
      %s85 = sphi 0, %s82
      %s86 = sphi 0, %s85
      %s102 = sphi 0, %s86
      %s108 = sphi 0, %s110
      %s111 = sphi 0, %s108
      %s112 = sphi 0, %s111
      %s128 = sphi 0, %s112
      %s134 = sphi 0, %s136
      %s137 = sphi 0, %s134
      %s138 = sphi 0, %s137
      %s154 = sphi 0, %s138
      %s160 = sphi 0, %s162
      %s163 = sphi 0, %s160
      %s164 = sphi 0, %s163
      %s180 = sphi 0, %s164
      %s188 = sphi 0, %s190
      %s191 = sphi 0, %s188
      %s192 = sphi 0, %s191
      %s208 = sphi 0, %s192
    $region4: #{tpu_custom_call.1} parent=1 // loop_header_branch
      %26 = sbr.rel (%p24) target = $region8
    $region5: #{tpu_custom_call.1} parent=1 // loop_body
      %s28 = ssub.s32 %s23, 1
      %s29 = ssub.s32 %s23, 2
      %s39 = sadd.s32 1, %s32
      %p40 = scmp.ge.s32.totalorder %s39, 1
      %s41 = scalar_select %p40, 0, %s39
      %s42 = sadd.s32 1, %s31
      %s43 = scalar_select %p40, %s42, %s31
      %p44 = scmp.ge.s32.totalorder %s43, 4
      %s45 = scalar_select %p44, 0, %s43
      %s46 = sadd.s32 1, %s30
      %s47 = scalar_select %p44, %s46, %s30
      %p48 = scmp.ge.s32.totalorder %s47, 2
      %s49 = scalar_select %p48, 0, %s47
      %s50 = ssub.s32 %s30, %s49
      %s51 = ssub.s32 %s32, %s41
      %s52 = sor.u32 %s50, %s51
      %p53 = scmp.eq.s32.totalorder %s52, 0
      %s55 = sadd.s32 %s54, 1
      %s56 = scalar_select %p53, %s54, %s55
      %p59 = pneg %p53
      %p60 = scmp.eq.s32.totalorder %s23, 7
      %p61 = por %p59, %p60
      %p62 = scmp.ne.s32.totalorder %s54, %s57
      %p63 = scmp.eq.s32.totalorder %s23, 0
      %p64 = por %p62, %p63
      %p65 = scmp.ne.s32.totalorder %s54, %s57
      %p66 = scmp.eq.s32.totalorder %s28, 7
      %p67 = por %p65, %p66
      %p68 = scmp.ne.s32.totalorder %s57, %s58
      %p69 = scmp.eq.s32.totalorder %s28, 0
      %p70 = por %p68, %p69
      %p71 = scmp.ne.s32.totalorder %s57, %s58
      %p72 = scmp.eq.s32.totalorder %s29, 7
      %p73 = por %p71, %p72
      %p75 = scmp.ne.s32.totalorder %s58, %s74
      %p76 = scmp.eq.s32.totalorder %s29, 0
      %p77 = por %p75, %p76
      %s78 = ssub.s32 %s32, %s41
      %s79 = ssub.s32 %s31, %s45
      %s80 = sor.u32 %s78, %s79
      %p81 = scmp.eq.s32.totalorder %s80, 0
      %s83 = sadd.s32 %s82, 1
      %s84 = scalar_select %p81, %s82, %s83
      %p87 = pneg %p81
      %p88 = scmp.eq.s32.totalorder %s23, 7
      %p89 = por %p87, %p88
      %p90 = scmp.ne.s32.totalorder %s82, %s85
      %p91 = scmp.eq.s32.totalorder %s23, 0
      %p92 = por %p90, %p91
      %p93 = scmp.ne.s32.totalorder %s82, %s85
      %p94 = scmp.eq.s32.totalorder %s28, 7
      %p95 = por %p93, %p94
      %p96 = scmp.ne.s32.totalorder %s85, %s86
      %p97 = scmp.eq.s32.totalorder %s28, 0
      %p98 = por %p96, %p97
      %p99 = scmp.ne.s32.totalorder %s85, %s86
      %p100 = scmp.eq.s32.totalorder %s29, 7
      %p101 = por %p99, %p100
      %p103 = scmp.ne.s32.totalorder %s86, %s102
      %p104 = scmp.eq.s32.totalorder %s29, 0
      %p105 = por %p103, %p104
      %s106 = ssub.s32 %s31, %s45
      %p107 = scmp.eq.s32.totalorder %s106, 0
      %s109 = sadd.s32 %s108, 1
      %s110 = scalar_select %p107, %s108, %s109
      %p113 = pneg %p107
      %p114 = scmp.eq.s32.totalorder %s23, 7
      %p115 = por %p113, %p114
      %p116 = scmp.ne.s32.totalorder %s108, %s111
      %p117 = scmp.eq.s32.totalorder %s23, 0
      %p118 = por %p116, %p117
      %p119 = scmp.ne.s32.totalorder %s108, %s111
      %p120 = scmp.eq.s32.totalorder %s28, 7
      %p121 = por %p119, %p120
      %p122 = scmp.ne.s32.totalorder %s111, %s112
      %p123 = scmp.eq.s32.totalorder %s28, 0
      %p124 = por %p122, %p123
      %p125 = scmp.ne.s32.totalorder %s111, %s112
      %p126 = scmp.eq.s32.totalorder %s29, 7
      %p127 = por %p125, %p126
      %p129 = scmp.ne.s32.totalorder %s112, %s128
      %p130 = scmp.eq.s32.totalorder %s29, 0
      %p131 = por %p129, %p130
      %s132 = ssub.s32 %s31, %s45
      %p133 = scmp.eq.s32.totalorder %s132, 0
      %s135 = sadd.s32 %s134, 1
      %s136 = scalar_select %p133, %s134, %s135
      %p139 = pneg %p133
      %p140 = scmp.eq.s32.totalorder %s23, 7
      %p141 = por %p139, %p140
      %p142 = scmp.ne.s32.totalorder %s134, %s137
      %p143 = scmp.eq.s32.totalorder %s23, 0
      %p144 = por %p142, %p143
      %p145 = scmp.ne.s32.totalorder %s134, %s137
      %p146 = scmp.eq.s32.totalorder %s28, 7
      %p147 = por %p145, %p146
      %p148 = scmp.ne.s32.totalorder %s137, %s138
      %p149 = scmp.eq.s32.totalorder %s28, 0
      %p150 = por %p148, %p149
      %p151 = scmp.ne.s32.totalorder %s137, %s138
      %p152 = scmp.eq.s32.totalorder %s29, 7
      %p153 = por %p151, %p152
      %p155 = scmp.ne.s32.totalorder %s138, %s154
      %p156 = scmp.eq.s32.totalorder %s29, 0
      %p157 = por %p155, %p156
      %s158 = ssub.s32 %s31, %s45
      %p159 = scmp.eq.s32.totalorder %s158, 0
      %s161 = sadd.s32 %s160, 1
      %s162 = scalar_select %p159, %s160, %s161
      %p165 = pneg %p159
      %p166 = scmp.eq.s32.totalorder %s23, 7
      %p167 = por %p165, %p166
      %p168 = scmp.ne.s32.totalorder %s160, %s163
      %p169 = scmp.eq.s32.totalorder %s23, 0
      %p170 = por %p168, %p169
      %p171 = scmp.ne.s32.totalorder %s160, %s163
      %p172 = scmp.eq.s32.totalorder %s28, 7
      %p173 = por %p171, %p172
      %p174 = scmp.ne.s32.totalorder %s163, %s164
      %p175 = scmp.eq.s32.totalorder %s28, 0
      %p176 = por %p174, %p175
      %p177 = scmp.ne.s32.totalorder %s163, %s164
      %p178 = scmp.eq.s32.totalorder %s29, 7
      %p179 = por %p177, %p178
      %p181 = scmp.ne.s32.totalorder %s164, %s180
      %p182 = scmp.eq.s32.totalorder %s29, 0
      %p183 = por %p181, %p182
      %s184 = ssub.s32 %s30, %s49
      %s185 = ssub.s32 %s31, %s45
      %s186 = sor.u32 %s184, %s185
      %p187 = scmp.eq.s32.totalorder %s186, 0
      %s189 = sadd.s32 %s188, 1
      %s190 = scalar_select %p187, %s188, %s189
      %p193 = pneg %p187
      %p194 = scmp.eq.s32.totalorder %s23, 7
      %p195 = por %p193, %p194
      %p196 = scmp.ne.s32.totalorder %s188, %s191
      %p197 = scmp.eq.s32.totalorder %s23, 0
      %p198 = por %p196, %p197
      %p199 = scmp.ne.s32.totalorder %s188, %s191
      %p200 = scmp.eq.s32.totalorder %s28, 7
      %p201 = por %p199, %p200
      %p202 = scmp.ne.s32.totalorder %s191, %s192
      %p203 = scmp.eq.s32.totalorder %s28, 0
      %p204 = por %p202, %p203
      %p205 = scmp.ne.s32.totalorder %s191, %s192
      %p206 = scmp.eq.s32.totalorder %s29, 7
      %p207 = por %p205, %p206
      %p209 = scmp.ne.s32.totalorder %s192, %s208
      %p210 = scmp.eq.s32.totalorder %s29, 0
      %p211 = por %p209, %p210
      %p212 = scmp.le.s32.totalorder 1, %s23
      %p213 = scmp.lt.s32.totalorder %s23, 9
      %p214 = pnand %p212, %p213
      %p215 = pneg %p214
      // Predicated region
      $region9: #{tpu_custom_call.1} parent=5 // pred_check
        _
      $region10: #{tpu_custom_call.1} parent=5 // pred_check_branch
        %217 = sbr.rel (%p214) target = $region12
      $region11: #{tpu_custom_call.1} parent=5 // pred_region
        %s218 = ssub.s32 %s23, 1
      $region12: #{tpu_custom_call.1} parent=5 // pred_fallthru
        _
      %p219 = scmp.lt.s32.totalorder %s23, 8
      // Predicated region
      $region13: #{tpu_custom_call.1} parent=5 // pred_check
        %p220 = pneg %p219
      $region14: #{tpu_custom_call.1} parent=5 // pred_check_branch
        %222 = sbr.rel (%p220) target = $region16
      $region15: #{tpu_custom_call.1} parent=5 // pred_region
        // Predicated region
        $region17: #{tpu_custom_call.1} parent=15 // pred_check
          %p223 = pneg %p64
        $region18: #{tpu_custom_call.1} parent=15 // pred_check_branch
          %225 = sbr.rel (%p223) target = $region20
        $region19: #{tpu_custom_call.1} parent=15 // pred_region
          %s226 = sand.u32 %s54, 1
          %s227 = scalar_lea.sflag [#allocation4], %s226
          %s228 = sand.u32 %s54, 1
          %s229 = smul.addr %s228, 512
          %s230 = scalar_lea.vmem [#allocation3], %s229
          %s231 = smul.u32 16, %s30
          %s232 = smul.u32 4, %s32
          %s234 = ssub.s32 8192, 8192
          %235 = vsyncadd %s227, %s234
          %s236 = smul.addr %s231, 4
          %s237 = sadd.s32 %s232, %s236
          %s238 = smul.addr %s237, 128
          %s239 = scalar_lea.hbm %s0, %s238
          %s240 = sshll.u32 %s230, 4
          %s241 = int_to_ptr.vmem [resolvable:$true] %s240
          %246 = dma.hbm_to_vmem [thread:$0]  %s239, 8192, %s241, %s227, 512, 512, 32
        $region20: #{tpu_custom_call.1} parent=15 // pred_fallthru
          _
        // Predicated region
        $region21: #{tpu_custom_call.1} parent=15 // pred_check
          %p247 = pneg %p92
        $region22: #{tpu_custom_call.1} parent=15 // pred_check_branch
          %249 = sbr.rel (%p247) target = $region24
        $region23: #{tpu_custom_call.1} parent=15 // pred_region
          %s250 = sand.u32 %s23, 1
          %s251 = scalar_lea.sflag [#allocation7], %s250
          %s252 = sand.u32 %s82, 1
          %s253 = smul.addr %s252, 1024
          %s254 = scalar_lea.vmem [#allocation6], %s253
          %s255 = smul.u32 64, %s32
          %s256 = smul.u32 2, %s31
          %s258 = ssub.s32 16384, 16384
          %259 = vsyncadd %s251, %s258
          %s260 = smul.addr %s255, 8
          %s261 = sadd.s32 %s256, %s260
          %s262 = smul.addr %s261, 128
          %s263 = scalar_lea.hbm %s1, %s262
          %s264 = sshll.u32 %s254, 4
          %s265 = int_to_ptr.vmem [resolvable:$true] %s264
          %270 = dma.hbm_to_vmem [thread:$0]  %s263, 16384, %s265, %s251, 1024, 256, 16
        $region24: #{tpu_custom_call.1} parent=15 // pred_fallthru
          _
        // Predicated region
        $region25: #{tpu_custom_call.1} parent=15 // pred_check
          %p271 = pneg %p118
        $region26: #{tpu_custom_call.1} parent=15 // pred_check_branch
          %273 = sbr.rel (%p271) target = $region28
        $region27: #{tpu_custom_call.1} parent=15 // pred_region
          %s274 = sand.u32 %s23, 1
          %s275 = scalar_lea.sflag [#allocation7], %s274
          %s276 = sand.u32 %s108, 1
          %s277 = smul.addr %s276, 256
          %s278 = scalar_lea.vmem [#allocation8], %s277
          %s279 = smul.u32 2, %s31
          %s281 = ssub.s32 4096, 4096
          %282 = vsyncadd %s275, %s281
          %s283 = smul.addr %s279, 128
          %s284 = scalar_lea.hbm %s2, %s283
          %s285 = sshll.u32 %s278, 4
          %s286 = int_to_ptr.vmem [resolvable:$true] %s285
          %291 = dma.hbm_to_vmem [thread:$0]  %s284, 4096, %s286, %s275, 1024, 256, 16
        $region28: #{tpu_custom_call.1} parent=15 // pred_fallthru
          _
        // Predicated region
        $region29: #{tpu_custom_call.1} parent=15 // pred_check
          %p292 = pneg %p144
        $region30: #{tpu_custom_call.1} parent=15 // pred_check_branch
          %294 = sbr.rel (%p292) target = $region32
        $region31: #{tpu_custom_call.1} parent=15 // pred_region
          %s295 = sand.u32 %s23, 1
          %s296 = scalar_lea.sflag [#allocation10], %s295
          %s297 = sand.u32 %s134, 1
          %s298 = smul.addr %s297, 256
          %s299 = scalar_lea.vmem [#allocation9], %s298
          %s300 = smul.u32 2, %s31
          %s302 = ssub.s32 4096, 4096
          %303 = vsyncadd %s296, %s302
          %s304 = smul.addr %s300, 128
          %s305 = scalar_lea.hbm %s3, %s304
          %s306 = sshll.u32 %s299, 4
          %s307 = int_to_ptr.vmem [resolvable:$true] %s306
          %312 = dma.hbm_to_vmem [thread:$0]  %s305, 4096, %s307, %s296, 1024, 256, 16
        $region32: #{tpu_custom_call.1} parent=15 // pred_fallthru
          _
        // Predicated region
        $region33: #{tpu_custom_call.1} parent=15 // pred_check
          %p313 = pneg %p170
        $region34: #{tpu_custom_call.1} parent=15 // pred_check_branch
          %315 = sbr.rel (%p313) target = $region36
        $region35: #{tpu_custom_call.1} parent=15 // pred_region
          %s316 = sand.u32 %s23, 1
          %s317 = scalar_lea.sflag [#allocation10], %s316
          %s318 = sand.u32 %s160, 1
          %s319 = smul.addr %s318, 256
          %s320 = scalar_lea.vmem [#allocation11], %s319
          %s321 = smul.u32 2, %s31
          %s323 = ssub.s32 4096, 4096
          %324 = vsyncadd %s317, %s323
          %s325 = smul.addr %s321, 128
          %s326 = scalar_lea.hbm %s4, %s325
          %s327 = sshll.u32 %s320, 4
          %s328 = int_to_ptr.vmem [resolvable:$true] %s327
          %333 = dma.hbm_to_vmem [thread:$0]  %s326, 4096, %s328, %s317, 1024, 256, 16
        $region36: #{tpu_custom_call.1} parent=15 // pred_fallthru
          _
      $region16: #{tpu_custom_call.1} parent=5 // pred_fallthru
        _
      %p334 = scmp.le.s32.totalorder 1, %s23
      %p335 = scmp.lt.s32.totalorder %s23, 9
      %p336 = pnand %p334, %p335
      %p337 = pneg %p336
      // Predicated region
      $region37: #{tpu_custom_call.1} parent=5 // pred_check
        _
      $region38: #{tpu_custom_call.1} parent=5 // pred_check_branch
        %339 = sbr.rel (%p336) target = $region40
      $region39: #{tpu_custom_call.1} parent=5 // pred_region
        %s340 = ssub.s32 %s23, 1
        %s341 = sand.u32 %s57, 1
        %s342 = scalar_lea.sflag [#allocation4], %s341
        %s343 = sand.u32 %s57, 1
        %s344 = smul.addr %s343, 512
        %s345 = scalar_lea.vmem [#allocation3], %s344
        // Predicated region
        $region41: #{tpu_custom_call.1} parent=39 // pred_check
          %p346 = pneg %p70
        $region42: #{tpu_custom_call.1} parent=39 // pred_check_branch
          %348 = sbr.rel (%p346) target = $region44
        $region43: #{tpu_custom_call.1} parent=39 // pred_region
          %349 = dma.done %s342, 8192
        $region44: #{tpu_custom_call.1} parent=39 // pred_fallthru
          _
        %s350 = sand.u32 %s28, 1
        %s351 = scalar_lea.sflag [#allocation7], %s350
        %s352 = sand.u32 %s85, 1
        %s353 = smul.addr %s352, 1024
        %s354 = scalar_lea.vmem [#allocation6], %s353
        // Predicated region
        $region45: #{tpu_custom_call.1} parent=39 // pred_check
          %p355 = pneg %p98
        $region46: #{tpu_custom_call.1} parent=39 // pred_check_branch
          %357 = sbr.rel (%p355) target = $region48
        $region47: #{tpu_custom_call.1} parent=39 // pred_region
          %358 = dma.done %s351, 16384
        $region48: #{tpu_custom_call.1} parent=39 // pred_fallthru
          _
        %s359 = sand.u32 %s28, 1
        %s360 = scalar_lea.sflag [#allocation7], %s359
        %s361 = sand.u32 %s111, 1
        %s362 = smul.addr %s361, 256
        %s363 = scalar_lea.vmem [#allocation8], %s362
        // Predicated region
        $region49: #{tpu_custom_call.1} parent=39 // pred_check
          %p364 = pneg %p124
        $region50: #{tpu_custom_call.1} parent=39 // pred_check_branch
          %366 = sbr.rel (%p364) target = $region52
        $region51: #{tpu_custom_call.1} parent=39 // pred_region
          %367 = dma.done %s360, 4096
        $region52: #{tpu_custom_call.1} parent=39 // pred_fallthru
          _
        %s368 = sand.u32 %s28, 1
        %s369 = scalar_lea.sflag [#allocation10], %s368
        %s370 = sand.u32 %s137, 1
        %s371 = smul.addr %s370, 256
        %s372 = scalar_lea.vmem [#allocation9], %s371
        // Predicated region
        $region53: #{tpu_custom_call.1} parent=39 // pred_check
          %p373 = pneg %p150
        $region54: #{tpu_custom_call.1} parent=39 // pred_check_branch
          %375 = sbr.rel (%p373) target = $region56
        $region55: #{tpu_custom_call.1} parent=39 // pred_region
          %376 = dma.done %s369, 4096
        $region56: #{tpu_custom_call.1} parent=39 // pred_fallthru
          _
        %s377 = sand.u32 %s28, 1
        %s378 = scalar_lea.sflag [#allocation10], %s377
        %s379 = sand.u32 %s163, 1
        %s380 = smul.addr %s379, 256
        %s381 = scalar_lea.vmem [#allocation11], %s380
        // Predicated region
        $region57: #{tpu_custom_call.1} parent=39 // pred_check
          %p382 = pneg %p176
        $region58: #{tpu_custom_call.1} parent=39 // pred_check_branch
          %384 = sbr.rel (%p382) target = $region60
        $region59: #{tpu_custom_call.1} parent=39 // pred_region
          %385 = dma.done %s378, 4096
        $region60: #{tpu_custom_call.1} parent=39 // pred_fallthru
          _
        %s386 = sand.u32 %s57, 1
        %s387 = scalar_lea.sflag [#allocation4], %s386
        %s388 = sand.u32 %s57, 1
        %s389 = smul.addr %s388, 512
        %s390 = scalar_lea.vmem [#allocation3], %s389
        %p391 = pneg %p70
        %p392 = pneg %p67
        %s393 = sand.u32 %s28, 1
        %s394 = scalar_lea.sflag [#allocation7], %s393
        %s395 = sand.u32 %s85, 1
        %s396 = smul.addr %s395, 1024
        %s397 = scalar_lea.vmem [#allocation6], %s396
        %p398 = pneg %p98
        %p399 = pneg %p95
        %s400 = sand.u32 %s28, 1
        %s401 = scalar_lea.sflag [#allocation7], %s400
        %s402 = sand.u32 %s111, 1
        %s403 = smul.addr %s402, 256
        %s404 = scalar_lea.vmem [#allocation8], %s403
        %p405 = pneg %p124
        %p406 = pneg %p121
        %s407 = sand.u32 %s28, 1
        %s408 = scalar_lea.sflag [#allocation10], %s407
        %s409 = sand.u32 %s137, 1
        %s410 = smul.addr %s409, 256
        %s411 = scalar_lea.vmem [#allocation9], %s410
        %p412 = pneg %p150
        %p413 = pneg %p147
        %s414 = sand.u32 %s28, 1
        %s415 = scalar_lea.sflag [#allocation10], %s414
        %s416 = sand.u32 %s163, 1
        %s417 = smul.addr %s416, 256
        %s418 = scalar_lea.vmem [#allocation11], %s417
        %p419 = pneg %p176
        %p420 = pneg %p173
        %p421 = pneg %p204
        %p422 = pneg %p201
        %s423 = sand.u32 %s191, 1
        %s424 = scalar_lea.sflag [#allocation5], %s423
        %s425 = sand.u32 %s191, 1
        %s426 = smul.addr %s425, 256
        %s427 = scalar_lea.vmem [#allocation12], %s426
        %s428 = smul.u32 16, %s33
        %s429 = smul.u32 4, %s35
        %s430 = smul.u32 64, %s35
        %s431 = smul.u32 2, %s34
        %s432 = smul.u32 2, %s34
        %s433 = smul.u32 2, %s34
        %s434 = smul.u32 2, %s34
        %s435 = smul.u32 16, %s33
        %s436 = smul.u32 2, %s34
        %p437 = scmp.eq.s32.totalorder %s35, 0
        // Predicated region
        $region61: #{tpu_custom_call.1} parent=39 // pred_check
          %p438 = pneg %p437
        $region62: #{tpu_custom_call.1} parent=39 // pred_check_branch
          %440 = sbr.rel (%p438) target = $region64
        $region63: #{tpu_custom_call.1} parent=39 // pred_region
          %441 = vst [vmem:[#allocation2] sm:$0xff] 0.0
          %442 = vst [vmem:[#allocation2 + $0x8] sm:$0xff] 0.0
          %443 = vst [vmem:[#allocation2 + $0x10] sm:$0xff] 0.0
          %444 = vst [vmem:[#allocation2 + $0x18] sm:$0xff] 0.0
          %445 = vst [vmem:[#allocation2 + $0x20] sm:$0xff] 0.0
          %446 = vst [vmem:[#allocation2 + $0x28] sm:$0xff] 0.0
          %447 = vst [vmem:[#allocation2 + $0x30] sm:$0xff] 0.0
          %448 = vst [vmem:[#allocation2 + $0x38] sm:$0xff] 0.0
          %449 = vst [vmem:[#allocation2 + $0x40] sm:$0xff] 0.0
          %450 = vst [vmem:[#allocation2 + $0x48] sm:$0xff] 0.0
          %451 = vst [vmem:[#allocation2 + $0x50] sm:$0xff] 0.0
          %452 = vst [vmem:[#allocation2 + $0x58] sm:$0xff] 0.0
          %453 = vst [vmem:[#allocation2 + $0x60] sm:$0xff] 0.0
          %454 = vst [vmem:[#allocation2 + $0x68] sm:$0xff] 0.0
          %455 = vst [vmem:[#allocation2 + $0x70] sm:$0xff] 0.0
          %456 = vst [vmem:[#allocation2 + $0x78] sm:$0xff] 0.0
          %457 = vst [vmem:[#allocation2 + $0x80] sm:$0xff] 0.0
          %458 = vst [vmem:[#allocation2 + $0x88] sm:$0xff] 0.0
          %459 = vst [vmem:[#allocation2 + $0x90] sm:$0xff] 0.0
          %460 = vst [vmem:[#allocation2 + $0x98] sm:$0xff] 0.0
          %461 = vst [vmem:[#allocation2 + $0xa0] sm:$0xff] 0.0
          %462 = vst [vmem:[#allocation2 + $0xa8] sm:$0xff] 0.0
          %463 = vst [vmem:[#allocation2 + $0xb0] sm:$0xff] 0.0
          %464 = vst [vmem:[#allocation2 + $0xb8] sm:$0xff] 0.0
          %465 = vst [vmem:[#allocation2 + $0xc0] sm:$0xff] 0.0
          %466 = vst [vmem:[#allocation2 + $0xc8] sm:$0xff] 0.0
          %467 = vst [vmem:[#allocation2 + $0xd0] sm:$0xff] 0.0
          %468 = vst [vmem:[#allocation2 + $0xd8] sm:$0xff] 0.0
          %469 = vst [vmem:[#allocation2 + $0xe0] sm:$0xff] 0.0
          %470 = vst [vmem:[#allocation2 + $0xe8] sm:$0xff] 0.0
          %471 = vst [vmem:[#allocation2 + $0xf0] sm:$0xff] 0.0
          %472 = vst [vmem:[#allocation2 + $0xf8] sm:$0xff] 0.0
        $region64: #{tpu_custom_call.1} parent=39 // pred_fallthru
          _
        %v473 = vld [vmem:[#allocation2] sm:$0xff]
        %v474 = vld [vmem:[#allocation2 + $0x8] sm:$0xff]
        %v475 = vld [vmem:[#allocation2 + $0x10] sm:$0xff]
        %v476 = vld [vmem:[#allocation2 + $0x18] sm:$0xff]
        %v477 = vld [vmem:[#allocation2 + $0x20] sm:$0xff]
        %v478 = vld [vmem:[#allocation2 + $0x28] sm:$0xff]
        %v479 = vld [vmem:[#allocation2 + $0x30] sm:$0xff]
        %v480 = vld [vmem:[#allocation2 + $0x38] sm:$0xff]
        %v481 = vld [vmem:[#allocation2 + $0x40] sm:$0xff]
        %v482 = vld [vmem:[#allocation2 + $0x48] sm:$0xff]
        %v483 = vld [vmem:[#allocation2 + $0x50] sm:$0xff]
        %v484 = vld [vmem:[#allocation2 + $0x58] sm:$0xff]
        %v485 = vld [vmem:[#allocation2 + $0x60] sm:$0xff]
        %v486 = vld [vmem:[#allocation2 + $0x68] sm:$0xff]
        %v487 = vld [vmem:[#allocation2 + $0x70] sm:$0xff]
        %v488 = vld [vmem:[#allocation2 + $0x78] sm:$0xff]
        %v489 = vld [vmem:[#allocation2 + $0x80] sm:$0xff]
        %v490 = vld [vmem:[#allocation2 + $0x88] sm:$0xff]
        %v491 = vld [vmem:[#allocation2 + $0x90] sm:$0xff]
        %v492 = vld [vmem:[#allocation2 + $0x98] sm:$0xff]
        %v493 = vld [vmem:[#allocation2 + $0xa0] sm:$0xff]
        %v494 = vld [vmem:[#allocation2 + $0xa8] sm:$0xff]
        %v495 = vld [vmem:[#allocation2 + $0xb0] sm:$0xff]
        %v496 = vld [vmem:[#allocation2 + $0xb8] sm:$0xff]
        %v497 = vld [vmem:[#allocation2 + $0xc0] sm:$0xff]
        %v498 = vld [vmem:[#allocation2 + $0xc8] sm:$0xff]
        %v499 = vld [vmem:[#allocation2 + $0xd0] sm:$0xff]
        %v500 = vld [vmem:[#allocation2 + $0xd8] sm:$0xff]
        %v501 = vld [vmem:[#allocation2 + $0xe0] sm:$0xff]
        %v502 = vld [vmem:[#allocation2 + $0xe8] sm:$0xff]
        %v503 = vld [vmem:[#allocation2 + $0xf0] sm:$0xff]
        %v504 = vld [vmem:[#allocation2 + $0xf8] sm:$0xff]
        %v505 = vld [vmem:[%s345] sm:$0xff]
        %v506 = vld [vmem:[%s345 + $0x8] sm:$0xff]
        %v507 = vld [vmem:[%s345 + $0x10] sm:$0xff]
        %v508 = vld [vmem:[%s345 + $0x18] sm:$0xff]
        %v509 = vld [vmem:[%s345 + $0x20] sm:$0xff]
        %v510 = vld [vmem:[%s345 + $0x28] sm:$0xff]
        %v511 = vld [vmem:[%s345 + $0x30] sm:$0xff]
        %v512 = vld [vmem:[%s345 + $0x38] sm:$0xff]
        %v513 = vld [vmem:[%s345 + $0x40] sm:$0xff]
        %v514 = vld [vmem:[%s345 + $0x48] sm:$0xff]
        %v515 = vld [vmem:[%s345 + $0x50] sm:$0xff]
        %v516 = vld [vmem:[%s345 + $0x58] sm:$0xff]
        %v517 = vld [vmem:[%s345 + $0x60] sm:$0xff]
        %v518 = vld [vmem:[%s345 + $0x68] sm:$0xff]
        %v519 = vld [vmem:[%s345 + $0x70] sm:$0xff]
        %v520 = vld [vmem:[%s345 + $0x78] sm:$0xff]
        %v521 = vld [vmem:[%s345 + $0x80] sm:$0xff]
        %v522 = vld [vmem:[%s345 + $0x88] sm:$0xff]
        %v523 = vld [vmem:[%s345 + $0x90] sm:$0xff]
        %v524 = vld [vmem:[%s345 + $0x98] sm:$0xff]
        %v525 = vld [vmem:[%s345 + $0xa0] sm:$0xff]
        %v526 = vld [vmem:[%s345 + $0xa8] sm:$0xff]
        %v527 = vld [vmem:[%s345 + $0xb0] sm:$0xff]
        %v528 = vld [vmem:[%s345 + $0xb8] sm:$0xff]
        %v529 = vld [vmem:[%s345 + $0xc0] sm:$0xff]
        %v530 = vld [vmem:[%s345 + $0xc8] sm:$0xff]
        %v531 = vld [vmem:[%s345 + $0xd0] sm:$0xff]
        %v532 = vld [vmem:[%s345 + $0xd8] sm:$0xff]
        %v533 = vld [vmem:[%s345 + $0xe0] sm:$0xff]
        %v534 = vld [vmem:[%s345 + $0xe8] sm:$0xff]
        %v535 = vld [vmem:[%s345 + $0xf0] sm:$0xff]
        %v536 = vld [vmem:[%s345 + $0xf8] sm:$0xff]
        %v537 = vld [vmem:[%s345 + $0x100] sm:$0xff]
        %v538 = vld [vmem:[%s345 + $0x108] sm:$0xff]
        %v539 = vld [vmem:[%s345 + $0x110] sm:$0xff]
        %v540 = vld [vmem:[%s345 + $0x118] sm:$0xff]
        %v541 = vld [vmem:[%s345 + $0x120] sm:$0xff]
        %v542 = vld [vmem:[%s345 + $0x128] sm:$0xff]
        %v543 = vld [vmem:[%s345 + $0x130] sm:$0xff]
        %v544 = vld [vmem:[%s345 + $0x138] sm:$0xff]
        %v545 = vld [vmem:[%s345 + $0x140] sm:$0xff]
        %v546 = vld [vmem:[%s345 + $0x148] sm:$0xff]
        %v547 = vld [vmem:[%s345 + $0x150] sm:$0xff]
        %v548 = vld [vmem:[%s345 + $0x158] sm:$0xff]
        %v549 = vld [vmem:[%s345 + $0x160] sm:$0xff]
        %v550 = vld [vmem:[%s345 + $0x168] sm:$0xff]
        %v551 = vld [vmem:[%s345 + $0x170] sm:$0xff]
        %v552 = vld [vmem:[%s345 + $0x178] sm:$0xff]
        %v553 = vld [vmem:[%s345 + $0x180] sm:$0xff]
        %v554 = vld [vmem:[%s345 + $0x188] sm:$0xff]
        %v555 = vld [vmem:[%s345 + $0x190] sm:$0xff]
        %v556 = vld [vmem:[%s345 + $0x198] sm:$0xff]
        %v557 = vld [vmem:[%s345 + $0x1a0] sm:$0xff]
        %v558 = vld [vmem:[%s345 + $0x1a8] sm:$0xff]
        %v559 = vld [vmem:[%s345 + $0x1b0] sm:$0xff]
        %v560 = vld [vmem:[%s345 + $0x1b8] sm:$0xff]
        %v561 = vld [vmem:[%s345 + $0x1c0] sm:$0xff]
        %v562 = vld [vmem:[%s345 + $0x1c8] sm:$0xff]
        %v563 = vld [vmem:[%s345 + $0x1d0] sm:$0xff]
        %v564 = vld [vmem:[%s345 + $0x1d8] sm:$0xff]
        %v565 = vld [vmem:[%s345 + $0x1e0] sm:$0xff]
        %v566 = vld [vmem:[%s345 + $0x1e8] sm:$0xff]
        %v567 = vld [vmem:[%s345 + $0x1f0] sm:$0xff]
        %v568 = vld [vmem:[%s345 + $0x1f8] sm:$0xff]
        %v569 = vld [vmem:[%s354] sm:$0xff]
        %v570 = vld [vmem:[%s354 + $0x8] sm:$0xff]
        %v571 = vld [vmem:[%s354 + $0x10] sm:$0xff]
        %v572 = vld [vmem:[%s354 + $0x18] sm:$0xff]
        %v573 = vld [vmem:[%s354 + $0x20] sm:$0xff]
        %v574 = vld [vmem:[%s354 + $0x28] sm:$0xff]
        %v575 = vld [vmem:[%s354 + $0x30] sm:$0xff]
        %v576 = vld [vmem:[%s354 + $0x38] sm:$0xff]
        %v577 = vld [vmem:[%s354 + $0x40] sm:$0xff]
        %v578 = vld [vmem:[%s354 + $0x48] sm:$0xff]
        %v579 = vld [vmem:[%s354 + $0x50] sm:$0xff]
        %v580 = vld [vmem:[%s354 + $0x58] sm:$0xff]
        %v581 = vld [vmem:[%s354 + $0x60] sm:$0xff]
        %v582 = vld [vmem:[%s354 + $0x68] sm:$0xff]
        %v583 = vld [vmem:[%s354 + $0x70] sm:$0xff]
        %v584 = vld [vmem:[%s354 + $0x78] sm:$0xff]
        %v585 = vld [vmem:[%s354 + $0x80] sm:$0xff]
        %v586 = vld [vmem:[%s354 + $0x88] sm:$0xff]
        %v587 = vld [vmem:[%s354 + $0x90] sm:$0xff]
        %v588 = vld [vmem:[%s354 + $0x98] sm:$0xff]
        %v589 = vld [vmem:[%s354 + $0xa0] sm:$0xff]
        %v590 = vld [vmem:[%s354 + $0xa8] sm:$0xff]
        %v591 = vld [vmem:[%s354 + $0xb0] sm:$0xff]
        %v592 = vld [vmem:[%s354 + $0xb8] sm:$0xff]
        %v593 = vld [vmem:[%s354 + $0xc0] sm:$0xff]
        %v594 = vld [vmem:[%s354 + $0xc8] sm:$0xff]
        %v595 = vld [vmem:[%s354 + $0xd0] sm:$0xff]
        %v596 = vld [vmem:[%s354 + $0xd8] sm:$0xff]
        %v597 = vld [vmem:[%s354 + $0xe0] sm:$0xff]
        %v598 = vld [vmem:[%s354 + $0xe8] sm:$0xff]
        %v599 = vld [vmem:[%s354 + $0xf0] sm:$0xff]
        %v600 = vld [vmem:[%s354 + $0xf8] sm:$0xff]
        %v601 = vld [vmem:[%s354 + $0x100] sm:$0xff]
        %v602 = vld [vmem:[%s354 + $0x108] sm:$0xff]
        %v603 = vld [vmem:[%s354 + $0x110] sm:$0xff]
        %v604 = vld [vmem:[%s354 + $0x118] sm:$0xff]
        %v605 = vld [vmem:[%s354 + $0x120] sm:$0xff]
        %v606 = vld [vmem:[%s354 + $0x128] sm:$0xff]
        %v607 = vld [vmem:[%s354 + $0x130] sm:$0xff]
        %v608 = vld [vmem:[%s354 + $0x138] sm:$0xff]
        %v609 = vld [vmem:[%s354 + $0x140] sm:$0xff]
        %v610 = vld [vmem:[%s354 + $0x148] sm:$0xff]
        %v611 = vld [vmem:[%s354 + $0x150] sm:$0xff]
        %v612 = vld [vmem:[%s354 + $0x158] sm:$0xff]
        %v613 = vld [vmem:[%s354 + $0x160] sm:$0xff]
        %v614 = vld [vmem:[%s354 + $0x168] sm:$0xff]
        %v615 = vld [vmem:[%s354 + $0x170] sm:$0xff]
        %v616 = vld [vmem:[%s354 + $0x178] sm:$0xff]
        %v617 = vld [vmem:[%s354 + $0x180] sm:$0xff]
        %v618 = vld [vmem:[%s354 + $0x188] sm:$0xff]
        %v619 = vld [vmem:[%s354 + $0x190] sm:$0xff]
        %v620 = vld [vmem:[%s354 + $0x198] sm:$0xff]
        %v621 = vld [vmem:[%s354 + $0x1a0] sm:$0xff]
        %v622 = vld [vmem:[%s354 + $0x1a8] sm:$0xff]
        %v623 = vld [vmem:[%s354 + $0x1b0] sm:$0xff]
        %v624 = vld [vmem:[%s354 + $0x1b8] sm:$0xff]
        %v625 = vld [vmem:[%s354 + $0x1c0] sm:$0xff]
        %v626 = vld [vmem:[%s354 + $0x1c8] sm:$0xff]
        %v627 = vld [vmem:[%s354 + $0x1d0] sm:$0xff]
        %v628 = vld [vmem:[%s354 + $0x1d8] sm:$0xff]
        %v629 = vld [vmem:[%s354 + $0x1e0] sm:$0xff]
        %v630 = vld [vmem:[%s354 + $0x1e8] sm:$0xff]
        %v631 = vld [vmem:[%s354 + $0x1f0] sm:$0xff]
        %v632 = vld [vmem:[%s354 + $0x1f8] sm:$0xff]
        %v633 = vld [vmem:[%s354 + $0x200] sm:$0xff]
        %v634 = vld [vmem:[%s354 + $0x208] sm:$0xff]
        %v635 = vld [vmem:[%s354 + $0x210] sm:$0xff]
        %v636 = vld [vmem:[%s354 + $0x218] sm:$0xff]
        %v637 = vld [vmem:[%s354 + $0x220] sm:$0xff]
        %v638 = vld [vmem:[%s354 + $0x228] sm:$0xff]
        %v639 = vld [vmem:[%s354 + $0x230] sm:$0xff]
        %v640 = vld [vmem:[%s354 + $0x238] sm:$0xff]
        %v641 = vld [vmem:[%s354 + $0x240] sm:$0xff]
        %v642 = vld [vmem:[%s354 + $0x248] sm:$0xff]
        %v643 = vld [vmem:[%s354 + $0x250] sm:$0xff]
        %v644 = vld [vmem:[%s354 + $0x258] sm:$0xff]
        %v645 = vld [vmem:[%s354 + $0x260] sm:$0xff]
        %v646 = vld [vmem:[%s354 + $0x268] sm:$0xff]
        %v647 = vld [vmem:[%s354 + $0x270] sm:$0xff]
        %v648 = vld [vmem:[%s354 + $0x278] sm:$0xff]
        %v649 = vld [vmem:[%s354 + $0x280] sm:$0xff]
        %v650 = vld [vmem:[%s354 + $0x288] sm:$0xff]
        %v651 = vld [vmem:[%s354 + $0x290] sm:$0xff]
        %v652 = vld [vmem:[%s354 + $0x298] sm:$0xff]
        %v653 = vld [vmem:[%s354 + $0x2a0] sm:$0xff]
        %v654 = vld [vmem:[%s354 + $0x2a8] sm:$0xff]
        %v655 = vld [vmem:[%s354 + $0x2b0] sm:$0xff]
        %v656 = vld [vmem:[%s354 + $0x2b8] sm:$0xff]
        %v657 = vld [vmem:[%s354 + $0x2c0] sm:$0xff]
        %v658 = vld [vmem:[%s354 + $0x2c8] sm:$0xff]
        %v659 = vld [vmem:[%s354 + $0x2d0] sm:$0xff]
        %v660 = vld [vmem:[%s354 + $0x2d8] sm:$0xff]
        %v661 = vld [vmem:[%s354 + $0x2e0] sm:$0xff]
        %v662 = vld [vmem:[%s354 + $0x2e8] sm:$0xff]
        %v663 = vld [vmem:[%s354 + $0x2f0] sm:$0xff]
        %v664 = vld [vmem:[%s354 + $0x2f8] sm:$0xff]
        %v665 = vld [vmem:[%s354 + $0x300] sm:$0xff]
        %v666 = vld [vmem:[%s354 + $0x308] sm:$0xff]
        %v667 = vld [vmem:[%s354 + $0x310] sm:$0xff]
        %v668 = vld [vmem:[%s354 + $0x318] sm:$0xff]
        %v669 = vld [vmem:[%s354 + $0x320] sm:$0xff]
        %v670 = vld [vmem:[%s354 + $0x328] sm:$0xff]
        %v671 = vld [vmem:[%s354 + $0x330] sm:$0xff]
        %v672 = vld [vmem:[%s354 + $0x338] sm:$0xff]
        %v673 = vld [vmem:[%s354 + $0x340] sm:$0xff]
        %v674 = vld [vmem:[%s354 + $0x348] sm:$0xff]
        %v675 = vld [vmem:[%s354 + $0x350] sm:$0xff]
        %v676 = vld [vmem:[%s354 + $0x358] sm:$0xff]
        %v677 = vld [vmem:[%s354 + $0x360] sm:$0xff]
        %v678 = vld [vmem:[%s354 + $0x368] sm:$0xff]
        %v679 = vld [vmem:[%s354 + $0x370] sm:$0xff]
        %v680 = vld [vmem:[%s354 + $0x378] sm:$0xff]
        %v681 = vld [vmem:[%s354 + $0x380] sm:$0xff]
        %v682 = vld [vmem:[%s354 + $0x388] sm:$0xff]
        %v683 = vld [vmem:[%s354 + $0x390] sm:$0xff]
        %v684 = vld [vmem:[%s354 + $0x398] sm:$0xff]
        %v685 = vld [vmem:[%s354 + $0x3a0] sm:$0xff]
        %v686 = vld [vmem:[%s354 + $0x3a8] sm:$0xff]
        %v687 = vld [vmem:[%s354 + $0x3b0] sm:$0xff]
        %v688 = vld [vmem:[%s354 + $0x3b8] sm:$0xff]
        %v689 = vld [vmem:[%s354 + $0x3c0] sm:$0xff]
        %v690 = vld [vmem:[%s354 + $0x3c8] sm:$0xff]
        %v691 = vld [vmem:[%s354 + $0x3d0] sm:$0xff]
        %v692 = vld [vmem:[%s354 + $0x3d8] sm:$0xff]
        %v693 = vld [vmem:[%s354 + $0x3e0] sm:$0xff]
        %v694 = vld [vmem:[%s354 + $0x3e8] sm:$0xff]
        %v695 = vld [vmem:[%s354 + $0x3f0] sm:$0xff]
        %v696 = vld [vmem:[%s354 + $0x3f8] sm:$0xff]
        %v697 = vand.u32 %v570, 4294901760
        %698 = vmatprep.subr.mxu0 %v697
        %v699 = vand.u32 %v569, 4294901760
        %700 = vmatpush1.msra.mxu0 %v699
        %v701 = vand.u32 %v572, 4294901760
        %702 = vmatprep.subr.mxu0 %v701
        %v703 = vand.u32 %v571, 4294901760
        %704 = vmatpush1.msra.mxu0 %v703
        %v705 = vand.u32 %v574, 4294901760
        %706 = vmatprep.subr.mxu0 %v705
        %v707 = vand.u32 %v573, 4294901760
        %708 = vmatpush1.msra.mxu0 %v707
        %v709 = vand.u32 %v576, 4294901760
        %710 = vmatprep.subr.mxu0 %v709
        %v711 = vand.u32 %v575, 4294901760
        %712 = vmatpush1.msra.mxu0 %v711
        %v713 = vand.u32 %v578, 4294901760
        %714 = vmatprep.subr.mxu0 %v713
        %v715 = vand.u32 %v577, 4294901760
        %716 = vmatpush1.msra.mxu0 %v715
        %v717 = vand.u32 %v580, 4294901760
        %718 = vmatprep.subr.mxu0 %v717
        %v719 = vand.u32 %v579, 4294901760
        %720 = vmatpush1.msra.mxu0 %v719
        %v721 = vand.u32 %v582, 4294901760
        %722 = vmatprep.subr.mxu0 %v721
        %v723 = vand.u32 %v581, 4294901760
        %724 = vmatpush1.msra.mxu0 %v723
        %v725 = vand.u32 %v584, 4294901760
        %726 = vmatprep.subr.mxu0 %v725
        %v727 = vand.u32 %v583, 4294901760
        %728 = vmatpush1.msra.mxu0 %v727
        %v729 = vand.u32 %v586, 4294901760
        %730 = vmatprep.subr.mxu0 %v729
        %v731 = vand.u32 %v585, 4294901760
        %732 = vmatpush1.msra.mxu0 %v731
        %v733 = vand.u32 %v588, 4294901760
        %734 = vmatprep.subr.mxu0 %v733
        %v735 = vand.u32 %v587, 4294901760
        %736 = vmatpush1.msra.mxu0 %v735
        %v737 = vand.u32 %v590, 4294901760
        %738 = vmatprep.subr.mxu0 %v737
        %v739 = vand.u32 %v589, 4294901760
        %740 = vmatpush1.msra.mxu0 %v739
        %v741 = vand.u32 %v592, 4294901760
        %742 = vmatprep.subr.mxu0 %v741
        %v743 = vand.u32 %v591, 4294901760
        %744 = vmatpush1.msra.mxu0 %v743
        %v745 = vand.u32 %v594, 4294901760
        %746 = vmatprep.subr.mxu0 %v745
        %v747 = vand.u32 %v593, 4294901760
        %748 = vmatpush1.msra.mxu0 %v747
        %v749 = vand.u32 %v596, 4294901760
        %750 = vmatprep.subr.mxu0 %v749
        %v751 = vand.u32 %v595, 4294901760
        %752 = vmatpush1.msra.mxu0 %v751
        %v753 = vand.u32 %v598, 4294901760
        %754 = vmatprep.subr.mxu0 %v753
        %v755 = vand.u32 %v597, 4294901760
        %756 = vmatpush1.msra.mxu0 %v755
        %v757 = vand.u32 %v600, 4294901760
        %758 = vmatprep.subr.mxu0 %v757
        %v759 = vand.u32 %v599, 4294901760
        %760 = vmatpush1.msra.mxu0 %v759
        %v761 = vand.u32 %v602, 4294901760
        %762 = vmatprep.subr.mxu0 %v761
        %v763 = vand.u32 %v601, 4294901760
        %764 = vmatpush1.msra.mxu0 %v763
        %v765 = vand.u32 %v604, 4294901760
        %766 = vmatprep.subr.mxu0 %v765
        %v767 = vand.u32 %v603, 4294901760
        %768 = vmatpush1.msra.mxu0 %v767
        %v769 = vand.u32 %v606, 4294901760
        %770 = vmatprep.subr.mxu0 %v769
        %v771 = vand.u32 %v605, 4294901760
        %772 = vmatpush1.msra.mxu0 %v771
        %v773 = vand.u32 %v608, 4294901760
        %774 = vmatprep.subr.mxu0 %v773
        %v775 = vand.u32 %v607, 4294901760
        %776 = vmatpush1.msra.mxu0 %v775
        %v777 = vand.u32 %v610, 4294901760
        %778 = vmatprep.subr.mxu0 %v777
        %v779 = vand.u32 %v609, 4294901760
        %780 = vmatpush1.msra.mxu0 %v779
        %v781 = vand.u32 %v612, 4294901760
        %782 = vmatprep.subr.mxu0 %v781
        %v783 = vand.u32 %v611, 4294901760
        %784 = vmatpush1.msra.mxu0 %v783
        %v785 = vand.u32 %v614, 4294901760
        %786 = vmatprep.subr.mxu0 %v785
        %v787 = vand.u32 %v613, 4294901760
        %788 = vmatpush1.msra.mxu0 %v787
        %v789 = vand.u32 %v616, 4294901760
        %790 = vmatprep.subr.mxu0 %v789
        %v791 = vand.u32 %v615, 4294901760
        %792 = vmatpush1.msra.mxu0 %v791
        %v793 = vand.u32 %v618, 4294901760
        %794 = vmatprep.subr.mxu0 %v793
        %v795 = vand.u32 %v617, 4294901760
        %796 = vmatpush1.msra.mxu0 %v795
        %v797 = vand.u32 %v620, 4294901760
        %798 = vmatprep.subr.mxu0 %v797
        %v799 = vand.u32 %v619, 4294901760
        %800 = vmatpush1.msra.mxu0 %v799
        %v801 = vand.u32 %v622, 4294901760
        %802 = vmatprep.subr.mxu0 %v801
        %v803 = vand.u32 %v621, 4294901760
        %804 = vmatpush1.msra.mxu0 %v803
        %v805 = vand.u32 %v624, 4294901760
        %806 = vmatprep.subr.mxu0 %v805
        %v807 = vand.u32 %v623, 4294901760
        %808 = vmatpush1.msra.mxu0 %v807
        %v809 = vand.u32 %v626, 4294901760
        %810 = vmatprep.subr.mxu0 %v809
        %v811 = vand.u32 %v625, 4294901760
        %812 = vmatpush1.msra.mxu0 %v811
        %v813 = vand.u32 %v628, 4294901760
        %814 = vmatprep.subr.mxu0 %v813
        %v815 = vand.u32 %v627, 4294901760
        %816 = vmatpush1.msra.mxu0 %v815
        %v817 = vand.u32 %v630, 4294901760
        %818 = vmatprep.subr.mxu0 %v817
        %v819 = vand.u32 %v629, 4294901760
        %820 = vmatpush1.msra.mxu0 %v819
        %v821 = vand.u32 %v632, 4294901760
        %822 = vmatprep.subr.mxu0 %v821
        %v823 = vand.u32 %v631, 4294901760
        %824 = vmatpush1.msra.mxu0 %v823
        %v825 = vand.u32 %v506, 4294901760
        %v826 = vsub.f32 %v506, %v825
        %v827 = vand.u32 %v826, 4294901760
        %v828 = vsub.f32 %v826, %v827
        %v829 = vand.u32 %v828, 4294901760
        %830 = vmatprep.mubr.f32.mxu0 %v829
        %v831 = vand.u32 %v505, 4294901760
        %v832 = vsub.f32 %v505, %v831
        %v833 = vand.u32 %v832, 4294901760
        %v834 = vsub.f32 %v832, %v833
        %v835 = vand.u32 %v834, 4294901760
        %836 = vmatmul.mubr.f32.gmra.mrb[0].mxu0 %v835
        %v837 = vpop.f32.mrb[0].mxu0
        %v838 = vadd.f32 0.0, %v837
        %v839 = vpop.f32.mrb[0].mxu0
        %v840 = vadd.f32 0.0, %v839
        %v841 = vand.u32 %v510, 4294901760
        %v842 = vsub.f32 %v510, %v841
        %v843 = vand.u32 %v842, 4294901760
        %v844 = vsub.f32 %v842, %v843
        %v845 = vand.u32 %v844, 4294901760
        %846 = vmatprep.mubr.f32.mxu0 %v845
        %v847 = vand.u32 %v509, 4294901760
        %v848 = vsub.f32 %v509, %v847
        %v849 = vand.u32 %v848, 4294901760
        %v850 = vsub.f32 %v848, %v849
        %v851 = vand.u32 %v850, 4294901760
        %852 = vmatmul.mubr.f32.gmra.mrb[0].mxu0 %v851
        %v853 = vpop.f32.mrb[0].mxu0
        %v854 = vadd.f32 0.0, %v853
        %v855 = vpop.f32.mrb[0].mxu0
        %v856 = vadd.f32 0.0, %v855
        %v857 = vand.u32 %v514, 4294901760
        %v858 = vsub.f32 %v514, %v857
        %v859 = vand.u32 %v858, 4294901760
        %v860 = vsub.f32 %v858, %v859
        %v861 = vand.u32 %v860, 4294901760
        %862 = vmatprep.mubr.f32.mxu0 %v861
        %v863 = vand.u32 %v513, 4294901760
        %v864 = vsub.f32 %v513, %v863
        %v865 = vand.u32 %v864, 4294901760
        %v866 = vsub.f32 %v864, %v865
        %v867 = vand.u32 %v866, 4294901760
        %868 = vmatmul.mubr.f32.gmra.mrb[0].mxu0 %v867
        %v869 = vpop.f32.mrb[0].mxu0
        %v870 = vadd.f32 0.0, %v869
        %v871 = vpop.f32.mrb[0].mxu0
        %v872 = vadd.f32 0.0, %v871
        %v873 = vand.u32 %v518, 4294901760
        %v874 = vsub.f32 %v518, %v873
        %v875 = vand.u32 %v874, 4294901760
        %v876 = vsub.f32 %v874, %v875
        %v877 = vand.u32 %v876, 4294901760
        %878 = vmatprep.mubr.f32.mxu0 %v877
        %v879 = vand.u32 %v517, 4294901760
        %v880 = vsub.f32 %v517, %v879
        %v881 = vand.u32 %v880, 4294901760
        %v882 = vsub.f32 %v880, %v881
        %v883 = vand.u32 %v882, 4294901760
        %884 = vmatmul.mubr.f32.gmra.mrb[0].mxu0 %v883
        %v885 = vpop.f32.mrb[0].mxu0
        %v886 = vadd.f32 0.0, %v885
        %v887 = vpop.f32.mrb[0].mxu0
        %v888 = vadd.f32 0.0, %v887
        %v889 = vand.u32 %v522, 4294901760
        %v890 = vsub.f32 %v522, %v889
        %v891 = vand.u32 %v890, 4294901760
        %v892 = vsub.f32 %v890, %v891
        %v893 = vand.u32 %v892, 4294901760
        %894 = vmatprep.mubr.f32.mxu0 %v893
        %v895 = vand.u32 %v521, 4294901760
        %v896 = vsub.f32 %v521, %v895
        %v897 = vand.u32 %v896, 4294901760
        %v898 = vsub.f32 %v896, %v897
        %v899 = vand.u32 %v898, 4294901760
        %900 = vmatmul.mubr.f32.gmra.mrb[0].mxu0 %v899
        %v901 = vpop.f32.mrb[0].mxu0
        %v902 = vadd.f32 0.0, %v901
        %v903 = vpop.f32.mrb[0].mxu0
        %v904 = vadd.f32 0.0, %v903
        %v905 = vand.u32 %v526, 4294901760
        %v906 = vsub.f32 %v526, %v905
        %v907 = vand.u32 %v906, 4294901760
        %v908 = vsub.f32 %v906, %v907
        %v909 = vand.u32 %v908, 4294901760
        %910 = vmatprep.mubr.f32.mxu0 %v909
        %v911 = vand.u32 %v525, 4294901760
        %v912 = vsub.f32 %v525, %v911
        %v913 = vand.u32 %v912, 4294901760
        %v914 = vsub.f32 %v912, %v913
        %v915 = vand.u32 %v914, 4294901760
        %916 = vmatmul.mubr.f32.gmra.mrb[0].mxu0 %v915
        %v917 = vpop.f32.mrb[0].mxu0
        %v918 = vadd.f32 0.0, %v917
        %v919 = vpop.f32.mrb[0].mxu0
        %v920 = vadd.f32 0.0, %v919
        %v921 = vand.u32 %v530, 4294901760
        %v922 = vsub.f32 %v530, %v921
        %v923 = vand.u32 %v922, 4294901760
        %v924 = vsub.f32 %v922, %v923
        %v925 = vand.u32 %v924, 4294901760
        %926 = vmatprep.mubr.f32.mxu0 %v925
        %v927 = vand.u32 %v529, 4294901760
        %v928 = vsub.f32 %v529, %v927
        %v929 = vand.u32 %v928, 4294901760
        %v930 = vsub.f32 %v928, %v929
        %v931 = vand.u32 %v930, 4294901760
        %932 = vmatmul.mubr.f32.gmra.mrb[0].mxu0 %v931
        %v933 = vpop.f32.mrb[0].mxu0
        %v934 = vadd.f32 0.0, %v933
        %v935 = vpop.f32.mrb[0].mxu0
        %v936 = vadd.f32 0.0, %v935
        %v937 = vand.u32 %v534, 4294901760
        %v938 = vsub.f32 %v534, %v937
        %v939 = vand.u32 %v938, 4294901760
        %v940 = vsub.f32 %v938, %v939
        %v941 = vand.u32 %v940, 4294901760
        %942 = vmatprep.mubr.f32.mxu0 %v941
        %v943 = vand.u32 %v533, 4294901760
        %v944 = vsub.f32 %v533, %v943
        %v945 = vand.u32 %v944, 4294901760
        %v946 = vsub.f32 %v944, %v945
        %v947 = vand.u32 %v946, 4294901760
        %948 = vmatmul.mubr.f32.gmra.mrb[0].mxu0 %v947
        %v949 = vpop.f32.mrb[0].mxu0
        %v950 = vadd.f32 0.0, %v949
        %v951 = vpop.f32.mrb[0].mxu0
        %v952 = vadd.f32 0.0, %v951
        %v953 = vand.u32 %v538, 4294901760
        %v954 = vsub.f32 %v538, %v953
        %v955 = vand.u32 %v954, 4294901760
        %v956 = vsub.f32 %v954, %v955
        %v957 = vand.u32 %v956, 4294901760
        %958 = vmatprep.mubr.f32.mxu0 %v957
        %v959 = vand.u32 %v537, 4294901760
        %v960 = vsub.f32 %v537, %v959
        %v961 = vand.u32 %v960, 4294901760
        %v962 = vsub.f32 %v960, %v961
        %v963 = vand.u32 %v962, 4294901760
        %964 = vmatmul.mubr.f32.gmra.mrb[0].mxu0 %v963
        %v965 = vpop.f32.mrb[0].mxu0
        %v966 = vadd.f32 0.0, %v965
        %v967 = vpop.f32.mrb[0].mxu0
        %v968 = vadd.f32 0.0, %v967
        %v969 = vand.u32 %v542, 4294901760
        %v970 = vsub.f32 %v542, %v969
        %v971 = vand.u32 %v970, 4294901760
        %v972 = vsub.f32 %v970, %v971
        %v973 = vand.u32 %v972, 4294901760
        %974 = vmatprep.mubr.f32.mxu0 %v973
        %v975 = vand.u32 %v541, 4294901760
        %v976 = vsub.f32 %v541, %v975
        %v977 = vand.u32 %v976, 4294901760
        %v978 = vsub.f32 %v976, %v977
        %v979 = vand.u32 %v978, 4294901760
        %980 = vmatmul.mubr.f32.gmra.mrb[0].mxu0 %v979
        %v981 = vpop.f32.mrb[0].mxu0
        %v982 = vadd.f32 0.0, %v981
        %v983 = vpop.f32.mrb[0].mxu0
        %v984 = vadd.f32 0.0, %v983
        %v985 = vand.u32 %v546, 4294901760
        %v986 = vsub.f32 %v546, %v985
        %v987 = vand.u32 %v986, 4294901760
        %v988 = vsub.f32 %v986, %v987
        %v989 = vand.u32 %v988, 4294901760
        %990 = vmatprep.mubr.f32.mxu0 %v989
        %v991 = vand.u32 %v545, 4294901760
        %v992 = vsub.f32 %v545, %v991
        %v993 = vand.u32 %v992, 4294901760
        %v994 = vsub.f32 %v992, %v993
        %v995 = vand.u32 %v994, 4294901760
        %996 = vmatmul.mubr.f32.gmra.mrb[0].mxu0 %v995
        %v997 = vpop.f32.mrb[0].mxu0
        %v998 = vadd.f32 0.0, %v997
        %v999 = vpop.f32.mrb[0].mxu0
        %v1000 = vadd.f32 0.0, %v999
        %v1001 = vand.u32 %v550, 4294901760
        %v1002 = vsub.f32 %v550, %v1001
        %v1003 = vand.u32 %v1002, 4294901760
        %v1004 = vsub.f32 %v1002, %v1003
        %v1005 = vand.u32 %v1004, 4294901760
        %1006 = vmatprep.mubr.f32.mxu0 %v1005
        %v1007 = vand.u32 %v549, 4294901760
        %v1008 = vsub.f32 %v549, %v1007
        %v1009 = vand.u32 %v1008, 4294901760
        %v1010 = vsub.f32 %v1008, %v1009
        %v1011 = vand.u32 %v1010, 4294901760
        %1012 = vmatmul.mubr.f32.gmra.mrb[0].mxu0 %v1011
        %v1013 = vpop.f32.mrb[0].mxu0
        %v1014 = vadd.f32 0.0, %v1013
        %v1015 = vpop.f32.mrb[0].mxu0
        %v1016 = vadd.f32 0.0, %v1015
        %v1017 = vand.u32 %v554, 4294901760
        %v1018 = vsub.f32 %v554, %v1017
        %v1019 = vand.u32 %v1018, 4294901760
        %v1020 = vsub.f32 %v1018, %v1019
        %v1021 = vand.u32 %v1020, 4294901760
        %1022 = vmatprep.mubr.f32.mxu0 %v1021
        %v1023 = vand.u32 %v553, 4294901760
        %v1024 = vsub.f32 %v553, %v1023
        %v1025 = vand.u32 %v1024, 4294901760
        %v1026 = vsub.f32 %v1024, %v1025
        %v1027 = vand.u32 %v1026, 4294901760
        %1028 = vmatmul.mubr.f32.gmra.mrb[0].mxu0 %v1027
        %v1029 = vpop.f32.mrb[0].mxu0
        %v1030 = vadd.f32 0.0, %v1029
        %v1031 = vpop.f32.mrb[0].mxu0
        %v1032 = vadd.f32 0.0, %v1031
        %v1033 = vand.u32 %v558, 4294901760
        %v1034 = vsub.f32 %v558, %v1033
        %v1035 = vand.u32 %v1034, 4294901760
        %v1036 = vsub.f32 %v1034, %v1035
        %v1037 = vand.u32 %v1036, 4294901760
        %1038 = vmatprep.mubr.f32.mxu0 %v1037
        %v1039 = vand.u32 %v557, 4294901760
        %v1040 = vsub.f32 %v557, %v1039
        %v1041 = vand.u32 %v1040, 4294901760
        %v1042 = vsub.f32 %v1040, %v1041
        %v1043 = vand.u32 %v1042, 4294901760
        %1044 = vmatmul.mubr.f32.gmra.mrb[0].mxu0 %v1043
        %v1045 = vpop.f32.mrb[0].mxu0
        %v1046 = vadd.f32 0.0, %v1045
        %v1047 = vpop.f32.mrb[0].mxu0
        %v1048 = vadd.f32 0.0, %v1047
        %v1049 = vand.u32 %v562, 4294901760
        %v1050 = vsub.f32 %v562, %v1049
        %v1051 = vand.u32 %v1050, 4294901760
        %v1052 = vsub.f32 %v1050, %v1051
        %v1053 = vand.u32 %v1052, 4294901760
        %1054 = vmatprep.mubr.f32.mxu0 %v1053
        %v1055 = vand.u32 %v561, 4294901760
        %v1056 = vsub.f32 %v561, %v1055
        %v1057 = vand.u32 %v1056, 4294901760
        %v1058 = vsub.f32 %v1056, %v1057
        %v1059 = vand.u32 %v1058, 4294901760
        %1060 = vmatmul.mubr.f32.gmra.mrb[0].mxu0 %v1059
        %v1061 = vpop.f32.mrb[0].mxu0
        %v1062 = vadd.f32 0.0, %v1061
        %v1063 = vpop.f32.mrb[0].mxu0
        %v1064 = vadd.f32 0.0, %v1063
        %v1065 = vand.u32 %v566, 4294901760
        %v1066 = vsub.f32 %v566, %v1065
        %v1067 = vand.u32 %v1066, 4294901760
        %v1068 = vsub.f32 %v1066, %v1067
        %v1069 = vand.u32 %v1068, 4294901760
        %1070 = vmatprep.mubr.f32.mxu0 %v1069
        %v1071 = vand.u32 %v565, 4294901760
        %v1072 = vsub.f32 %v565, %v1071
        %v1073 = vand.u32 %v1072, 4294901760
        %v1074 = vsub.f32 %v1072, %v1073
        %v1075 = vand.u32 %v1074, 4294901760
        %1076 = vmatmul.mubr.f32.gmra.mrb[0].mxu0 %v1075
        %v1077 = vpop.f32.mrb[0].mxu0
        %v1078 = vadd.f32 0.0, %v1077
        %v1079 = vpop.f32.mrb[0].mxu0
        %v1080 = vadd.f32 0.0, %v1079
        %1081 = vdwg.mxu0
        %v1082 = vand.u32 %v570, 4294901760
        %v1083 = vsub.f32 %v570, %v1082
        %v1084 = vand.u32 %v1083, 4294901760
        %v1085 = vsub.f32 %v1083, %v1084
        %v1086 = vand.u32 %v1085, 4294901760
        %1087 = vmatprep.subr.mxu0 %v1086
        %v1088 = vand.u32 %v569, 4294901760
        %v1089 = vsub.f32 %v569, %v1088
        %v1090 = vand.u32 %v1089, 4294901760
        %v1091 = vsub.f32 %v1089, %v1090
        %v1092 = vand.u32 %v1091, 4294901760
        %1093 = vmatpush1.msra.mxu0 %v1092
        %v1094 = vand.u32 %v572, 4294901760
        %v1095 = vsub.f32 %v572, %v1094
        %v1096 = vand.u32 %v1095, 4294901760
        %v1097 = vsub.f32 %v1095, %v1096
        %v1098 = vand.u32 %v1097, 4294901760
        %1099 = vmatprep.subr.mxu0 %v1098
        %v1100 = vand.u32 %v571, 4294901760
        %v1101 = vsub.f32 %v571, %v1100
        %v1102 = vand.u32 %v1101, 4294901760
        %v1103 = vsub.f32 %v1101, %v1102
        %v1104 = vand.u32 %v1103, 4294901760
        %1105 = vmatpush1.msra.mxu0 %v1104
        %v1106 = vand.u32 %v574, 4294901760
        %v1107 = vsub.f32 %v574, %v1106
        %v1108 = vand.u32 %v1107, 4294901760
        %v1109 = vsub.f32 %v1107, %v1108
        %v1110 = vand.u32 %v1109, 4294901760
        %1111 = vmatprep.subr.mxu0 %v1110
        %v1112 = vand.u32 %v573, 4294901760
        %v1113 = vsub.f32 %v573, %v1112
        %v1114 = vand.u32 %v1113, 4294901760
        %v1115 = vsub.f32 %v1113, %v1114
        %v1116 = vand.u32 %v1115, 4294901760
        %1117 = vmatpush1.msra.mxu0 %v1116
        %v1118 = vand.u32 %v576, 4294901760
        %v1119 = vsub.f32 %v576, %v1118
        %v1120 = vand.u32 %v1119, 4294901760
        %v1121 = vsub.f32 %v1119, %v1120
        %v1122 = vand.u32 %v1121, 4294901760
        %1123 = vmatprep.subr.mxu0 %v1122
        %v1124 = vand.u32 %v575, 4294901760
        %v1125 = vsub.f32 %v575, %v1124
        %v1126 = vand.u32 %v1125, 4294901760
        %v1127 = vsub.f32 %v1125, %v1126
        %v1128 = vand.u32 %v1127, 4294901760
        %1129 = vmatpush1.msra.mxu0 %v1128
        %v1130 = vand.u32 %v578, 4294901760
        %v1131 = vsub.f32 %v578, %v1130
        %v1132 = vand.u32 %v1131, 4294901760
        %v1133 = vsub.f32 %v1131, %v1132
        %v1134 = vand.u32 %v1133, 4294901760
        %1135 = vmatprep.subr.mxu0 %v1134
        %v1136 = vand.u32 %v577, 4294901760
        %v1137 = vsub.f32 %v577, %v1136
        %v1138 = vand.u32 %v1137, 4294901760
        %v1139 = vsub.f32 %v1137, %v1138
        %v1140 = vand.u32 %v1139, 4294901760
        %1141 = vmatpush1.msra.mxu0 %v1140
        %v1142 = vand.u32 %v580, 4294901760
        %v1143 = vsub.f32 %v580, %v1142
        %v1144 = vand.u32 %v1143, 4294901760
        %v1145 = vsub.f32 %v1143, %v1144
        %v1146 = vand.u32 %v1145, 4294901760
        %1147 = vmatprep.subr.mxu0 %v1146
        %v1148 = vand.u32 %v579, 4294901760
        %v1149 = vsub.f32 %v579, %v1148
        %v1150 = vand.u32 %v1149, 4294901760
        %v1151 = vsub.f32 %v1149, %v1150
        %v1152 = vand.u32 %v1151, 4294901760
        %1153 = vmatpush1.msra.mxu0 %v1152
        %v1154 = vand.u32 %v582, 4294901760
        %v1155 = vsub.f32 %v582, %v1154
        %v1156 = vand.u32 %v1155, 4294901760
        %v1157 = vsub.f32 %v1155, %v1156
        %v1158 = vand.u32 %v1157, 4294901760
        %1159 = vmatprep.subr.mxu0 %v1158
        %v1160 = vand.u32 %v581, 4294901760
        %v1161 = vsub.f32 %v581, %v1160
        %v1162 = vand.u32 %v1161, 4294901760
        %v1163 = vsub.f32 %v1161, %v1162
        %v1164 = vand.u32 %v1163, 4294901760
        %1165 = vmatpush1.msra.mxu0 %v1164
        %v1166 = vand.u32 %v584, 4294901760
        %v1167 = vsub.f32 %v584, %v1166
        %v1168 = vand.u32 %v1167, 4294901760
        %v1169 = vsub.f32 %v1167, %v1168
        %v1170 = vand.u32 %v1169, 4294901760
        %1171 = vmatprep.subr.mxu0 %v1170
        %v1172 = vand.u32 %v583, 4294901760
        %v1173 = vsub.f32 %v583, %v1172
        %v1174 = vand.u32 %v1173, 4294901760
        %v1175 = vsub.f32 %v1173, %v1174
        %v1176 = vand.u32 %v1175, 4294901760
        %1177 = vmatpush1.msra.mxu0 %v1176
        %v1178 = vand.u32 %v586, 4294901760
        %v1179 = vsub.f32 %v586, %v1178
        %v1180 = vand.u32 %v1179, 4294901760
        %v1181 = vsub.f32 %v1179, %v1180
        %v1182 = vand.u32 %v1181, 4294901760
        %1183 = vmatprep.subr.mxu0 %v1182
        %v1184 = vand.u32 %v585, 4294901760
        %v1185 = vsub.f32 %v585, %v1184
        %v1186 = vand.u32 %v1185, 4294901760
        %v1187 = vsub.f32 %v1185, %v1186
        %v1188 = vand.u32 %v1187, 4294901760
        %1189 = vmatpush1.msra.mxu0 %v1188
        %v1190 = vand.u32 %v588, 4294901760
        %v1191 = vsub.f32 %v588, %v1190
        %v1192 = vand.u32 %v1191, 4294901760
        %v1193 = vsub.f32 %v1191, %v1192
        %v1194 = vand.u32 %v1193, 4294901760
        %1195 = vmatprep.subr.mxu0 %v1194
        %v1196 = vand.u32 %v587, 4294901760
        %v1197 = vsub.f32 %v587, %v1196
        %v1198 = vand.u32 %v1197, 4294901760
        %v1199 = vsub.f32 %v1197, %v1198
        %v1200 = vand.u32 %v1199, 4294901760
        %1201 = vmatpush1.msra.mxu0 %v1200
        %v1202 = vand.u32 %v590, 4294901760
        %v1203 = vsub.f32 %v590, %v1202
        %v1204 = vand.u32 %v1203, 4294901760
        %v1205 = vsub.f32 %v1203, %v1204
        %v1206 = vand.u32 %v1205, 4294901760
        %1207 = vmatprep.subr.mxu0 %v1206
        %v1208 = vand.u32 %v589, 4294901760
        %v1209 = vsub.f32 %v589, %v1208
        %v1210 = vand.u32 %v1209, 4294901760
        %v1211 = vsub.f32 %v1209, %v1210
        %v1212 = vand.u32 %v1211, 4294901760
        %1213 = vmatpush1.msra.mxu0 %v1212
        %v1214 = vand.u32 %v592, 4294901760
        %v1215 = vsub.f32 %v592, %v1214
        %v1216 = vand.u32 %v1215, 4294901760
        %v1217 = vsub.f32 %v1215, %v1216
        %v1218 = vand.u32 %v1217, 4294901760
        %1219 = vmatprep.subr.mxu0 %v1218
        %v1220 = vand.u32 %v591, 4294901760
        %v1221 = vsub.f32 %v591, %v1220
        %v1222 = vand.u32 %v1221, 4294901760
        %v1223 = vsub.f32 %v1221, %v1222
        %v1224 = vand.u32 %v1223, 4294901760
        %1225 = vmatpush1.msra.mxu0 %v1224
        %v1226 = vand.u32 %v594, 4294901760
        %v1227 = vsub.f32 %v594, %v1226
        %v1228 = vand.u32 %v1227, 4294901760
        %v1229 = vsub.f32 %v1227, %v1228
        %v1230 = vand.u32 %v1229, 4294901760
        %1231 = vmatprep.subr.mxu0 %v1230
        %v1232 = vand.u32 %v593, 4294901760
        %v1233 = vsub.f32 %v593, %v1232
        %v1234 = vand.u32 %v1233, 4294901760
        %v1235 = vsub.f32 %v1233, %v1234
        %v1236 = vand.u32 %v1235, 4294901760
        %1237 = vmatpush1.msra.mxu0 %v1236
        %v1238 = vand.u32 %v596, 4294901760
        %v1239 = vsub.f32 %v596, %v1238
        %v1240 = vand.u32 %v1239, 4294901760
        %v1241 = vsub.f32 %v1239, %v1240
        %v1242 = vand.u32 %v1241, 4294901760
        %1243 = vmatprep.subr.mxu0 %v1242
        %v1244 = vand.u32 %v595, 4294901760
        %v1245 = vsub.f32 %v595, %v1244
        %v1246 = vand.u32 %v1245, 4294901760
        %v1247 = vsub.f32 %v1245, %v1246
        %v1248 = vand.u32 %v1247, 4294901760
        %1249 = vmatpush1.msra.mxu0 %v1248
        %v1250 = vand.u32 %v598, 4294901760
        %v1251 = vsub.f32 %v598, %v1250
        %v1252 = vand.u32 %v1251, 4294901760
        %v1253 = vsub.f32 %v1251, %v1252
        %v1254 = vand.u32 %v1253, 4294901760
        %1255 = vmatprep.subr.mxu0 %v1254
        %v1256 = vand.u32 %v597, 4294901760
        %v1257 = vsub.f32 %v597, %v1256
        %v1258 = vand.u32 %v1257, 4294901760
        %v1259 = vsub.f32 %v1257, %v1258
        %v1260 = vand.u32 %v1259, 4294901760
        %1261 = vmatpush1.msra.mxu0 %v1260
        %v1262 = vand.u32 %v600, 4294901760
        %v1263 = vsub.f32 %v600, %v1262
        %v1264 = vand.u32 %v1263, 4294901760
        %v1265 = vsub.f32 %v1263, %v1264
        %v1266 = vand.u32 %v1265, 4294901760
        %1267 = vmatprep.subr.mxu0 %v1266
        %v1268 = vand.u32 %v599, 4294901760
        %v1269 = vsub.f32 %v599, %v1268
        %v1270 = vand.u32 %v1269, 4294901760
        %v1271 = vsub.f32 %v1269, %v1270
        %v1272 = vand.u32 %v1271, 4294901760
        %1273 = vmatpush1.msra.mxu0 %v1272
        %v1274 = vand.u32 %v602, 4294901760
        %v1275 = vsub.f32 %v602, %v1274
        %v1276 = vand.u32 %v1275, 4294901760
        %v1277 = vsub.f32 %v1275, %v1276
        %v1278 = vand.u32 %v1277, 4294901760
        %1279 = vmatprep.subr.mxu0 %v1278
        %v1280 = vand.u32 %v601, 4294901760
        %v1281 = vsub.f32 %v601, %v1280
        %v1282 = vand.u32 %v1281, 4294901760
        %v1283 = vsub.f32 %v1281, %v1282
        %v1284 = vand.u32 %v1283, 4294901760
        %1285 = vmatpush1.msra.mxu0 %v1284
        %v1286 = vand.u32 %v604, 4294901760
        %v1287 = vsub.f32 %v604, %v1286
        %v1288 = vand.u32 %v1287, 4294901760
        %v1289 = vsub.f32 %v1287, %v1288
        %v1290 = vand.u32 %v1289, 4294901760
        %1291 = vmatprep.subr.mxu0 %v1290
        %v1292 = vand.u32 %v603, 4294901760
        %v1293 = vsub.f32 %v603, %v1292
        %v1294 = vand.u32 %v1293, 4294901760
        %v1295 = vsub.f32 %v1293, %v1294
        %v1296 = vand.u32 %v1295, 4294901760
        %1297 = vmatpush1.msra.mxu0 %v1296
        %v1298 = vand.u32 %v606, 4294901760
        %v1299 = vsub.f32 %v606, %v1298
        %v1300 = vand.u32 %v1299, 4294901760
        %v1301 = vsub.f32 %v1299, %v1300
        %v1302 = vand.u32 %v1301, 4294901760
        %1303 = vmatprep.subr.mxu0 %v1302
        %v1304 = vand.u32 %v605, 4294901760
        %v1305 = vsub.f32 %v605, %v1304
        %v1306 = vand.u32 %v1305, 4294901760
        %v1307 = vsub.f32 %v1305, %v1306
        %v1308 = vand.u32 %v1307, 4294901760
        %1309 = vmatpush1.msra.mxu0 %v1308
        %v1310 = vand.u32 %v608, 4294901760
        %v1311 = vsub.f32 %v608, %v1310
        %v1312 = vand.u32 %v1311, 4294901760
        %v1313 = vsub.f32 %v1311, %v1312
        %v1314 = vand.u32 %v1313, 4294901760
        %1315 = vmatprep.subr.mxu0 %v1314
        %v1316 = vand.u32 %v607, 4294901760
        %v1317 = vsub.f32 %v607, %v1316
        %v1318 = vand.u32 %v1317, 4294901760
        %v1319 = vsub.f32 %v1317, %v1318
        %v1320 = vand.u32 %v1319, 4294901760
        %1321 = vmatpush1.msra.mxu0 %v1320
        %v1322 = vand.u32 %v610, 4294901760
        %v1323 = vsub.f32 %v610, %v1322
        %v1324 = vand.u32 %v1323, 4294901760
        %v1325 = vsub.f32 %v1323, %v1324
        %v1326 = vand.u32 %v1325, 4294901760
        %1327 = vmatprep.subr.mxu0 %v1326
        %v1328 = vand.u32 %v609, 4294901760
        %v1329 = vsub.f32 %v609, %v1328
        %v1330 = vand.u32 %v1329, 4294901760
        %v1331 = vsub.f32 %v1329, %v1330
        %v1332 = vand.u32 %v1331, 4294901760
        %1333 = vmatpush1.msra.mxu0 %v1332
        %v1334 = vand.u32 %v612, 4294901760
        %v1335 = vsub.f32 %v612, %v1334
        %v1336 = vand.u32 %v1335, 4294901760
        %v1337 = vsub.f32 %v1335, %v1336
        %v1338 = vand.u32 %v1337, 4294901760
        %1339 = vmatprep.subr.mxu0 %v1338
        %v1340 = vand.u32 %v611, 4294901760
        %v1341 = vsub.f32 %v611, %v1340
        %v1342 = vand.u32 %v1341, 4294901760
        %v1343 = vsub.f32 %v1341, %v1342
        %v1344 = vand.u32 %v1343, 4294901760
        %1345 = vmatpush1.msra.mxu0 %v1344
        %v1346 = vand.u32 %v614, 4294901760
        %v1347 = vsub.f32 %v614, %v1346
        %v1348 = vand.u32 %v1347, 4294901760
        %v1349 = vsub.f32 %v1347, %v1348
        %v1350 = vand.u32 %v1349, 4294901760
        %1351 = vmatprep.subr.mxu0 %v1350
        %v1352 = vand.u32 %v613, 4294901760
        %v1353 = vsub.f32 %v613, %v1352
        %v1354 = vand.u32 %v1353, 4294901760
        %v1355 = vsub.f32 %v1353, %v1354
        %v1356 = vand.u32 %v1355, 4294901760
        %1357 = vmatpush1.msra.mxu0 %v1356
        %v1358 = vand.u32 %v616, 4294901760
        %v1359 = vsub.f32 %v616, %v1358
        %v1360 = vand.u32 %v1359, 4294901760
        %v1361 = vsub.f32 %v1359, %v1360
        %v1362 = vand.u32 %v1361, 4294901760
        %1363 = vmatprep.subr.mxu0 %v1362
        %v1364 = vand.u32 %v615, 4294901760
        %v1365 = vsub.f32 %v615, %v1364
        %v1366 = vand.u32 %v1365, 4294901760
        %v1367 = vsub.f32 %v1365, %v1366
        %v1368 = vand.u32 %v1367, 4294901760
        %1369 = vmatpush1.msra.mxu0 %v1368
        %v1370 = vand.u32 %v618, 4294901760
        %v1371 = vsub.f32 %v618, %v1370
        %v1372 = vand.u32 %v1371, 4294901760
        %v1373 = vsub.f32 %v1371, %v1372
        %v1374 = vand.u32 %v1373, 4294901760
        %1375 = vmatprep.subr.mxu0 %v1374
        %v1376 = vand.u32 %v617, 4294901760
        %v1377 = vsub.f32 %v617, %v1376
        %v1378 = vand.u32 %v1377, 4294901760
        %v1379 = vsub.f32 %v1377, %v1378
        %v1380 = vand.u32 %v1379, 4294901760
        %1381 = vmatpush1.msra.mxu0 %v1380
        %v1382 = vand.u32 %v620, 4294901760
        %v1383 = vsub.f32 %v620, %v1382
        %v1384 = vand.u32 %v1383, 4294901760
        %v1385 = vsub.f32 %v1383, %v1384
        %v1386 = vand.u32 %v1385, 4294901760
        %1387 = vmatprep.subr.mxu0 %v1386
        %v1388 = vand.u32 %v619, 4294901760
        %v1389 = vsub.f32 %v619, %v1388
        %v1390 = vand.u32 %v1389, 4294901760
        %v1391 = vsub.f32 %v1389, %v1390
        %v1392 = vand.u32 %v1391, 4294901760
        %1393 = vmatpush1.msra.mxu0 %v1392
        %v1394 = vand.u32 %v622, 4294901760
        %v1395 = vsub.f32 %v622, %v1394
        %v1396 = vand.u32 %v1395, 4294901760
        %v1397 = vsub.f32 %v1395, %v1396
        %v1398 = vand.u32 %v1397, 4294901760
        %1399 = vmatprep.subr.mxu0 %v1398
        %v1400 = vand.u32 %v621, 4294901760
        %v1401 = vsub.f32 %v621, %v1400
        %v1402 = vand.u32 %v1401, 4294901760
        %v1403 = vsub.f32 %v1401, %v1402
        %v1404 = vand.u32 %v1403, 4294901760
        %1405 = vmatpush1.msra.mxu0 %v1404
        %v1406 = vand.u32 %v624, 4294901760
        %v1407 = vsub.f32 %v624, %v1406
        %v1408 = vand.u32 %v1407, 4294901760
        %v1409 = vsub.f32 %v1407, %v1408
        %v1410 = vand.u32 %v1409, 4294901760
        %1411 = vmatprep.subr.mxu0 %v1410
        %v1412 = vand.u32 %v623, 4294901760
        %v1413 = vsub.f32 %v623, %v1412
        %v1414 = vand.u32 %v1413, 4294901760
        %v1415 = vsub.f32 %v1413, %v1414
        %v1416 = vand.u32 %v1415, 4294901760
        %1417 = vmatpush1.msra.mxu0 %v1416
        %v1418 = vand.u32 %v626, 4294901760
        %v1419 = vsub.f32 %v626, %v1418
        %v1420 = vand.u32 %v1419, 4294901760
        %v1421 = vsub.f32 %v1419, %v1420
        %v1422 = vand.u32 %v1421, 4294901760
        %1423 = vmatprep.subr.mxu0 %v1422
        %v1424 = vand.u32 %v625, 4294901760
        %v1425 = vsub.f32 %v625, %v1424
        %v1426 = vand.u32 %v1425, 4294901760
        %v1427 = vsub.f32 %v1425, %v1426
        %v1428 = vand.u32 %v1427, 4294901760
        %1429 = vmatpush1.msra.mxu0 %v1428
        %v1430 = vand.u32 %v628, 4294901760
        %v1431 = vsub.f32 %v628, %v1430
        %v1432 = vand.u32 %v1431, 4294901760
        %v1433 = vsub.f32 %v1431, %v1432
        %v1434 = vand.u32 %v1433, 4294901760
        %1435 = vmatprep.subr.mxu0 %v1434
        %v1436 = vand.u32 %v627, 4294901760
        %v1437 = vsub.f32 %v627, %v1436
        %v1438 = vand.u32 %v1437, 4294901760
        %v1439 = vsub.f32 %v1437, %v1438
        %v1440 = vand.u32 %v1439, 4294901760
        %1441 = vmatpush1.msra.mxu0 %v1440
        %v1442 = vand.u32 %v630, 4294901760
        %v1443 = vsub.f32 %v630, %v1442
        %v1444 = vand.u32 %v1443, 4294901760
        %v1445 = vsub.f32 %v1443, %v1444
        %v1446 = vand.u32 %v1445, 4294901760
        %1447 = vmatprep.subr.mxu0 %v1446
        %v1448 = vand.u32 %v629, 4294901760
        %v1449 = vsub.f32 %v629, %v1448
        %v1450 = vand.u32 %v1449, 4294901760
        %v1451 = vsub.f32 %v1449, %v1450
        %v1452 = vand.u32 %v1451, 4294901760
        %1453 = vmatpush1.msra.mxu0 %v1452
        %v1454 = vand.u32 %v632, 4294901760
        %v1455 = vsub.f32 %v632, %v1454
        %v1456 = vand.u32 %v1455, 4294901760
        %v1457 = vsub.f32 %v1455, %v1456
        %v1458 = vand.u32 %v1457, 4294901760
        %1459 = vmatprep.subr.mxu0 %v1458
        %v1460 = vand.u32 %v631, 4294901760
        %v1461 = vsub.f32 %v631, %v1460
        %v1462 = vand.u32 %v1461, 4294901760
        %v1463 = vsub.f32 %v1461, %v1462
        %v1464 = vand.u32 %v1463, 4294901760
        %1465 = vmatpush1.msra.mxu0 %v1464
        %v1466 = vand.u32 %v506, 4294901760
        %1467 = vmatprep.mubr.f32.mxu0 %v1466
        %v1468 = vand.u32 %v505, 4294901760
        %1469 = vmatmul.mubr.f32.gmra.mrb[0].mxu0 %v1468
        %v1470 = vpop.f32.mrb[0].mxu0
        %v1471 = vadd.f32 %v838, %v1470
        %v1472 = vpop.f32.mrb[0].mxu0
        %v1473 = vadd.f32 %v840, %v1472
        %v1474 = vand.u32 %v510, 4294901760
        %1475 = vmatprep.mubr.f32.mxu0 %v1474
        %v1476 = vand.u32 %v509, 4294901760
        %1477 = vmatmul.mubr.f32.gmra.mrb[0].mxu0 %v1476
        %v1478 = vpop.f32.mrb[0].mxu0
        %v1479 = vadd.f32 %v854, %v1478
        %v1480 = vpop.f32.mrb[0].mxu0
        %v1481 = vadd.f32 %v856, %v1480
        %v1482 = vand.u32 %v514, 4294901760
        %1483 = vmatprep.mubr.f32.mxu0 %v1482
        %v1484 = vand.u32 %v513, 4294901760
        %1485 = vmatmul.mubr.f32.gmra.mrb[0].mxu0 %v1484
        %v1486 = vpop.f32.mrb[0].mxu0
        %v1487 = vadd.f32 %v870, %v1486
        %v1488 = vpop.f32.mrb[0].mxu0
        %v1489 = vadd.f32 %v872, %v1488
        %v1490 = vand.u32 %v518, 4294901760
        %1491 = vmatprep.mubr.f32.mxu0 %v1490
        %v1492 = vand.u32 %v517, 4294901760
        %1493 = vmatmul.mubr.f32.gmra.mrb[0].mxu0 %v1492
        %v1494 = vpop.f32.mrb[0].mxu0
        %v1495 = vadd.f32 %v886, %v1494
        %v1496 = vpop.f32.mrb[0].mxu0
        %v1497 = vadd.f32 %v888, %v1496
        %v1498 = vand.u32 %v522, 4294901760
        %1499 = vmatprep.mubr.f32.mxu0 %v1498
        %v1500 = vand.u32 %v521, 4294901760
        %1501 = vmatmul.mubr.f32.gmra.mrb[0].mxu0 %v1500
        %v1502 = vpop.f32.mrb[0].mxu0
        %v1503 = vadd.f32 %v902, %v1502
        %v1504 = vpop.f32.mrb[0].mxu0
        %v1505 = vadd.f32 %v904, %v1504
        %v1506 = vand.u32 %v526, 4294901760
        %1507 = vmatprep.mubr.f32.mxu0 %v1506
        %v1508 = vand.u32 %v525, 4294901760
        %1509 = vmatmul.mubr.f32.gmra.mrb[0].mxu0 %v1508
        %v1510 = vpop.f32.mrb[0].mxu0
        %v1511 = vadd.f32 %v918, %v1510
        %v1512 = vpop.f32.mrb[0].mxu0
        %v1513 = vadd.f32 %v920, %v1512
        %v1514 = vand.u32 %v530, 4294901760
        %1515 = vmatprep.mubr.f32.mxu0 %v1514
        %v1516 = vand.u32 %v529, 4294901760
        %1517 = vmatmul.mubr.f32.gmra.mrb[0].mxu0 %v1516
        %v1518 = vpop.f32.mrb[0].mxu0
        %v1519 = vadd.f32 %v934, %v1518
        %v1520 = vpop.f32.mrb[0].mxu0
        %v1521 = vadd.f32 %v936, %v1520
        %v1522 = vand.u32 %v534, 4294901760
        %1523 = vmatprep.mubr.f32.mxu0 %v1522
        %v1524 = vand.u32 %v533, 4294901760
        %1525 = vmatmul.mubr.f32.gmra.mrb[0].mxu0 %v1524
        %v1526 = vpop.f32.mrb[0].mxu0
        %v1527 = vadd.f32 %v950, %v1526
        %v1528 = vpop.f32.mrb[0].mxu0
        %v1529 = vadd.f32 %v952, %v1528
        %v1530 = vand.u32 %v538, 4294901760
        %1531 = vmatprep.mubr.f32.mxu0 %v1530
        %v1532 = vand.u32 %v537, 4294901760
        %1533 = vmatmul.mubr.f32.gmra.mrb[0].mxu0 %v1532
        %v1534 = vpop.f32.mrb[0].mxu0
        %v1535 = vadd.f32 %v966, %v1534
        %v1536 = vpop.f32.mrb[0].mxu0
        %v1537 = vadd.f32 %v968, %v1536
        %v1538 = vand.u32 %v542, 4294901760
        %1539 = vmatprep.mubr.f32.mxu0 %v1538
        %v1540 = vand.u32 %v541, 4294901760
        %1541 = vmatmul.mubr.f32.gmra.mrb[0].mxu0 %v1540
        %v1542 = vpop.f32.mrb[0].mxu0
        %v1543 = vadd.f32 %v982, %v1542
        %v1544 = vpop.f32.mrb[0].mxu0
        %v1545 = vadd.f32 %v984, %v1544
        %v1546 = vand.u32 %v546, 4294901760
        %1547 = vmatprep.mubr.f32.mxu0 %v1546
        %v1548 = vand.u32 %v545, 4294901760
        %1549 = vmatmul.mubr.f32.gmra.mrb[0].mxu0 %v1548
        %v1550 = vpop.f32.mrb[0].mxu0
        %v1551 = vadd.f32 %v998, %v1550
        %v1552 = vpop.f32.mrb[0].mxu0
        %v1553 = vadd.f32 %v1000, %v1552
        %v1554 = vand.u32 %v550, 4294901760
        %1555 = vmatprep.mubr.f32.mxu0 %v1554
        %v1556 = vand.u32 %v549, 4294901760
        %1557 = vmatmul.mubr.f32.gmra.mrb[0].mxu0 %v1556
        %v1558 = vpop.f32.mrb[0].mxu0
        %v1559 = vadd.f32 %v1014, %v1558
        %v1560 = vpop.f32.mrb[0].mxu0
        %v1561 = vadd.f32 %v1016, %v1560
        %v1562 = vand.u32 %v554, 4294901760
        %1563 = vmatprep.mubr.f32.mxu0 %v1562
        %v1564 = vand.u32 %v553, 4294901760
        %1565 = vmatmul.mubr.f32.gmra.mrb[0].mxu0 %v1564
        %v1566 = vpop.f32.mrb[0].mxu0
        %v1567 = vadd.f32 %v1030, %v1566
        %v1568 = vpop.f32.mrb[0].mxu0
        %v1569 = vadd.f32 %v1032, %v1568
        %v1570 = vand.u32 %v558, 4294901760
        %1571 = vmatprep.mubr.f32.mxu0 %v1570
        %v1572 = vand.u32 %v557, 4294901760
        %1573 = vmatmul.mubr.f32.gmra.mrb[0].mxu0 %v1572
        %v1574 = vpop.f32.mrb[0].mxu0
        %v1575 = vadd.f32 %v1046, %v1574
        %v1576 = vpop.f32.mrb[0].mxu0
        %v1577 = vadd.f32 %v1048, %v1576
        %v1578 = vand.u32 %v562, 4294901760
        %1579 = vmatprep.mubr.f32.mxu0 %v1578
        %v1580 = vand.u32 %v561, 4294901760
        %1581 = vmatmul.mubr.f32.gmra.mrb[0].mxu0 %v1580
        %v1582 = vpop.f32.mrb[0].mxu0
        %v1583 = vadd.f32 %v1062, %v1582
        %v1584 = vpop.f32.mrb[0].mxu0
        %v1585 = vadd.f32 %v1064, %v1584
        %v1586 = vand.u32 %v566, 4294901760
        %1587 = vmatprep.mubr.f32.mxu0 %v1586
        %v1588 = vand.u32 %v565, 4294901760
        %1589 = vmatmul.mubr.f32.gmra.mrb[0].mxu0 %v1588
        %v1590 = vpop.f32.mrb[0].mxu0
        %v1591 = vadd.f32 %v1078, %v1590
        %v1592 = vpop.f32.mrb[0].mxu0
        %v1593 = vadd.f32 %v1080, %v1592
        %1594 = vdwg.mxu0
        %v1595 = vand.u32 %v570, 4294901760
        %v1596 = vsub.f32 %v570, %v1595
        %1597 = vmatprep.subr.mxu0 %v1596
        %v1598 = vand.u32 %v569, 4294901760
        %v1599 = vsub.f32 %v569, %v1598
        %1600 = vmatpush1.msra.mxu0 %v1599
        %v1601 = vand.u32 %v572, 4294901760
        %v1602 = vsub.f32 %v572, %v1601
        %1603 = vmatprep.subr.mxu0 %v1602
        %v1604 = vand.u32 %v571, 4294901760
        %v1605 = vsub.f32 %v571, %v1604
        %1606 = vmatpush1.msra.mxu0 %v1605
        %v1607 = vand.u32 %v574, 4294901760
        %v1608 = vsub.f32 %v574, %v1607
        %1609 = vmatprep.subr.mxu0 %v1608
        %v1610 = vand.u32 %v573, 4294901760
        %v1611 = vsub.f32 %v573, %v1610
        %1612 = vmatpush1.msra.mxu0 %v1611
        %v1613 = vand.u32 %v576, 4294901760
        %v1614 = vsub.f32 %v576, %v1613
        %1615 = vmatprep.subr.mxu0 %v1614
        %v1616 = vand.u32 %v575, 4294901760
        %v1617 = vsub.f32 %v575, %v1616
        %1618 = vmatpush1.msra.mxu0 %v1617
        %v1619 = vand.u32 %v578, 4294901760
        %v1620 = vsub.f32 %v578, %v1619
        %1621 = vmatprep.subr.mxu0 %v1620
        %v1622 = vand.u32 %v577, 4294901760
        %v1623 = vsub.f32 %v577, %v1622
        %1624 = vmatpush1.msra.mxu0 %v1623
        %v1625 = vand.u32 %v580, 4294901760
        %v1626 = vsub.f32 %v580, %v1625
        %1627 = vmatprep.subr.mxu0 %v1626
        %v1628 = vand.u32 %v579, 4294901760
        %v1629 = vsub.f32 %v579, %v1628
        %1630 = vmatpush1.msra.mxu0 %v1629
        %v1631 = vand.u32 %v582, 4294901760
        %v1632 = vsub.f32 %v582, %v1631
        %1633 = vmatprep.subr.mxu0 %v1632
        %v1634 = vand.u32 %v581, 4294901760
        %v1635 = vsub.f32 %v581, %v1634
        %1636 = vmatpush1.msra.mxu0 %v1635
        %v1637 = vand.u32 %v584, 4294901760
        %v1638 = vsub.f32 %v584, %v1637
        %1639 = vmatprep.subr.mxu0 %v1638
        %v1640 = vand.u32 %v583, 4294901760
        %v1641 = vsub.f32 %v583, %v1640
        %1642 = vmatpush1.msra.mxu0 %v1641
        %v1643 = vand.u32 %v586, 4294901760
        %v1644 = vsub.f32 %v586, %v1643
        %1645 = vmatprep.subr.mxu0 %v1644
        %v1646 = vand.u32 %v585, 4294901760
        %v1647 = vsub.f32 %v585, %v1646
        %1648 = vmatpush1.msra.mxu0 %v1647
        %v1649 = vand.u32 %v588, 4294901760
        %v1650 = vsub.f32 %v588, %v1649
        %1651 = vmatprep.subr.mxu0 %v1650
        %v1652 = vand.u32 %v587, 4294901760
        %v1653 = vsub.f32 %v587, %v1652
        %1654 = vmatpush1.msra.mxu0 %v1653
        %v1655 = vand.u32 %v590, 4294901760
        %v1656 = vsub.f32 %v590, %v1655
        %1657 = vmatprep.subr.mxu0 %v1656
        %v1658 = vand.u32 %v589, 4294901760
        %v1659 = vsub.f32 %v589, %v1658
        %1660 = vmatpush1.msra.mxu0 %v1659
        %v1661 = vand.u32 %v592, 4294901760
        %v1662 = vsub.f32 %v592, %v1661
        %1663 = vmatprep.subr.mxu0 %v1662
        %v1664 = vand.u32 %v591, 4294901760
        %v1665 = vsub.f32 %v591, %v1664
        %1666 = vmatpush1.msra.mxu0 %v1665
        %v1667 = vand.u32 %v594, 4294901760
        %v1668 = vsub.f32 %v594, %v1667
        %1669 = vmatprep.subr.mxu0 %v1668
        %v1670 = vand.u32 %v593, 4294901760
        %v1671 = vsub.f32 %v593, %v1670
        %1672 = vmatpush1.msra.mxu0 %v1671
        %v1673 = vand.u32 %v596, 4294901760
        %v1674 = vsub.f32 %v596, %v1673
        %1675 = vmatprep.subr.mxu0 %v1674
        %v1676 = vand.u32 %v595, 4294901760
        %v1677 = vsub.f32 %v595, %v1676
        %1678 = vmatpush1.msra.mxu0 %v1677
        %v1679 = vand.u32 %v598, 4294901760
        %v1680 = vsub.f32 %v598, %v1679
        %1681 = vmatprep.subr.mxu0 %v1680
        %v1682 = vand.u32 %v597, 4294901760
        %v1683 = vsub.f32 %v597, %v1682
        %1684 = vmatpush1.msra.mxu0 %v1683
        %v1685 = vand.u32 %v600, 4294901760
        %v1686 = vsub.f32 %v600, %v1685
        %1687 = vmatprep.subr.mxu0 %v1686
        %v1688 = vand.u32 %v599, 4294901760
        %v1689 = vsub.f32 %v599, %v1688
        %1690 = vmatpush1.msra.mxu0 %v1689
        %v1691 = vand.u32 %v602, 4294901760
        %v1692 = vsub.f32 %v602, %v1691
        %1693 = vmatprep.subr.mxu0 %v1692
        %v1694 = vand.u32 %v601, 4294901760
        %v1695 = vsub.f32 %v601, %v1694
        %1696 = vmatpush1.msra.mxu0 %v1695
        %v1697 = vand.u32 %v604, 4294901760
        %v1698 = vsub.f32 %v604, %v1697
        %1699 = vmatprep.subr.mxu0 %v1698
        %v1700 = vand.u32 %v603, 4294901760
        %v1701 = vsub.f32 %v603, %v1700
        %1702 = vmatpush1.msra.mxu0 %v1701
        %v1703 = vand.u32 %v606, 4294901760
        %v1704 = vsub.f32 %v606, %v1703
        %1705 = vmatprep.subr.mxu0 %v1704
        %v1706 = vand.u32 %v605, 4294901760
        %v1707 = vsub.f32 %v605, %v1706
        %1708 = vmatpush1.msra.mxu0 %v1707
        %v1709 = vand.u32 %v608, 4294901760
        %v1710 = vsub.f32 %v608, %v1709
        %1711 = vmatprep.subr.mxu0 %v1710
        %v1712 = vand.u32 %v607, 4294901760
        %v1713 = vsub.f32 %v607, %v1712
        %1714 = vmatpush1.msra.mxu0 %v1713
        %v1715 = vand.u32 %v610, 4294901760
        %v1716 = vsub.f32 %v610, %v1715
        %1717 = vmatprep.subr.mxu0 %v1716
        %v1718 = vand.u32 %v609, 4294901760
        %v1719 = vsub.f32 %v609, %v1718
        %1720 = vmatpush1.msra.mxu0 %v1719
        %v1721 = vand.u32 %v612, 4294901760
        %v1722 = vsub.f32 %v612, %v1721
        %1723 = vmatprep.subr.mxu0 %v1722
        %v1724 = vand.u32 %v611, 4294901760
        %v1725 = vsub.f32 %v611, %v1724
        %1726 = vmatpush1.msra.mxu0 %v1725
        %v1727 = vand.u32 %v614, 4294901760
        %v1728 = vsub.f32 %v614, %v1727
        %1729 = vmatprep.subr.mxu0 %v1728
        %v1730 = vand.u32 %v613, 4294901760
        %v1731 = vsub.f32 %v613, %v1730
        %1732 = vmatpush1.msra.mxu0 %v1731
        %v1733 = vand.u32 %v616, 4294901760
        %v1734 = vsub.f32 %v616, %v1733
        %1735 = vmatprep.subr.mxu0 %v1734
        %v1736 = vand.u32 %v615, 4294901760
        %v1737 = vsub.f32 %v615, %v1736
        %1738 = vmatpush1.msra.mxu0 %v1737
        %v1739 = vand.u32 %v618, 4294901760
        %v1740 = vsub.f32 %v618, %v1739
        %1741 = vmatprep.subr.mxu0 %v1740
        %v1742 = vand.u32 %v617, 4294901760
        %v1743 = vsub.f32 %v617, %v1742
        %1744 = vmatpush1.msra.mxu0 %v1743
        %v1745 = vand.u32 %v620, 4294901760
        %v1746 = vsub.f32 %v620, %v1745
        %1747 = vmatprep.subr.mxu0 %v1746
        %v1748 = vand.u32 %v619, 4294901760
        %v1749 = vsub.f32 %v619, %v1748
        %1750 = vmatpush1.msra.mxu0 %v1749
        %v1751 = vand.u32 %v622, 4294901760
        %v1752 = vsub.f32 %v622, %v1751
        %1753 = vmatprep.subr.mxu0 %v1752
        %v1754 = vand.u32 %v621, 4294901760
        %v1755 = vsub.f32 %v621, %v1754
        %1756 = vmatpush1.msra.mxu0 %v1755
        %v1757 = vand.u32 %v624, 4294901760
        %v1758 = vsub.f32 %v624, %v1757
        %1759 = vmatprep.subr.mxu0 %v1758
        %v1760 = vand.u32 %v623, 4294901760
        %v1761 = vsub.f32 %v623, %v1760
        %1762 = vmatpush1.msra.mxu0 %v1761
        %v1763 = vand.u32 %v626, 4294901760
        %v1764 = vsub.f32 %v626, %v1763
        %1765 = vmatprep.subr.mxu0 %v1764
        %v1766 = vand.u32 %v625, 4294901760
        %v1767 = vsub.f32 %v625, %v1766
        %1768 = vmatpush1.msra.mxu0 %v1767
        %v1769 = vand.u32 %v628, 4294901760
        %v1770 = vsub.f32 %v628, %v1769
        %1771 = vmatprep.subr.mxu0 %v1770
        %v1772 = vand.u32 %v627, 4294901760
        %v1773 = vsub.f32 %v627, %v1772
        %1774 = vmatpush1.msra.mxu0 %v1773
        %v1775 = vand.u32 %v630, 4294901760
        %v1776 = vsub.f32 %v630, %v1775
        %1777 = vmatprep.subr.mxu0 %v1776
        %v1778 = vand.u32 %v629, 4294901760
        %v1779 = vsub.f32 %v629, %v1778
        %1780 = vmatpush1.msra.mxu0 %v1779
        %v1781 = vand.u32 %v632, 4294901760
        %v1782 = vsub.f32 %v632, %v1781
        %1783 = vmatprep.subr.mxu0 %v1782
        %v1784 = vand.u32 %v631, 4294901760
        %v1785 = vsub.f32 %v631, %v1784
        %1786 = vmatpush1.msra.mxu0 %v1785
        %v1787 = vand.u32 %v506, 4294901760
        %v1788 = vsub.f32 %v506, %v1787
        %1789 = vmatprep.mubr.f32.mxu0 %v1788
        %v1790 = vand.u32 %v505, 4294901760
        %v1791 = vsub.f32 %v505, %v1790
        %1792 = vmatmul.mubr.f32.gmra.mrb[0].mxu0 %v1791
        %v1793 = vpop.f32.mrb[0].mxu0
        %v1794 = vadd.f32 %v1471, %v1793
        %v1795 = vpop.f32.mrb[0].mxu0
        %v1796 = vadd.f32 %v1473, %v1795
        %v1797 = vand.u32 %v510, 4294901760
        %v1798 = vsub.f32 %v510, %v1797
        %1799 = vmatprep.mubr.f32.mxu0 %v1798
        %v1800 = vand.u32 %v509, 4294901760
        %v1801 = vsub.f32 %v509, %v1800
        %1802 = vmatmul.mubr.f32.gmra.mrb[0].mxu0 %v1801
        %v1803 = vpop.f32.mrb[0].mxu0
        %v1804 = vadd.f32 %v1479, %v1803
        %v1805 = vpop.f32.mrb[0].mxu0
        %v1806 = vadd.f32 %v1481, %v1805
        %v1807 = vand.u32 %v514, 4294901760
        %v1808 = vsub.f32 %v514, %v1807
        %1809 = vmatprep.mubr.f32.mxu0 %v1808
        %v1810 = vand.u32 %v513, 4294901760
        %v1811 = vsub.f32 %v513, %v1810
        %1812 = vmatmul.mubr.f32.gmra.mrb[0].mxu0 %v1811
        %v1813 = vpop.f32.mrb[0].mxu0
        %v1814 = vadd.f32 %v1487, %v1813
        %v1815 = vpop.f32.mrb[0].mxu0
        %v1816 = vadd.f32 %v1489, %v1815
        %v1817 = vand.u32 %v518, 4294901760
        %v1818 = vsub.f32 %v518, %v1817
        %1819 = vmatprep.mubr.f32.mxu0 %v1818
        %v1820 = vand.u32 %v517, 4294901760
        %v1821 = vsub.f32 %v517, %v1820
        %1822 = vmatmul.mubr.f32.gmra.mrb[0].mxu0 %v1821
        %v1823 = vpop.f32.mrb[0].mxu0
        %v1824 = vadd.f32 %v1495, %v1823
        %v1825 = vpop.f32.mrb[0].mxu0
        %v1826 = vadd.f32 %v1497, %v1825
        %v1827 = vand.u32 %v522, 4294901760
        %v1828 = vsub.f32 %v522, %v1827
        %1829 = vmatprep.mubr.f32.mxu0 %v1828
        %v1830 = vand.u32 %v521, 4294901760
        %v1831 = vsub.f32 %v521, %v1830
        %1832 = vmatmul.mubr.f32.gmra.mrb[0].mxu0 %v1831
        %v1833 = vpop.f32.mrb[0].mxu0
        %v1834 = vadd.f32 %v1503, %v1833
        %v1835 = vpop.f32.mrb[0].mxu0
        %v1836 = vadd.f32 %v1505, %v1835
        %v1837 = vand.u32 %v526, 4294901760
        %v1838 = vsub.f32 %v526, %v1837
        %1839 = vmatprep.mubr.f32.mxu0 %v1838
        %v1840 = vand.u32 %v525, 4294901760
        %v1841 = vsub.f32 %v525, %v1840
        %1842 = vmatmul.mubr.f32.gmra.mrb[0].mxu0 %v1841
        %v1843 = vpop.f32.mrb[0].mxu0
        %v1844 = vadd.f32 %v1511, %v1843
        %v1845 = vpop.f32.mrb[0].mxu0
        %v1846 = vadd.f32 %v1513, %v1845
        %v1847 = vand.u32 %v530, 4294901760
        %v1848 = vsub.f32 %v530, %v1847
        %1849 = vmatprep.mubr.f32.mxu0 %v1848
        %v1850 = vand.u32 %v529, 4294901760
        %v1851 = vsub.f32 %v529, %v1850
        %1852 = vmatmul.mubr.f32.gmra.mrb[0].mxu0 %v1851
        %v1853 = vpop.f32.mrb[0].mxu0
        %v1854 = vadd.f32 %v1519, %v1853
        %v1855 = vpop.f32.mrb[0].mxu0
        %v1856 = vadd.f32 %v1521, %v1855
        %v1857 = vand.u32 %v534, 4294901760
        %v1858 = vsub.f32 %v534, %v1857
        %1859 = vmatprep.mubr.f32.mxu0 %v1858
        %v1860 = vand.u32 %v533, 4294901760
        %v1861 = vsub.f32 %v533, %v1860
        %1862 = vmatmul.mubr.f32.gmra.mrb[0].mxu0 %v1861
        %v1863 = vpop.f32.mrb[0].mxu0
        %v1864 = vadd.f32 %v1527, %v1863
        %v1865 = vpop.f32.mrb[0].mxu0
        %v1866 = vadd.f32 %v1529, %v1865
        %v1867 = vand.u32 %v538, 4294901760
        %v1868 = vsub.f32 %v538, %v1867
        %1869 = vmatprep.mubr.f32.mxu0 %v1868
        %v1870 = vand.u32 %v537, 4294901760
        %v1871 = vsub.f32 %v537, %v1870
        %1872 = vmatmul.mubr.f32.gmra.mrb[0].mxu0 %v1871
        %v1873 = vpop.f32.mrb[0].mxu0
        %v1874 = vadd.f32 %v1535, %v1873
        %v1875 = vpop.f32.mrb[0].mxu0
        %v1876 = vadd.f32 %v1537, %v1875
        %v1877 = vand.u32 %v542, 4294901760
        %v1878 = vsub.f32 %v542, %v1877
        %1879 = vmatprep.mubr.f32.mxu0 %v1878
        %v1880 = vand.u32 %v541, 4294901760
        %v1881 = vsub.f32 %v541, %v1880
        %1882 = vmatmul.mubr.f32.gmra.mrb[0].mxu0 %v1881
        %v1883 = vpop.f32.mrb[0].mxu0
        %v1884 = vadd.f32 %v1543, %v1883
        %v1885 = vpop.f32.mrb[0].mxu0
        %v1886 = vadd.f32 %v1545, %v1885
        %v1887 = vand.u32 %v546, 4294901760
        %v1888 = vsub.f32 %v546, %v1887
        %1889 = vmatprep.mubr.f32.mxu0 %v1888
        %v1890 = vand.u32 %v545, 4294901760
        %v1891 = vsub.f32 %v545, %v1890
        %1892 = vmatmul.mubr.f32.gmra.mrb[0].mxu0 %v1891
        %v1893 = vpop.f32.mrb[0].mxu0
        %v1894 = vadd.f32 %v1551, %v1893
        %v1895 = vpop.f32.mrb[0].mxu0
        %v1896 = vadd.f32 %v1553, %v1895
        %v1897 = vand.u32 %v550, 4294901760
        %v1898 = vsub.f32 %v550, %v1897
        %1899 = vmatprep.mubr.f32.mxu0 %v1898
        %v1900 = vand.u32 %v549, 4294901760
        %v1901 = vsub.f32 %v549, %v1900
        %1902 = vmatmul.mubr.f32.gmra.mrb[0].mxu0 %v1901
        %v1903 = vpop.f32.mrb[0].mxu0
        %v1904 = vadd.f32 %v1559, %v1903
        %v1905 = vpop.f32.mrb[0].mxu0
        %v1906 = vadd.f32 %v1561, %v1905
        %v1907 = vand.u32 %v554, 4294901760
        %v1908 = vsub.f32 %v554, %v1907
        %1909 = vmatprep.mubr.f32.mxu0 %v1908
        %v1910 = vand.u32 %v553, 4294901760
        %v1911 = vsub.f32 %v553, %v1910
        %1912 = vmatmul.mubr.f32.gmra.mrb[0].mxu0 %v1911
        %v1913 = vpop.f32.mrb[0].mxu0
        %v1914 = vadd.f32 %v1567, %v1913
        %v1915 = vpop.f32.mrb[0].mxu0
        %v1916 = vadd.f32 %v1569, %v1915
        %v1917 = vand.u32 %v558, 4294901760
        %v1918 = vsub.f32 %v558, %v1917
        %1919 = vmatprep.mubr.f32.mxu0 %v1918
        %v1920 = vand.u32 %v557, 4294901760
        %v1921 = vsub.f32 %v557, %v1920
        %1922 = vmatmul.mubr.f32.gmra.mrb[0].mxu0 %v1921
        %v1923 = vpop.f32.mrb[0].mxu0
        %v1924 = vadd.f32 %v1575, %v1923
        %v1925 = vpop.f32.mrb[0].mxu0
        %v1926 = vadd.f32 %v1577, %v1925
        %v1927 = vand.u32 %v562, 4294901760
        %v1928 = vsub.f32 %v562, %v1927
        %1929 = vmatprep.mubr.f32.mxu0 %v1928
        %v1930 = vand.u32 %v561, 4294901760
        %v1931 = vsub.f32 %v561, %v1930
        %1932 = vmatmul.mubr.f32.gmra.mrb[0].mxu0 %v1931
        %v1933 = vpop.f32.mrb[0].mxu0
        %v1934 = vadd.f32 %v1583, %v1933
        %v1935 = vpop.f32.mrb[0].mxu0
        %v1936 = vadd.f32 %v1585, %v1935
        %v1937 = vand.u32 %v566, 4294901760
        %v1938 = vsub.f32 %v566, %v1937
        %1939 = vmatprep.mubr.f32.mxu0 %v1938
        %v1940 = vand.u32 %v565, 4294901760
        %v1941 = vsub.f32 %v565, %v1940
        %1942 = vmatmul.mubr.f32.gmra.mrb[0].mxu0 %v1941
        %v1943 = vpop.f32.mrb[0].mxu0
        %v1944 = vadd.f32 %v1591, %v1943
        %v1945 = vpop.f32.mrb[0].mxu0
        %v1946 = vadd.f32 %v1593, %v1945
        %1947 = vdwg.mxu0
        %v1948 = vand.u32 %v570, 4294901760
        %1949 = vmatprep.subr.mxu0 %v1948
        %v1950 = vand.u32 %v569, 4294901760
        %1951 = vmatpush1.msra.mxu0 %v1950
        %v1952 = vand.u32 %v572, 4294901760
        %1953 = vmatprep.subr.mxu0 %v1952
        %v1954 = vand.u32 %v571, 4294901760
        %1955 = vmatpush1.msra.mxu0 %v1954
        %v1956 = vand.u32 %v574, 4294901760
        %1957 = vmatprep.subr.mxu0 %v1956
        %v1958 = vand.u32 %v573, 4294901760
        %1959 = vmatpush1.msra.mxu0 %v1958
        %v1960 = vand.u32 %v576, 4294901760
        %1961 = vmatprep.subr.mxu0 %v1960
        %v1962 = vand.u32 %v575, 4294901760
        %1963 = vmatpush1.msra.mxu0 %v1962
        %v1964 = vand.u32 %v578, 4294901760
        %1965 = vmatprep.subr.mxu0 %v1964
        %v1966 = vand.u32 %v577, 4294901760
        %1967 = vmatpush1.msra.mxu0 %v1966
        %v1968 = vand.u32 %v580, 4294901760
        %1969 = vmatprep.subr.mxu0 %v1968
        %v1970 = vand.u32 %v579, 4294901760
        %1971 = vmatpush1.msra.mxu0 %v1970
        %v1972 = vand.u32 %v582, 4294901760
        %1973 = vmatprep.subr.mxu0 %v1972
        %v1974 = vand.u32 %v581, 4294901760
        %1975 = vmatpush1.msra.mxu0 %v1974
        %v1976 = vand.u32 %v584, 4294901760
        %1977 = vmatprep.subr.mxu0 %v1976
        %v1978 = vand.u32 %v583, 4294901760
        %1979 = vmatpush1.msra.mxu0 %v1978
        %v1980 = vand.u32 %v586, 4294901760
        %1981 = vmatprep.subr.mxu0 %v1980
        %v1982 = vand.u32 %v585, 4294901760
        %1983 = vmatpush1.msra.mxu0 %v1982
        %v1984 = vand.u32 %v588, 4294901760
        %1985 = vmatprep.subr.mxu0 %v1984
        %v1986 = vand.u32 %v587, 4294901760
        %1987 = vmatpush1.msra.mxu0 %v1986
        %v1988 = vand.u32 %v590, 4294901760
        %1989 = vmatprep.subr.mxu0 %v1988
        %v1990 = vand.u32 %v589, 4294901760
        %1991 = vmatpush1.msra.mxu0 %v1990
        %v1992 = vand.u32 %v592, 4294901760
        %1993 = vmatprep.subr.mxu0 %v1992
        %v1994 = vand.u32 %v591, 4294901760
        %1995 = vmatpush1.msra.mxu0 %v1994
        %v1996 = vand.u32 %v594, 4294901760
        %1997 = vmatprep.subr.mxu0 %v1996
        %v1998 = vand.u32 %v593, 4294901760
        %1999 = vmatpush1.msra.mxu0 %v1998
        %v2000 = vand.u32 %v596, 4294901760
        %2001 = vmatprep.subr.mxu0 %v2000
        %v2002 = vand.u32 %v595, 4294901760
        %2003 = vmatpush1.msra.mxu0 %v2002
        %v2004 = vand.u32 %v598, 4294901760
        %2005 = vmatprep.subr.mxu0 %v2004
        %v2006 = vand.u32 %v597, 4294901760
        %2007 = vmatpush1.msra.mxu0 %v2006
        %v2008 = vand.u32 %v600, 4294901760
        %2009 = vmatprep.subr.mxu0 %v2008
        %v2010 = vand.u32 %v599, 4294901760
        %2011 = vmatpush1.msra.mxu0 %v2010
        %v2012 = vand.u32 %v602, 4294901760
        %2013 = vmatprep.subr.mxu0 %v2012
        %v2014 = vand.u32 %v601, 4294901760
        %2015 = vmatpush1.msra.mxu0 %v2014
        %v2016 = vand.u32 %v604, 4294901760
        %2017 = vmatprep.subr.mxu0 %v2016
        %v2018 = vand.u32 %v603, 4294901760
        %2019 = vmatpush1.msra.mxu0 %v2018
        %v2020 = vand.u32 %v606, 4294901760
        %2021 = vmatprep.subr.mxu0 %v2020
        %v2022 = vand.u32 %v605, 4294901760
        %2023 = vmatpush1.msra.mxu0 %v2022
        %v2024 = vand.u32 %v608, 4294901760
        %2025 = vmatprep.subr.mxu0 %v2024
        %v2026 = vand.u32 %v607, 4294901760
        %2027 = vmatpush1.msra.mxu0 %v2026
        %v2028 = vand.u32 %v610, 4294901760
        %2029 = vmatprep.subr.mxu0 %v2028
        %v2030 = vand.u32 %v609, 4294901760
        %2031 = vmatpush1.msra.mxu0 %v2030
        %v2032 = vand.u32 %v612, 4294901760
        %2033 = vmatprep.subr.mxu0 %v2032
        %v2034 = vand.u32 %v611, 4294901760
        %2035 = vmatpush1.msra.mxu0 %v2034
        %v2036 = vand.u32 %v614, 4294901760
        %2037 = vmatprep.subr.mxu0 %v2036
        %v2038 = vand.u32 %v613, 4294901760
        %2039 = vmatpush1.msra.mxu0 %v2038
        %v2040 = vand.u32 %v616, 4294901760
        %2041 = vmatprep.subr.mxu0 %v2040
        %v2042 = vand.u32 %v615, 4294901760
        %2043 = vmatpush1.msra.mxu0 %v2042
        %v2044 = vand.u32 %v618, 4294901760
        %2045 = vmatprep.subr.mxu0 %v2044
        %v2046 = vand.u32 %v617, 4294901760
        %2047 = vmatpush1.msra.mxu0 %v2046
        %v2048 = vand.u32 %v620, 4294901760
        %2049 = vmatprep.subr.mxu0 %v2048
        %v2050 = vand.u32 %v619, 4294901760
        %2051 = vmatpush1.msra.mxu0 %v2050
        %v2052 = vand.u32 %v622, 4294901760
        %2053 = vmatprep.subr.mxu0 %v2052
        %v2054 = vand.u32 %v621, 4294901760
        %2055 = vmatpush1.msra.mxu0 %v2054
        %v2056 = vand.u32 %v624, 4294901760
        %2057 = vmatprep.subr.mxu0 %v2056
        %v2058 = vand.u32 %v623, 4294901760
        %2059 = vmatpush1.msra.mxu0 %v2058
        %v2060 = vand.u32 %v626, 4294901760
        %2061 = vmatprep.subr.mxu0 %v2060
        %v2062 = vand.u32 %v625, 4294901760
        %2063 = vmatpush1.msra.mxu0 %v2062
        %v2064 = vand.u32 %v628, 4294901760
        %2065 = vmatprep.subr.mxu0 %v2064
        %v2066 = vand.u32 %v627, 4294901760
        %2067 = vmatpush1.msra.mxu0 %v2066
        %v2068 = vand.u32 %v630, 4294901760
        %2069 = vmatprep.subr.mxu0 %v2068
        %v2070 = vand.u32 %v629, 4294901760
        %2071 = vmatpush1.msra.mxu0 %v2070
        %v2072 = vand.u32 %v632, 4294901760
        %2073 = vmatprep.subr.mxu0 %v2072
        %v2074 = vand.u32 %v631, 4294901760
        %2075 = vmatpush1.msra.mxu0 %v2074
        %v2076 = vand.u32 %v506, 4294901760
        %v2077 = vsub.f32 %v506, %v2076
        %v2078 = vand.u32 %v2077, 4294901760
        %2079 = vmatprep.mubr.f32.mxu0 %v2078
        %v2080 = vand.u32 %v505, 4294901760
        %v2081 = vsub.f32 %v505, %v2080
        %v2082 = vand.u32 %v2081, 4294901760
        %2083 = vmatmul.mubr.f32.gmra.mrb[0].mxu0 %v2082
        %v2084 = vpop.f32.mrb[0].mxu0
        %v2085 = vadd.f32 %v1794, %v2084
        %v2086 = vpop.f32.mrb[0].mxu0
        %v2087 = vadd.f32 %v1796, %v2086
        %v2088 = vand.u32 %v510, 4294901760
        %v2089 = vsub.f32 %v510, %v2088
        %v2090 = vand.u32 %v2089, 4294901760
        %2091 = vmatprep.mubr.f32.mxu0 %v2090
        %v2092 = vand.u32 %v509, 4294901760
        %v2093 = vsub.f32 %v509, %v2092
        %v2094 = vand.u32 %v2093, 4294901760
        %2095 = vmatmul.mubr.f32.gmra.mrb[0].mxu0 %v2094
        %v2096 = vpop.f32.mrb[0].mxu0
        %v2097 = vadd.f32 %v1804, %v2096
        %v2098 = vpop.f32.mrb[0].mxu0
        %v2099 = vadd.f32 %v1806, %v2098
        %v2100 = vand.u32 %v514, 4294901760
        %v2101 = vsub.f32 %v514, %v2100
        %v2102 = vand.u32 %v2101, 4294901760
        %2103 = vmatprep.mubr.f32.mxu0 %v2102
        %v2104 = vand.u32 %v513, 4294901760
        %v2105 = vsub.f32 %v513, %v2104
        %v2106 = vand.u32 %v2105, 4294901760
        %2107 = vmatmul.mubr.f32.gmra.mrb[0].mxu0 %v2106
        %v2108 = vpop.f32.mrb[0].mxu0
        %v2109 = vadd.f32 %v1814, %v2108
        %v2110 = vpop.f32.mrb[0].mxu0
        %v2111 = vadd.f32 %v1816, %v2110
        %v2112 = vand.u32 %v518, 4294901760
        %v2113 = vsub.f32 %v518, %v2112
        %v2114 = vand.u32 %v2113, 4294901760
        %2115 = vmatprep.mubr.f32.mxu0 %v2114
        %v2116 = vand.u32 %v517, 4294901760
        %v2117 = vsub.f32 %v517, %v2116
        %v2118 = vand.u32 %v2117, 4294901760
        %2119 = vmatmul.mubr.f32.gmra.mrb[0].mxu0 %v2118
        %v2120 = vpop.f32.mrb[0].mxu0
        %v2121 = vadd.f32 %v1824, %v2120
        %v2122 = vpop.f32.mrb[0].mxu0
        %v2123 = vadd.f32 %v1826, %v2122
        %v2124 = vand.u32 %v522, 4294901760
        %v2125 = vsub.f32 %v522, %v2124
        %v2126 = vand.u32 %v2125, 4294901760
        %2127 = vmatprep.mubr.f32.mxu0 %v2126
        %v2128 = vand.u32 %v521, 4294901760
        %v2129 = vsub.f32 %v521, %v2128
        %v2130 = vand.u32 %v2129, 4294901760
        %2131 = vmatmul.mubr.f32.gmra.mrb[0].mxu0 %v2130
        %v2132 = vpop.f32.mrb[0].mxu0
        %v2133 = vadd.f32 %v1834, %v2132
        %v2134 = vpop.f32.mrb[0].mxu0
        %v2135 = vadd.f32 %v1836, %v2134
        %v2136 = vand.u32 %v526, 4294901760
        %v2137 = vsub.f32 %v526, %v2136
        %v2138 = vand.u32 %v2137, 4294901760
        %2139 = vmatprep.mubr.f32.mxu0 %v2138
        %v2140 = vand.u32 %v525, 4294901760
        %v2141 = vsub.f32 %v525, %v2140
        %v2142 = vand.u32 %v2141, 4294901760
        %2143 = vmatmul.mubr.f32.gmra.mrb[0].mxu0 %v2142
        %v2144 = vpop.f32.mrb[0].mxu0
        %v2145 = vadd.f32 %v1844, %v2144
        %v2146 = vpop.f32.mrb[0].mxu0
        %v2147 = vadd.f32 %v1846, %v2146
        %v2148 = vand.u32 %v530, 4294901760
        %v2149 = vsub.f32 %v530, %v2148
        %v2150 = vand.u32 %v2149, 4294901760
        %2151 = vmatprep.mubr.f32.mxu0 %v2150
        %v2152 = vand.u32 %v529, 4294901760
        %v2153 = vsub.f32 %v529, %v2152
        %v2154 = vand.u32 %v2153, 4294901760
        %2155 = vmatmul.mubr.f32.gmra.mrb[0].mxu0 %v2154
        %v2156 = vpop.f32.mrb[0].mxu0
        %v2157 = vadd.f32 %v1854, %v2156
        %v2158 = vpop.f32.mrb[0].mxu0
        %v2159 = vadd.f32 %v1856, %v2158
        %v2160 = vand.u32 %v534, 4294901760
        %v2161 = vsub.f32 %v534, %v2160
        %v2162 = vand.u32 %v2161, 4294901760
        %2163 = vmatprep.mubr.f32.mxu0 %v2162
        %v2164 = vand.u32 %v533, 4294901760
        %v2165 = vsub.f32 %v533, %v2164
        %v2166 = vand.u32 %v2165, 4294901760
        %2167 = vmatmul.mubr.f32.gmra.mrb[0].mxu0 %v2166
        %v2168 = vpop.f32.mrb[0].mxu0
        %v2169 = vadd.f32 %v1864, %v2168
        %v2170 = vpop.f32.mrb[0].mxu0
        %v2171 = vadd.f32 %v1866, %v2170
        %v2172 = vand.u32 %v538, 4294901760
        %v2173 = vsub.f32 %v538, %v2172
        %v2174 = vand.u32 %v2173, 4294901760
        %2175 = vmatprep.mubr.f32.mxu0 %v2174
        %v2176 = vand.u32 %v537, 4294901760
        %v2177 = vsub.f32 %v537, %v2176
        %v2178 = vand.u32 %v2177, 4294901760
        %2179 = vmatmul.mubr.f32.gmra.mrb[0].mxu0 %v2178
        %v2180 = vpop.f32.mrb[0].mxu0
        %v2181 = vadd.f32 %v1874, %v2180
        %v2182 = vpop.f32.mrb[0].mxu0
        %v2183 = vadd.f32 %v1876, %v2182
        %v2184 = vand.u32 %v542, 4294901760
        %v2185 = vsub.f32 %v542, %v2184
        %v2186 = vand.u32 %v2185, 4294901760
        %2187 = vmatprep.mubr.f32.mxu0 %v2186
        %v2188 = vand.u32 %v541, 4294901760
        %v2189 = vsub.f32 %v541, %v2188
        %v2190 = vand.u32 %v2189, 4294901760
        %2191 = vmatmul.mubr.f32.gmra.mrb[0].mxu0 %v2190
        %v2192 = vpop.f32.mrb[0].mxu0
        %v2193 = vadd.f32 %v1884, %v2192
        %v2194 = vpop.f32.mrb[0].mxu0
        %v2195 = vadd.f32 %v1886, %v2194
        %v2196 = vand.u32 %v546, 4294901760
        %v2197 = vsub.f32 %v546, %v2196
        %v2198 = vand.u32 %v2197, 4294901760
        %2199 = vmatprep.mubr.f32.mxu0 %v2198
        %v2200 = vand.u32 %v545, 4294901760
        %v2201 = vsub.f32 %v545, %v2200
        %v2202 = vand.u32 %v2201, 4294901760
        %2203 = vmatmul.mubr.f32.gmra.mrb[0].mxu0 %v2202
        %v2204 = vpop.f32.mrb[0].mxu0
        %v2205 = vadd.f32 %v1894, %v2204
        %v2206 = vpop.f32.mrb[0].mxu0
        %v2207 = vadd.f32 %v1896, %v2206
        %v2208 = vand.u32 %v550, 4294901760
        %v2209 = vsub.f32 %v550, %v2208
        %v2210 = vand.u32 %v2209, 4294901760
        %2211 = vmatprep.mubr.f32.mxu0 %v2210
        %v2212 = vand.u32 %v549, 4294901760
        %v2213 = vsub.f32 %v549, %v2212
        %v2214 = vand.u32 %v2213, 4294901760
        %2215 = vmatmul.mubr.f32.gmra.mrb[0].mxu0 %v2214
        %v2216 = vpop.f32.mrb[0].mxu0
        %v2217 = vadd.f32 %v1904, %v2216
        %v2218 = vpop.f32.mrb[0].mxu0
        %v2219 = vadd.f32 %v1906, %v2218
        %v2220 = vand.u32 %v554, 4294901760
        %v2221 = vsub.f32 %v554, %v2220
        %v2222 = vand.u32 %v2221, 4294901760
        %2223 = vmatprep.mubr.f32.mxu0 %v2222
        %v2224 = vand.u32 %v553, 4294901760
        %v2225 = vsub.f32 %v553, %v2224
        %v2226 = vand.u32 %v2225, 4294901760
        %2227 = vmatmul.mubr.f32.gmra.mrb[0].mxu0 %v2226
        %v2228 = vpop.f32.mrb[0].mxu0
        %v2229 = vadd.f32 %v1914, %v2228
        %v2230 = vpop.f32.mrb[0].mxu0
        %v2231 = vadd.f32 %v1916, %v2230
        %v2232 = vand.u32 %v558, 4294901760
        %v2233 = vsub.f32 %v558, %v2232
        %v2234 = vand.u32 %v2233, 4294901760
        %2235 = vmatprep.mubr.f32.mxu0 %v2234
        %v2236 = vand.u32 %v557, 4294901760
        %v2237 = vsub.f32 %v557, %v2236
        %v2238 = vand.u32 %v2237, 4294901760
        %2239 = vmatmul.mubr.f32.gmra.mrb[0].mxu0 %v2238
        %v2240 = vpop.f32.mrb[0].mxu0
        %v2241 = vadd.f32 %v1924, %v2240
        %v2242 = vpop.f32.mrb[0].mxu0
        %v2243 = vadd.f32 %v1926, %v2242
        %v2244 = vand.u32 %v562, 4294901760
        %v2245 = vsub.f32 %v562, %v2244
        %v2246 = vand.u32 %v2245, 4294901760
        %2247 = vmatprep.mubr.f32.mxu0 %v2246
        %v2248 = vand.u32 %v561, 4294901760
        %v2249 = vsub.f32 %v561, %v2248
        %v2250 = vand.u32 %v2249, 4294901760
        %2251 = vmatmul.mubr.f32.gmra.mrb[0].mxu0 %v2250
        %v2252 = vpop.f32.mrb[0].mxu0
        %v2253 = vadd.f32 %v1934, %v2252
        %v2254 = vpop.f32.mrb[0].mxu0
        %v2255 = vadd.f32 %v1936, %v2254
        %v2256 = vand.u32 %v566, 4294901760
        %v2257 = vsub.f32 %v566, %v2256
        %v2258 = vand.u32 %v2257, 4294901760
        %2259 = vmatprep.mubr.f32.mxu0 %v2258
        %v2260 = vand.u32 %v565, 4294901760
        %v2261 = vsub.f32 %v565, %v2260
        %v2262 = vand.u32 %v2261, 4294901760
        %2263 = vmatmul.mubr.f32.gmra.mrb[0].mxu0 %v2262
        %v2264 = vpop.f32.mrb[0].mxu0
        %v2265 = vadd.f32 %v1944, %v2264
        %v2266 = vpop.f32.mrb[0].mxu0
        %v2267 = vadd.f32 %v1946, %v2266
        %2268 = vdwg.mxu0
        %v2269 = vand.u32 %v570, 4294901760
        %v2270 = vsub.f32 %v570, %v2269
        %v2271 = vand.u32 %v2270, 4294901760
        %2272 = vmatprep.subr.mxu0 %v2271
        %v2273 = vand.u32 %v569, 4294901760
        %v2274 = vsub.f32 %v569, %v2273
        %v2275 = vand.u32 %v2274, 4294901760
        %2276 = vmatpush1.msra.mxu0 %v2275
        %v2277 = vand.u32 %v572, 4294901760
        %v2278 = vsub.f32 %v572, %v2277
        %v2279 = vand.u32 %v2278, 4294901760
        %2280 = vmatprep.subr.mxu0 %v2279
        %v2281 = vand.u32 %v571, 4294901760
        %v2282 = vsub.f32 %v571, %v2281
        %v2283 = vand.u32 %v2282, 4294901760
        %2284 = vmatpush1.msra.mxu0 %v2283
        %v2285 = vand.u32 %v574, 4294901760
        %v2286 = vsub.f32 %v574, %v2285
        %v2287 = vand.u32 %v2286, 4294901760
        %2288 = vmatprep.subr.mxu0 %v2287
        %v2289 = vand.u32 %v573, 4294901760
        %v2290 = vsub.f32 %v573, %v2289
        %v2291 = vand.u32 %v2290, 4294901760
        %2292 = vmatpush1.msra.mxu0 %v2291
        %v2293 = vand.u32 %v576, 4294901760
        %v2294 = vsub.f32 %v576, %v2293
        %v2295 = vand.u32 %v2294, 4294901760
        %2296 = vmatprep.subr.mxu0 %v2295
        %v2297 = vand.u32 %v575, 4294901760
        %v2298 = vsub.f32 %v575, %v2297
        %v2299 = vand.u32 %v2298, 4294901760
        %2300 = vmatpush1.msra.mxu0 %v2299
        %v2301 = vand.u32 %v578, 4294901760
        %v2302 = vsub.f32 %v578, %v2301
        %v2303 = vand.u32 %v2302, 4294901760
        %2304 = vmatprep.subr.mxu0 %v2303
        %v2305 = vand.u32 %v577, 4294901760
        %v2306 = vsub.f32 %v577, %v2305
        %v2307 = vand.u32 %v2306, 4294901760
        %2308 = vmatpush1.msra.mxu0 %v2307
        %v2309 = vand.u32 %v580, 4294901760
        %v2310 = vsub.f32 %v580, %v2309
        %v2311 = vand.u32 %v2310, 4294901760
        %2312 = vmatprep.subr.mxu0 %v2311
        %v2313 = vand.u32 %v579, 4294901760
        %v2314 = vsub.f32 %v579, %v2313
        %v2315 = vand.u32 %v2314, 4294901760
        %2316 = vmatpush1.msra.mxu0 %v2315
        %v2317 = vand.u32 %v582, 4294901760
        %v2318 = vsub.f32 %v582, %v2317
        %v2319 = vand.u32 %v2318, 4294901760
        %2320 = vmatprep.subr.mxu0 %v2319
        %v2321 = vand.u32 %v581, 4294901760
        %v2322 = vsub.f32 %v581, %v2321
        %v2323 = vand.u32 %v2322, 4294901760
        %2324 = vmatpush1.msra.mxu0 %v2323
        %v2325 = vand.u32 %v584, 4294901760
        %v2326 = vsub.f32 %v584, %v2325
        %v2327 = vand.u32 %v2326, 4294901760
        %2328 = vmatprep.subr.mxu0 %v2327
        %v2329 = vand.u32 %v583, 4294901760
        %v2330 = vsub.f32 %v583, %v2329
        %v2331 = vand.u32 %v2330, 4294901760
        %2332 = vmatpush1.msra.mxu0 %v2331
        %v2333 = vand.u32 %v586, 4294901760
        %v2334 = vsub.f32 %v586, %v2333
        %v2335 = vand.u32 %v2334, 4294901760
        %2336 = vmatprep.subr.mxu0 %v2335
        %v2337 = vand.u32 %v585, 4294901760
        %v2338 = vsub.f32 %v585, %v2337
        %v2339 = vand.u32 %v2338, 4294901760
        %2340 = vmatpush1.msra.mxu0 %v2339
        %v2341 = vand.u32 %v588, 4294901760
        %v2342 = vsub.f32 %v588, %v2341
        %v2343 = vand.u32 %v2342, 4294901760
        %2344 = vmatprep.subr.mxu0 %v2343
        %v2345 = vand.u32 %v587, 4294901760
        %v2346 = vsub.f32 %v587, %v2345
        %v2347 = vand.u32 %v2346, 4294901760
        %2348 = vmatpush1.msra.mxu0 %v2347
        %v2349 = vand.u32 %v590, 4294901760
        %v2350 = vsub.f32 %v590, %v2349
        %v2351 = vand.u32 %v2350, 4294901760
        %2352 = vmatprep.subr.mxu0 %v2351
        %v2353 = vand.u32 %v589, 4294901760
        %v2354 = vsub.f32 %v589, %v2353
        %v2355 = vand.u32 %v2354, 4294901760
        %2356 = vmatpush1.msra.mxu0 %v2355
        %v2357 = vand.u32 %v592, 4294901760
        %v2358 = vsub.f32 %v592, %v2357
        %v2359 = vand.u32 %v2358, 4294901760
        %2360 = vmatprep.subr.mxu0 %v2359
        %v2361 = vand.u32 %v591, 4294901760
        %v2362 = vsub.f32 %v591, %v2361
        %v2363 = vand.u32 %v2362, 4294901760
        %2364 = vmatpush1.msra.mxu0 %v2363
        %v2365 = vand.u32 %v594, 4294901760
        %v2366 = vsub.f32 %v594, %v2365
        %v2367 = vand.u32 %v2366, 4294901760
        %2368 = vmatprep.subr.mxu0 %v2367
        %v2369 = vand.u32 %v593, 4294901760
        %v2370 = vsub.f32 %v593, %v2369
        %v2371 = vand.u32 %v2370, 4294901760
        %2372 = vmatpush1.msra.mxu0 %v2371
        %v2373 = vand.u32 %v596, 4294901760
        %v2374 = vsub.f32 %v596, %v2373
        %v2375 = vand.u32 %v2374, 4294901760
        %2376 = vmatprep.subr.mxu0 %v2375
        %v2377 = vand.u32 %v595, 4294901760
        %v2378 = vsub.f32 %v595, %v2377
        %v2379 = vand.u32 %v2378, 4294901760
        %2380 = vmatpush1.msra.mxu0 %v2379
        %v2381 = vand.u32 %v598, 4294901760
        %v2382 = vsub.f32 %v598, %v2381
        %v2383 = vand.u32 %v2382, 4294901760
        %2384 = vmatprep.subr.mxu0 %v2383
        %v2385 = vand.u32 %v597, 4294901760
        %v2386 = vsub.f32 %v597, %v2385
        %v2387 = vand.u32 %v2386, 4294901760
        %2388 = vmatpush1.msra.mxu0 %v2387
        %v2389 = vand.u32 %v600, 4294901760
        %v2390 = vsub.f32 %v600, %v2389
        %v2391 = vand.u32 %v2390, 4294901760
        %2392 = vmatprep.subr.mxu0 %v2391
        %v2393 = vand.u32 %v599, 4294901760
        %v2394 = vsub.f32 %v599, %v2393
        %v2395 = vand.u32 %v2394, 4294901760
        %2396 = vmatpush1.msra.mxu0 %v2395
        %v2397 = vand.u32 %v602, 4294901760
        %v2398 = vsub.f32 %v602, %v2397
        %v2399 = vand.u32 %v2398, 4294901760
        %2400 = vmatprep.subr.mxu0 %v2399
        %v2401 = vand.u32 %v601, 4294901760
        %v2402 = vsub.f32 %v601, %v2401
        %v2403 = vand.u32 %v2402, 4294901760
        %2404 = vmatpush1.msra.mxu0 %v2403
        %v2405 = vand.u32 %v604, 4294901760
        %v2406 = vsub.f32 %v604, %v2405
        %v2407 = vand.u32 %v2406, 4294901760
        %2408 = vmatprep.subr.mxu0 %v2407
        %v2409 = vand.u32 %v603, 4294901760
        %v2410 = vsub.f32 %v603, %v2409
        %v2411 = vand.u32 %v2410, 4294901760
        %2412 = vmatpush1.msra.mxu0 %v2411
        %v2413 = vand.u32 %v606, 4294901760
        %v2414 = vsub.f32 %v606, %v2413
        %v2415 = vand.u32 %v2414, 4294901760
        %2416 = vmatprep.subr.mxu0 %v2415
        %v2417 = vand.u32 %v605, 4294901760
        %v2418 = vsub.f32 %v605, %v2417
        %v2419 = vand.u32 %v2418, 4294901760
        %2420 = vmatpush1.msra.mxu0 %v2419
        %v2421 = vand.u32 %v608, 4294901760
        %v2422 = vsub.f32 %v608, %v2421
        %v2423 = vand.u32 %v2422, 4294901760
        %2424 = vmatprep.subr.mxu0 %v2423
        %v2425 = vand.u32 %v607, 4294901760
        %v2426 = vsub.f32 %v607, %v2425
        %v2427 = vand.u32 %v2426, 4294901760
        %2428 = vmatpush1.msra.mxu0 %v2427
        %v2429 = vand.u32 %v610, 4294901760
        %v2430 = vsub.f32 %v610, %v2429
        %v2431 = vand.u32 %v2430, 4294901760
        %2432 = vmatprep.subr.mxu0 %v2431
        %v2433 = vand.u32 %v609, 4294901760
        %v2434 = vsub.f32 %v609, %v2433
        %v2435 = vand.u32 %v2434, 4294901760
        %2436 = vmatpush1.msra.mxu0 %v2435
        %v2437 = vand.u32 %v612, 4294901760
        %v2438 = vsub.f32 %v612, %v2437
        %v2439 = vand.u32 %v2438, 4294901760
        %2440 = vmatprep.subr.mxu0 %v2439
        %v2441 = vand.u32 %v611, 4294901760
        %v2442 = vsub.f32 %v611, %v2441
        %v2443 = vand.u32 %v2442, 4294901760
        %2444 = vmatpush1.msra.mxu0 %v2443
        %v2445 = vand.u32 %v614, 4294901760
        %v2446 = vsub.f32 %v614, %v2445
        %v2447 = vand.u32 %v2446, 4294901760
        %2448 = vmatprep.subr.mxu0 %v2447
        %v2449 = vand.u32 %v613, 4294901760
        %v2450 = vsub.f32 %v613, %v2449
        %v2451 = vand.u32 %v2450, 4294901760
        %2452 = vmatpush1.msra.mxu0 %v2451
        %v2453 = vand.u32 %v616, 4294901760
        %v2454 = vsub.f32 %v616, %v2453
        %v2455 = vand.u32 %v2454, 4294901760
        %2456 = vmatprep.subr.mxu0 %v2455
        %v2457 = vand.u32 %v615, 4294901760
        %v2458 = vsub.f32 %v615, %v2457
        %v2459 = vand.u32 %v2458, 4294901760
        %2460 = vmatpush1.msra.mxu0 %v2459
        %v2461 = vand.u32 %v618, 4294901760
        %v2462 = vsub.f32 %v618, %v2461
        %v2463 = vand.u32 %v2462, 4294901760
        %2464 = vmatprep.subr.mxu0 %v2463
        %v2465 = vand.u32 %v617, 4294901760
        %v2466 = vsub.f32 %v617, %v2465
        %v2467 = vand.u32 %v2466, 4294901760
        %2468 = vmatpush1.msra.mxu0 %v2467
        %v2469 = vand.u32 %v620, 4294901760
        %v2470 = vsub.f32 %v620, %v2469
        %v2471 = vand.u32 %v2470, 4294901760
        %2472 = vmatprep.subr.mxu0 %v2471
        %v2473 = vand.u32 %v619, 4294901760
        %v2474 = vsub.f32 %v619, %v2473
        %v2475 = vand.u32 %v2474, 4294901760
        %2476 = vmatpush1.msra.mxu0 %v2475
        %v2477 = vand.u32 %v622, 4294901760
        %v2478 = vsub.f32 %v622, %v2477
        %v2479 = vand.u32 %v2478, 4294901760
        %2480 = vmatprep.subr.mxu0 %v2479
        %v2481 = vand.u32 %v621, 4294901760
        %v2482 = vsub.f32 %v621, %v2481
        %v2483 = vand.u32 %v2482, 4294901760
        %2484 = vmatpush1.msra.mxu0 %v2483
        %v2485 = vand.u32 %v624, 4294901760
        %v2486 = vsub.f32 %v624, %v2485
        %v2487 = vand.u32 %v2486, 4294901760
        %2488 = vmatprep.subr.mxu0 %v2487
        %v2489 = vand.u32 %v623, 4294901760
        %v2490 = vsub.f32 %v623, %v2489
        %v2491 = vand.u32 %v2490, 4294901760
        %2492 = vmatpush1.msra.mxu0 %v2491
        %v2493 = vand.u32 %v626, 4294901760
        %v2494 = vsub.f32 %v626, %v2493
        %v2495 = vand.u32 %v2494, 4294901760
        %2496 = vmatprep.subr.mxu0 %v2495
        %v2497 = vand.u32 %v625, 4294901760
        %v2498 = vsub.f32 %v625, %v2497
        %v2499 = vand.u32 %v2498, 4294901760
        %2500 = vmatpush1.msra.mxu0 %v2499
        %v2501 = vand.u32 %v628, 4294901760
        %v2502 = vsub.f32 %v628, %v2501
        %v2503 = vand.u32 %v2502, 4294901760
        %2504 = vmatprep.subr.mxu0 %v2503
        %v2505 = vand.u32 %v627, 4294901760
        %v2506 = vsub.f32 %v627, %v2505
        %v2507 = vand.u32 %v2506, 4294901760
        %2508 = vmatpush1.msra.mxu0 %v2507
        %v2509 = vand.u32 %v630, 4294901760
        %v2510 = vsub.f32 %v630, %v2509
        %v2511 = vand.u32 %v2510, 4294901760
        %2512 = vmatprep.subr.mxu0 %v2511
        %v2513 = vand.u32 %v629, 4294901760
        %v2514 = vsub.f32 %v629, %v2513
        %v2515 = vand.u32 %v2514, 4294901760
        %2516 = vmatpush1.msra.mxu0 %v2515
        %v2517 = vand.u32 %v632, 4294901760
        %v2518 = vsub.f32 %v632, %v2517
        %v2519 = vand.u32 %v2518, 4294901760
        %2520 = vmatprep.subr.mxu0 %v2519
        %v2521 = vand.u32 %v631, 4294901760
        %v2522 = vsub.f32 %v631, %v2521
        %v2523 = vand.u32 %v2522, 4294901760
        %2524 = vmatpush1.msra.mxu0 %v2523
        %v2525 = vand.u32 %v506, 4294901760
        %2526 = vmatprep.mubr.f32.mxu0 %v2525
        %v2527 = vand.u32 %v505, 4294901760
        %2528 = vmatmul.mubr.f32.gmra.mrb[0].mxu0 %v2527
        %v2529 = vpop.f32.mrb[0].mxu0
        %v2530 = vadd.f32 %v2085, %v2529
        %v2531 = vpop.f32.mrb[0].mxu0
        %v2532 = vadd.f32 %v2087, %v2531
        %v2533 = vand.u32 %v510, 4294901760
        %2534 = vmatprep.mubr.f32.mxu0 %v2533
        %v2535 = vand.u32 %v509, 4294901760
        %2536 = vmatmul.mubr.f32.gmra.mrb[0].mxu0 %v2535
        %v2537 = vpop.f32.mrb[0].mxu0
        %v2538 = vadd.f32 %v2097, %v2537
        %v2539 = vpop.f32.mrb[0].mxu0
        %v2540 = vadd.f32 %v2099, %v2539
        %v2541 = vand.u32 %v514, 4294901760
        %2542 = vmatprep.mubr.f32.mxu0 %v2541
        %v2543 = vand.u32 %v513, 4294901760
        %2544 = vmatmul.mubr.f32.gmra.mrb[0].mxu0 %v2543
        %v2545 = vpop.f32.mrb[0].mxu0
        %v2546 = vadd.f32 %v2109, %v2545
        %v2547 = vpop.f32.mrb[0].mxu0
        %v2548 = vadd.f32 %v2111, %v2547
        %v2549 = vand.u32 %v518, 4294901760
        %2550 = vmatprep.mubr.f32.mxu0 %v2549
        %v2551 = vand.u32 %v517, 4294901760
        %2552 = vmatmul.mubr.f32.gmra.mrb[0].mxu0 %v2551
        %v2553 = vpop.f32.mrb[0].mxu0
        %v2554 = vadd.f32 %v2121, %v2553
        %v2555 = vpop.f32.mrb[0].mxu0
        %v2556 = vadd.f32 %v2123, %v2555
        %v2557 = vand.u32 %v522, 4294901760
        %2558 = vmatprep.mubr.f32.mxu0 %v2557
        %v2559 = vand.u32 %v521, 4294901760
        %2560 = vmatmul.mubr.f32.gmra.mrb[0].mxu0 %v2559
        %v2561 = vpop.f32.mrb[0].mxu0
        %v2562 = vadd.f32 %v2133, %v2561
        %v2563 = vpop.f32.mrb[0].mxu0
        %v2564 = vadd.f32 %v2135, %v2563
        %v2565 = vand.u32 %v526, 4294901760
        %2566 = vmatprep.mubr.f32.mxu0 %v2565
        %v2567 = vand.u32 %v525, 4294901760
        %2568 = vmatmul.mubr.f32.gmra.mrb[0].mxu0 %v2567
        %v2569 = vpop.f32.mrb[0].mxu0
        %v2570 = vadd.f32 %v2145, %v2569
        %v2571 = vpop.f32.mrb[0].mxu0
        %v2572 = vadd.f32 %v2147, %v2571
        %v2573 = vand.u32 %v530, 4294901760
        %2574 = vmatprep.mubr.f32.mxu0 %v2573
        %v2575 = vand.u32 %v529, 4294901760
        %2576 = vmatmul.mubr.f32.gmra.mrb[0].mxu0 %v2575
        %v2577 = vpop.f32.mrb[0].mxu0
        %v2578 = vadd.f32 %v2157, %v2577
        %v2579 = vpop.f32.mrb[0].mxu0
        %v2580 = vadd.f32 %v2159, %v2579
        %v2581 = vand.u32 %v534, 4294901760
        %2582 = vmatprep.mubr.f32.mxu0 %v2581
        %v2583 = vand.u32 %v533, 4294901760
        %2584 = vmatmul.mubr.f32.gmra.mrb[0].mxu0 %v2583
        %v2585 = vpop.f32.mrb[0].mxu0
        %v2586 = vadd.f32 %v2169, %v2585
        %v2587 = vpop.f32.mrb[0].mxu0
        %v2588 = vadd.f32 %v2171, %v2587
        %v2589 = vand.u32 %v538, 4294901760
        %2590 = vmatprep.mubr.f32.mxu0 %v2589
        %v2591 = vand.u32 %v537, 4294901760
        %2592 = vmatmul.mubr.f32.gmra.mrb[0].mxu0 %v2591
        %v2593 = vpop.f32.mrb[0].mxu0
        %v2594 = vadd.f32 %v2181, %v2593
        %v2595 = vpop.f32.mrb[0].mxu0
        %v2596 = vadd.f32 %v2183, %v2595
        %v2597 = vand.u32 %v542, 4294901760
        %2598 = vmatprep.mubr.f32.mxu0 %v2597
        %v2599 = vand.u32 %v541, 4294901760
        %2600 = vmatmul.mubr.f32.gmra.mrb[0].mxu0 %v2599
        %v2601 = vpop.f32.mrb[0].mxu0
        %v2602 = vadd.f32 %v2193, %v2601
        %v2603 = vpop.f32.mrb[0].mxu0
        %v2604 = vadd.f32 %v2195, %v2603
        %v2605 = vand.u32 %v546, 4294901760
        %2606 = vmatprep.mubr.f32.mxu0 %v2605
        %v2607 = vand.u32 %v545, 4294901760
        %2608 = vmatmul.mubr.f32.gmra.mrb[0].mxu0 %v2607
        %v2609 = vpop.f32.mrb[0].mxu0
        %v2610 = vadd.f32 %v2205, %v2609
        %v2611 = vpop.f32.mrb[0].mxu0
        %v2612 = vadd.f32 %v2207, %v2611
        %v2613 = vand.u32 %v550, 4294901760
        %2614 = vmatprep.mubr.f32.mxu0 %v2613
        %v2615 = vand.u32 %v549, 4294901760
        %2616 = vmatmul.mubr.f32.gmra.mrb[0].mxu0 %v2615
        %v2617 = vpop.f32.mrb[0].mxu0
        %v2618 = vadd.f32 %v2217, %v2617
        %v2619 = vpop.f32.mrb[0].mxu0
        %v2620 = vadd.f32 %v2219, %v2619
        %v2621 = vand.u32 %v554, 4294901760
        %2622 = vmatprep.mubr.f32.mxu0 %v2621
        %v2623 = vand.u32 %v553, 4294901760
        %2624 = vmatmul.mubr.f32.gmra.mrb[0].mxu0 %v2623
        %v2625 = vpop.f32.mrb[0].mxu0
        %v2626 = vadd.f32 %v2229, %v2625
        %v2627 = vpop.f32.mrb[0].mxu0
        %v2628 = vadd.f32 %v2231, %v2627
        %v2629 = vand.u32 %v558, 4294901760
        %2630 = vmatprep.mubr.f32.mxu0 %v2629
        %v2631 = vand.u32 %v557, 4294901760
        %2632 = vmatmul.mubr.f32.gmra.mrb[0].mxu0 %v2631
        %v2633 = vpop.f32.mrb[0].mxu0
        %v2634 = vadd.f32 %v2241, %v2633
        %v2635 = vpop.f32.mrb[0].mxu0
        %v2636 = vadd.f32 %v2243, %v2635
        %v2637 = vand.u32 %v562, 4294901760
        %2638 = vmatprep.mubr.f32.mxu0 %v2637
        %v2639 = vand.u32 %v561, 4294901760
        %2640 = vmatmul.mubr.f32.gmra.mrb[0].mxu0 %v2639
        %v2641 = vpop.f32.mrb[0].mxu0
        %v2642 = vadd.f32 %v2253, %v2641
        %v2643 = vpop.f32.mrb[0].mxu0
        %v2644 = vadd.f32 %v2255, %v2643
        %v2645 = vand.u32 %v566, 4294901760
        %2646 = vmatprep.mubr.f32.mxu0 %v2645
        %v2647 = vand.u32 %v565, 4294901760
        %2648 = vmatmul.mubr.f32.gmra.mrb[0].mxu0 %v2647
        %v2649 = vpop.f32.mrb[0].mxu0
        %v2650 = vadd.f32 %v2265, %v2649
        %v2651 = vpop.f32.mrb[0].mxu0
        %v2652 = vadd.f32 %v2267, %v2651
        %2653 = vdwg.mxu0
        %v2654 = vand.u32 %v570, 4294901760
        %2655 = vmatprep.subr.mxu0 %v2654
        %v2656 = vand.u32 %v569, 4294901760
        %2657 = vmatpush1.msra.mxu0 %v2656
        %v2658 = vand.u32 %v572, 4294901760
        %2659 = vmatprep.subr.mxu0 %v2658
        %v2660 = vand.u32 %v571, 4294901760
        %2661 = vmatpush1.msra.mxu0 %v2660
        %v2662 = vand.u32 %v574, 4294901760
        %2663 = vmatprep.subr.mxu0 %v2662
        %v2664 = vand.u32 %v573, 4294901760
        %2665 = vmatpush1.msra.mxu0 %v2664
        %v2666 = vand.u32 %v576, 4294901760
        %2667 = vmatprep.subr.mxu0 %v2666
        %v2668 = vand.u32 %v575, 4294901760
        %2669 = vmatpush1.msra.mxu0 %v2668
        %v2670 = vand.u32 %v578, 4294901760
        %2671 = vmatprep.subr.mxu0 %v2670
        %v2672 = vand.u32 %v577, 4294901760
        %2673 = vmatpush1.msra.mxu0 %v2672
        %v2674 = vand.u32 %v580, 4294901760
        %2675 = vmatprep.subr.mxu0 %v2674
        %v2676 = vand.u32 %v579, 4294901760
        %2677 = vmatpush1.msra.mxu0 %v2676
        %v2678 = vand.u32 %v582, 4294901760
        %2679 = vmatprep.subr.mxu0 %v2678
        %v2680 = vand.u32 %v581, 4294901760
        %2681 = vmatpush1.msra.mxu0 %v2680
        %v2682 = vand.u32 %v584, 4294901760
        %2683 = vmatprep.subr.mxu0 %v2682
        %v2684 = vand.u32 %v583, 4294901760
        %2685 = vmatpush1.msra.mxu0 %v2684
        %v2686 = vand.u32 %v586, 4294901760
        %2687 = vmatprep.subr.mxu0 %v2686
        %v2688 = vand.u32 %v585, 4294901760
        %2689 = vmatpush1.msra.mxu0 %v2688
        %v2690 = vand.u32 %v588, 4294901760
        %2691 = vmatprep.subr.mxu0 %v2690
        %v2692 = vand.u32 %v587, 4294901760
        %2693 = vmatpush1.msra.mxu0 %v2692
        %v2694 = vand.u32 %v590, 4294901760
        %2695 = vmatprep.subr.mxu0 %v2694
        %v2696 = vand.u32 %v589, 4294901760
        %2697 = vmatpush1.msra.mxu0 %v2696
        %v2698 = vand.u32 %v592, 4294901760
        %2699 = vmatprep.subr.mxu0 %v2698
        %v2700 = vand.u32 %v591, 4294901760
        %2701 = vmatpush1.msra.mxu0 %v2700
        %v2702 = vand.u32 %v594, 4294901760
        %2703 = vmatprep.subr.mxu0 %v2702
        %v2704 = vand.u32 %v593, 4294901760
        %2705 = vmatpush1.msra.mxu0 %v2704
        %v2706 = vand.u32 %v596, 4294901760
        %2707 = vmatprep.subr.mxu0 %v2706
        %v2708 = vand.u32 %v595, 4294901760
        %2709 = vmatpush1.msra.mxu0 %v2708
        %v2710 = vand.u32 %v598, 4294901760
        %2711 = vmatprep.subr.mxu0 %v2710
        %v2712 = vand.u32 %v597, 4294901760
        %2713 = vmatpush1.msra.mxu0 %v2712
        %v2714 = vand.u32 %v600, 4294901760
        %2715 = vmatprep.subr.mxu0 %v2714
        %v2716 = vand.u32 %v599, 4294901760
        %2717 = vmatpush1.msra.mxu0 %v2716
        %v2718 = vand.u32 %v602, 4294901760
        %2719 = vmatprep.subr.mxu0 %v2718
        %v2720 = vand.u32 %v601, 4294901760
        %2721 = vmatpush1.msra.mxu0 %v2720
        %v2722 = vand.u32 %v604, 4294901760
        %2723 = vmatprep.subr.mxu0 %v2722
        %v2724 = vand.u32 %v603, 4294901760
        %2725 = vmatpush1.msra.mxu0 %v2724
        %v2726 = vand.u32 %v606, 4294901760
        %2727 = vmatprep.subr.mxu0 %v2726
        %v2728 = vand.u32 %v605, 4294901760
        %2729 = vmatpush1.msra.mxu0 %v2728
        %v2730 = vand.u32 %v608, 4294901760
        %2731 = vmatprep.subr.mxu0 %v2730
        %v2732 = vand.u32 %v607, 4294901760
        %2733 = vmatpush1.msra.mxu0 %v2732
        %v2734 = vand.u32 %v610, 4294901760
        %2735 = vmatprep.subr.mxu0 %v2734
        %v2736 = vand.u32 %v609, 4294901760
        %2737 = vmatpush1.msra.mxu0 %v2736
        %v2738 = vand.u32 %v612, 4294901760
        %2739 = vmatprep.subr.mxu0 %v2738
        %v2740 = vand.u32 %v611, 4294901760
        %2741 = vmatpush1.msra.mxu0 %v2740
        %v2742 = vand.u32 %v614, 4294901760
        %2743 = vmatprep.subr.mxu0 %v2742
        %v2744 = vand.u32 %v613, 4294901760
        %2745 = vmatpush1.msra.mxu0 %v2744
        %v2746 = vand.u32 %v616, 4294901760
        %2747 = vmatprep.subr.mxu0 %v2746
        %v2748 = vand.u32 %v615, 4294901760
        %2749 = vmatpush1.msra.mxu0 %v2748
        %v2750 = vand.u32 %v618, 4294901760
        %2751 = vmatprep.subr.mxu0 %v2750
        %v2752 = vand.u32 %v617, 4294901760
        %2753 = vmatpush1.msra.mxu0 %v2752
        %v2754 = vand.u32 %v620, 4294901760
        %2755 = vmatprep.subr.mxu0 %v2754
        %v2756 = vand.u32 %v619, 4294901760
        %2757 = vmatpush1.msra.mxu0 %v2756
        %v2758 = vand.u32 %v622, 4294901760
        %2759 = vmatprep.subr.mxu0 %v2758
        %v2760 = vand.u32 %v621, 4294901760
        %2761 = vmatpush1.msra.mxu0 %v2760
        %v2762 = vand.u32 %v624, 4294901760
        %2763 = vmatprep.subr.mxu0 %v2762
        %v2764 = vand.u32 %v623, 4294901760
        %2765 = vmatpush1.msra.mxu0 %v2764
        %v2766 = vand.u32 %v626, 4294901760
        %2767 = vmatprep.subr.mxu0 %v2766
        %v2768 = vand.u32 %v625, 4294901760
        %2769 = vmatpush1.msra.mxu0 %v2768
        %v2770 = vand.u32 %v628, 4294901760
        %2771 = vmatprep.subr.mxu0 %v2770
        %v2772 = vand.u32 %v627, 4294901760
        %2773 = vmatpush1.msra.mxu0 %v2772
        %v2774 = vand.u32 %v630, 4294901760
        %2775 = vmatprep.subr.mxu0 %v2774
        %v2776 = vand.u32 %v629, 4294901760
        %2777 = vmatpush1.msra.mxu0 %v2776
        %v2778 = vand.u32 %v632, 4294901760
        %2779 = vmatprep.subr.mxu0 %v2778
        %v2780 = vand.u32 %v631, 4294901760
        %2781 = vmatpush1.msra.mxu0 %v2780
        %v2782 = vand.u32 %v506, 4294901760
        %2783 = vmatprep.mubr.f32.mxu0 %v2782
        %v2784 = vand.u32 %v505, 4294901760
        %2785 = vmatmul.mubr.f32.gmra.mrb[0].mxu0 %v2784
        %v2786 = vpop.f32.mrb[0].mxu0
        %v2787 = vadd.f32 %v2530, %v2786
        %v2788 = vpop.f32.mrb[0].mxu0
        %v2789 = vadd.f32 %v2532, %v2788
        %v2790 = vand.u32 %v510, 4294901760
        %2791 = vmatprep.mubr.f32.mxu0 %v2790
        %v2792 = vand.u32 %v509, 4294901760
        %2793 = vmatmul.mubr.f32.gmra.mrb[0].mxu0 %v2792
        %v2794 = vpop.f32.mrb[0].mxu0
        %v2795 = vadd.f32 %v2538, %v2794
        %v2796 = vpop.f32.mrb[0].mxu0
        %v2797 = vadd.f32 %v2540, %v2796
        %v2798 = vand.u32 %v514, 4294901760
        %2799 = vmatprep.mubr.f32.mxu0 %v2798
        %v2800 = vand.u32 %v513, 4294901760
        %2801 = vmatmul.mubr.f32.gmra.mrb[0].mxu0 %v2800
        %v2802 = vpop.f32.mrb[0].mxu0
        %v2803 = vadd.f32 %v2546, %v2802
        %v2804 = vpop.f32.mrb[0].mxu0
        %v2805 = vadd.f32 %v2548, %v2804
        %v2806 = vand.u32 %v518, 4294901760
        %2807 = vmatprep.mubr.f32.mxu0 %v2806
        %v2808 = vand.u32 %v517, 4294901760
        %2809 = vmatmul.mubr.f32.gmra.mrb[0].mxu0 %v2808
        %v2810 = vpop.f32.mrb[0].mxu0
        %v2811 = vadd.f32 %v2554, %v2810
        %v2812 = vpop.f32.mrb[0].mxu0
        %v2813 = vadd.f32 %v2556, %v2812
        %v2814 = vand.u32 %v522, 4294901760
        %2815 = vmatprep.mubr.f32.mxu0 %v2814
        %v2816 = vand.u32 %v521, 4294901760
        %2817 = vmatmul.mubr.f32.gmra.mrb[0].mxu0 %v2816
        %v2818 = vpop.f32.mrb[0].mxu0
        %v2819 = vadd.f32 %v2562, %v2818
        %v2820 = vpop.f32.mrb[0].mxu0
        %v2821 = vadd.f32 %v2564, %v2820
        %v2822 = vand.u32 %v526, 4294901760
        %2823 = vmatprep.mubr.f32.mxu0 %v2822
        %v2824 = vand.u32 %v525, 4294901760
        %2825 = vmatmul.mubr.f32.gmra.mrb[0].mxu0 %v2824
        %v2826 = vpop.f32.mrb[0].mxu0
        %v2827 = vadd.f32 %v2570, %v2826
        %v2828 = vpop.f32.mrb[0].mxu0
        %v2829 = vadd.f32 %v2572, %v2828
        %v2830 = vand.u32 %v530, 4294901760
        %2831 = vmatprep.mubr.f32.mxu0 %v2830
        %v2832 = vand.u32 %v529, 4294901760
        %2833 = vmatmul.mubr.f32.gmra.mrb[0].mxu0 %v2832
        %v2834 = vpop.f32.mrb[0].mxu0
        %v2835 = vadd.f32 %v2578, %v2834
        %v2836 = vpop.f32.mrb[0].mxu0
        %v2837 = vadd.f32 %v2580, %v2836
        %v2838 = vand.u32 %v534, 4294901760
        %2839 = vmatprep.mubr.f32.mxu0 %v2838
        %v2840 = vand.u32 %v533, 4294901760
        %2841 = vmatmul.mubr.f32.gmra.mrb[0].mxu0 %v2840
        %v2842 = vpop.f32.mrb[0].mxu0
        %v2843 = vadd.f32 %v2586, %v2842
        %v2844 = vpop.f32.mrb[0].mxu0
        %v2845 = vadd.f32 %v2588, %v2844
        %v2846 = vand.u32 %v538, 4294901760
        %2847 = vmatprep.mubr.f32.mxu0 %v2846
        %v2848 = vand.u32 %v537, 4294901760
        %2849 = vmatmul.mubr.f32.gmra.mrb[0].mxu0 %v2848
        %v2850 = vpop.f32.mrb[0].mxu0
        %v2851 = vadd.f32 %v2594, %v2850
        %v2852 = vpop.f32.mrb[0].mxu0
        %v2853 = vadd.f32 %v2596, %v2852
        %v2854 = vand.u32 %v542, 4294901760
        %2855 = vmatprep.mubr.f32.mxu0 %v2854
        %v2856 = vand.u32 %v541, 4294901760
        %2857 = vmatmul.mubr.f32.gmra.mrb[0].mxu0 %v2856
        %v2858 = vpop.f32.mrb[0].mxu0
        %v2859 = vadd.f32 %v2602, %v2858
        %v2860 = vpop.f32.mrb[0].mxu0
        %v2861 = vadd.f32 %v2604, %v2860
        %v2862 = vand.u32 %v546, 4294901760
        %2863 = vmatprep.mubr.f32.mxu0 %v2862
        %v2864 = vand.u32 %v545, 4294901760
        %2865 = vmatmul.mubr.f32.gmra.mrb[0].mxu0 %v2864
        %v2866 = vpop.f32.mrb[0].mxu0
        %v2867 = vadd.f32 %v2610, %v2866
        %v2868 = vpop.f32.mrb[0].mxu0
        %v2869 = vadd.f32 %v2612, %v2868
        %v2870 = vand.u32 %v550, 4294901760
        %2871 = vmatprep.mubr.f32.mxu0 %v2870
        %v2872 = vand.u32 %v549, 4294901760
        %2873 = vmatmul.mubr.f32.gmra.mrb[0].mxu0 %v2872
        %v2874 = vpop.f32.mrb[0].mxu0
        %v2875 = vadd.f32 %v2618, %v2874
        %v2876 = vpop.f32.mrb[0].mxu0
        %v2877 = vadd.f32 %v2620, %v2876
        %v2878 = vand.u32 %v554, 4294901760
        %2879 = vmatprep.mubr.f32.mxu0 %v2878
        %v2880 = vand.u32 %v553, 4294901760
        %2881 = vmatmul.mubr.f32.gmra.mrb[0].mxu0 %v2880
        %v2882 = vpop.f32.mrb[0].mxu0
        %v2883 = vadd.f32 %v2626, %v2882
        %v2884 = vpop.f32.mrb[0].mxu0
        %v2885 = vadd.f32 %v2628, %v2884
        %v2886 = vand.u32 %v558, 4294901760
        %2887 = vmatprep.mubr.f32.mxu0 %v2886
        %v2888 = vand.u32 %v557, 4294901760
        %2889 = vmatmul.mubr.f32.gmra.mrb[0].mxu0 %v2888
        %v2890 = vpop.f32.mrb[0].mxu0
        %v2891 = vadd.f32 %v2634, %v2890
        %v2892 = vpop.f32.mrb[0].mxu0
        %v2893 = vadd.f32 %v2636, %v2892
        %v2894 = vand.u32 %v562, 4294901760
        %2895 = vmatprep.mubr.f32.mxu0 %v2894
        %v2896 = vand.u32 %v561, 4294901760
        %2897 = vmatmul.mubr.f32.gmra.mrb[0].mxu0 %v2896
        %v2898 = vpop.f32.mrb[0].mxu0
        %v2899 = vadd.f32 %v2642, %v2898
        %v2900 = vpop.f32.mrb[0].mxu0
        %v2901 = vadd.f32 %v2644, %v2900
        %v2902 = vand.u32 %v566, 4294901760
        %2903 = vmatprep.mubr.f32.mxu0 %v2902
        %v2904 = vand.u32 %v565, 4294901760
        %2905 = vmatmul.mubr.f32.gmra.mrb[0].mxu0 %v2904
        %v2906 = vpop.f32.mrb[0].mxu0
        %v2907 = vadd.f32 %v2650, %v2906
        %v2908 = vpop.f32.mrb[0].mxu0
        %v2909 = vadd.f32 %v2652, %v2908
        %2910 = vdwg.mxu0
        %v2911 = vand.u32 %v634, 4294901760
        %2912 = vmatprep.subr.mxu0 %v2911
        %v2913 = vand.u32 %v633, 4294901760
        %2914 = vmatpush1.msra.mxu0 %v2913
        %v2915 = vand.u32 %v636, 4294901760
        %2916 = vmatprep.subr.mxu0 %v2915
        %v2917 = vand.u32 %v635, 4294901760
        %2918 = vmatpush1.msra.mxu0 %v2917
        %v2919 = vand.u32 %v638, 4294901760
        %2920 = vmatprep.subr.mxu0 %v2919
        %v2921 = vand.u32 %v637, 4294901760
        %2922 = vmatpush1.msra.mxu0 %v2921
        %v2923 = vand.u32 %v640, 4294901760
        %2924 = vmatprep.subr.mxu0 %v2923
        %v2925 = vand.u32 %v639, 4294901760
        %2926 = vmatpush1.msra.mxu0 %v2925
        %v2927 = vand.u32 %v642, 4294901760
        %2928 = vmatprep.subr.mxu0 %v2927
        %v2929 = vand.u32 %v641, 4294901760
        %2930 = vmatpush1.msra.mxu0 %v2929
        %v2931 = vand.u32 %v644, 4294901760
        %2932 = vmatprep.subr.mxu0 %v2931
        %v2933 = vand.u32 %v643, 4294901760
        %2934 = vmatpush1.msra.mxu0 %v2933
        %v2935 = vand.u32 %v646, 4294901760
        %2936 = vmatprep.subr.mxu0 %v2935
        %v2937 = vand.u32 %v645, 4294901760
        %2938 = vmatpush1.msra.mxu0 %v2937
        %v2939 = vand.u32 %v648, 4294901760
        %2940 = vmatprep.subr.mxu0 %v2939
        %v2941 = vand.u32 %v647, 4294901760
        %2942 = vmatpush1.msra.mxu0 %v2941
        %v2943 = vand.u32 %v650, 4294901760
        %2944 = vmatprep.subr.mxu0 %v2943
        %v2945 = vand.u32 %v649, 4294901760
        %2946 = vmatpush1.msra.mxu0 %v2945
        %v2947 = vand.u32 %v652, 4294901760
        %2948 = vmatprep.subr.mxu0 %v2947
        %v2949 = vand.u32 %v651, 4294901760
        %2950 = vmatpush1.msra.mxu0 %v2949
        %v2951 = vand.u32 %v654, 4294901760
        %2952 = vmatprep.subr.mxu0 %v2951
        %v2953 = vand.u32 %v653, 4294901760
        %2954 = vmatpush1.msra.mxu0 %v2953
        %v2955 = vand.u32 %v656, 4294901760
        %2956 = vmatprep.subr.mxu0 %v2955
        %v2957 = vand.u32 %v655, 4294901760
        %2958 = vmatpush1.msra.mxu0 %v2957
        %v2959 = vand.u32 %v658, 4294901760
        %2960 = vmatprep.subr.mxu0 %v2959
        %v2961 = vand.u32 %v657, 4294901760
        %2962 = vmatpush1.msra.mxu0 %v2961
        %v2963 = vand.u32 %v660, 4294901760
        %2964 = vmatprep.subr.mxu0 %v2963
        %v2965 = vand.u32 %v659, 4294901760
        %2966 = vmatpush1.msra.mxu0 %v2965
        %v2967 = vand.u32 %v662, 4294901760
        %2968 = vmatprep.subr.mxu0 %v2967
        %v2969 = vand.u32 %v661, 4294901760
        %2970 = vmatpush1.msra.mxu0 %v2969
        %v2971 = vand.u32 %v664, 4294901760
        %2972 = vmatprep.subr.mxu0 %v2971
        %v2973 = vand.u32 %v663, 4294901760
        %2974 = vmatpush1.msra.mxu0 %v2973
        %v2975 = vand.u32 %v666, 4294901760
        %2976 = vmatprep.subr.mxu0 %v2975
        %v2977 = vand.u32 %v665, 4294901760
        %2978 = vmatpush1.msra.mxu0 %v2977
        %v2979 = vand.u32 %v668, 4294901760
        %2980 = vmatprep.subr.mxu0 %v2979
        %v2981 = vand.u32 %v667, 4294901760
        %2982 = vmatpush1.msra.mxu0 %v2981
        %v2983 = vand.u32 %v670, 4294901760
        %2984 = vmatprep.subr.mxu0 %v2983
        %v2985 = vand.u32 %v669, 4294901760
        %2986 = vmatpush1.msra.mxu0 %v2985
        %v2987 = vand.u32 %v672, 4294901760
        %2988 = vmatprep.subr.mxu0 %v2987
        %v2989 = vand.u32 %v671, 4294901760
        %2990 = vmatpush1.msra.mxu0 %v2989
        %v2991 = vand.u32 %v674, 4294901760
        %2992 = vmatprep.subr.mxu0 %v2991
        %v2993 = vand.u32 %v673, 4294901760
        %2994 = vmatpush1.msra.mxu0 %v2993
        %v2995 = vand.u32 %v676, 4294901760
        %2996 = vmatprep.subr.mxu0 %v2995
        %v2997 = vand.u32 %v675, 4294901760
        %2998 = vmatpush1.msra.mxu0 %v2997
        %v2999 = vand.u32 %v678, 4294901760
        %3000 = vmatprep.subr.mxu0 %v2999
        %v3001 = vand.u32 %v677, 4294901760
        %3002 = vmatpush1.msra.mxu0 %v3001
        %v3003 = vand.u32 %v680, 4294901760
        %3004 = vmatprep.subr.mxu0 %v3003
        %v3005 = vand.u32 %v679, 4294901760
        %3006 = vmatpush1.msra.mxu0 %v3005
        %v3007 = vand.u32 %v682, 4294901760
        %3008 = vmatprep.subr.mxu0 %v3007
        %v3009 = vand.u32 %v681, 4294901760
        %3010 = vmatpush1.msra.mxu0 %v3009
        %v3011 = vand.u32 %v684, 4294901760
        %3012 = vmatprep.subr.mxu0 %v3011
        %v3013 = vand.u32 %v683, 4294901760
        %3014 = vmatpush1.msra.mxu0 %v3013
        %v3015 = vand.u32 %v686, 4294901760
        %3016 = vmatprep.subr.mxu0 %v3015
        %v3017 = vand.u32 %v685, 4294901760
        %3018 = vmatpush1.msra.mxu0 %v3017
        %v3019 = vand.u32 %v688, 4294901760
        %3020 = vmatprep.subr.mxu0 %v3019
        %v3021 = vand.u32 %v687, 4294901760
        %3022 = vmatpush1.msra.mxu0 %v3021
        %v3023 = vand.u32 %v690, 4294901760
        %3024 = vmatprep.subr.mxu0 %v3023
        %v3025 = vand.u32 %v689, 4294901760
        %3026 = vmatpush1.msra.mxu0 %v3025
        %v3027 = vand.u32 %v692, 4294901760
        %3028 = vmatprep.subr.mxu0 %v3027
        %v3029 = vand.u32 %v691, 4294901760
        %3030 = vmatpush1.msra.mxu0 %v3029
        %v3031 = vand.u32 %v694, 4294901760
        %3032 = vmatprep.subr.mxu0 %v3031
        %v3033 = vand.u32 %v693, 4294901760
        %3034 = vmatpush1.msra.mxu0 %v3033
        %v3035 = vand.u32 %v696, 4294901760
        %3036 = vmatprep.subr.mxu0 %v3035
        %v3037 = vand.u32 %v695, 4294901760
        %3038 = vmatpush1.msra.mxu0 %v3037
        %v3039 = vand.u32 %v508, 4294901760
        %v3040 = vsub.f32 %v508, %v3039
        %v3041 = vand.u32 %v3040, 4294901760
        %v3042 = vsub.f32 %v3040, %v3041
        %v3043 = vand.u32 %v3042, 4294901760
        %3044 = vmatprep.mubr.f32.mxu0 %v3043
        %v3045 = vand.u32 %v507, 4294901760
        %v3046 = vsub.f32 %v507, %v3045
        %v3047 = vand.u32 %v3046, 4294901760
        %v3048 = vsub.f32 %v3046, %v3047
        %v3049 = vand.u32 %v3048, 4294901760
        %3050 = vmatmul.mubr.f32.gmra.mrb[0].mxu0 %v3049
        %v3051 = vpop.f32.mrb[0].mxu0
        %v3052 = vadd.f32 %v2787, %v3051
        %v3053 = vpop.f32.mrb[0].mxu0
        %v3054 = vadd.f32 %v2789, %v3053
        %v3055 = vand.u32 %v512, 4294901760
        %v3056 = vsub.f32 %v512, %v3055
        %v3057 = vand.u32 %v3056, 4294901760
        %v3058 = vsub.f32 %v3056, %v3057
        %v3059 = vand.u32 %v3058, 4294901760
        %3060 = vmatprep.mubr.f32.mxu0 %v3059
        %v3061 = vand.u32 %v511, 4294901760
        %v3062 = vsub.f32 %v511, %v3061
        %v3063 = vand.u32 %v3062, 4294901760
        %v3064 = vsub.f32 %v3062, %v3063
        %v3065 = vand.u32 %v3064, 4294901760
        %3066 = vmatmul.mubr.f32.gmra.mrb[0].mxu0 %v3065
        %v3067 = vpop.f32.mrb[0].mxu0
        %v3068 = vadd.f32 %v2795, %v3067
        %v3069 = vpop.f32.mrb[0].mxu0
        %v3070 = vadd.f32 %v2797, %v3069
        %v3071 = vand.u32 %v516, 4294901760
        %v3072 = vsub.f32 %v516, %v3071
        %v3073 = vand.u32 %v3072, 4294901760
        %v3074 = vsub.f32 %v3072, %v3073
        %v3075 = vand.u32 %v3074, 4294901760
        %3076 = vmatprep.mubr.f32.mxu0 %v3075
        %v3077 = vand.u32 %v515, 4294901760
        %v3078 = vsub.f32 %v515, %v3077
        %v3079 = vand.u32 %v3078, 4294901760
        %v3080 = vsub.f32 %v3078, %v3079
        %v3081 = vand.u32 %v3080, 4294901760
        %3082 = vmatmul.mubr.f32.gmra.mrb[0].mxu0 %v3081
        %v3083 = vpop.f32.mrb[0].mxu0
        %v3084 = vadd.f32 %v2803, %v3083
        %v3085 = vpop.f32.mrb[0].mxu0
        %v3086 = vadd.f32 %v2805, %v3085
        %v3087 = vand.u32 %v520, 4294901760
        %v3088 = vsub.f32 %v520, %v3087
        %v3089 = vand.u32 %v3088, 4294901760
        %v3090 = vsub.f32 %v3088, %v3089
        %v3091 = vand.u32 %v3090, 4294901760
        %3092 = vmatprep.mubr.f32.mxu0 %v3091
        %v3093 = vand.u32 %v519, 4294901760
        %v3094 = vsub.f32 %v519, %v3093
        %v3095 = vand.u32 %v3094, 4294901760
        %v3096 = vsub.f32 %v3094, %v3095
        %v3097 = vand.u32 %v3096, 4294901760
        %3098 = vmatmul.mubr.f32.gmra.mrb[0].mxu0 %v3097
        %v3099 = vpop.f32.mrb[0].mxu0
        %v3100 = vadd.f32 %v2811, %v3099
        %v3101 = vpop.f32.mrb[0].mxu0
        %v3102 = vadd.f32 %v2813, %v3101
        %v3103 = vand.u32 %v524, 4294901760
        %v3104 = vsub.f32 %v524, %v3103
        %v3105 = vand.u32 %v3104, 4294901760
        %v3106 = vsub.f32 %v3104, %v3105
        %v3107 = vand.u32 %v3106, 4294901760
        %3108 = vmatprep.mubr.f32.mxu0 %v3107
        %v3109 = vand.u32 %v523, 4294901760
        %v3110 = vsub.f32 %v523, %v3109
        %v3111 = vand.u32 %v3110, 4294901760
        %v3112 = vsub.f32 %v3110, %v3111
        %v3113 = vand.u32 %v3112, 4294901760
        %3114 = vmatmul.mubr.f32.gmra.mrb[0].mxu0 %v3113
        %v3115 = vpop.f32.mrb[0].mxu0
        %v3116 = vadd.f32 %v2819, %v3115
        %v3117 = vpop.f32.mrb[0].mxu0
        %v3118 = vadd.f32 %v2821, %v3117
        %v3119 = vand.u32 %v528, 4294901760
        %v3120 = vsub.f32 %v528, %v3119
        %v3121 = vand.u32 %v3120, 4294901760
        %v3122 = vsub.f32 %v3120, %v3121
        %v3123 = vand.u32 %v3122, 4294901760
        %3124 = vmatprep.mubr.f32.mxu0 %v3123
        %v3125 = vand.u32 %v527, 4294901760
        %v3126 = vsub.f32 %v527, %v3125
        %v3127 = vand.u32 %v3126, 4294901760
        %v3128 = vsub.f32 %v3126, %v3127
        %v3129 = vand.u32 %v3128, 4294901760
        %3130 = vmatmul.mubr.f32.gmra.mrb[0].mxu0 %v3129
        %v3131 = vpop.f32.mrb[0].mxu0
        %v3132 = vadd.f32 %v2827, %v3131
        %v3133 = vpop.f32.mrb[0].mxu0
        %v3134 = vadd.f32 %v2829, %v3133
        %v3135 = vand.u32 %v532, 4294901760
        %v3136 = vsub.f32 %v532, %v3135
        %v3137 = vand.u32 %v3136, 4294901760
        %v3138 = vsub.f32 %v3136, %v3137
        %v3139 = vand.u32 %v3138, 4294901760
        %3140 = vmatprep.mubr.f32.mxu0 %v3139
        %v3141 = vand.u32 %v531, 4294901760
        %v3142 = vsub.f32 %v531, %v3141
        %v3143 = vand.u32 %v3142, 4294901760
        %v3144 = vsub.f32 %v3142, %v3143
        %v3145 = vand.u32 %v3144, 4294901760
        %3146 = vmatmul.mubr.f32.gmra.mrb[0].mxu0 %v3145
        %v3147 = vpop.f32.mrb[0].mxu0
        %v3148 = vadd.f32 %v2835, %v3147
        %v3149 = vpop.f32.mrb[0].mxu0
        %v3150 = vadd.f32 %v2837, %v3149
        %v3151 = vand.u32 %v536, 4294901760
        %v3152 = vsub.f32 %v536, %v3151
        %v3153 = vand.u32 %v3152, 4294901760
        %v3154 = vsub.f32 %v3152, %v3153
        %v3155 = vand.u32 %v3154, 4294901760
        %3156 = vmatprep.mubr.f32.mxu0 %v3155
        %v3157 = vand.u32 %v535, 4294901760
        %v3158 = vsub.f32 %v535, %v3157
        %v3159 = vand.u32 %v3158, 4294901760
        %v3160 = vsub.f32 %v3158, %v3159
        %v3161 = vand.u32 %v3160, 4294901760
        %3162 = vmatmul.mubr.f32.gmra.mrb[0].mxu0 %v3161
        %v3163 = vpop.f32.mrb[0].mxu0
        %v3164 = vadd.f32 %v2843, %v3163
        %v3165 = vpop.f32.mrb[0].mxu0
        %v3166 = vadd.f32 %v2845, %v3165
        %v3167 = vand.u32 %v540, 4294901760
        %v3168 = vsub.f32 %v540, %v3167
        %v3169 = vand.u32 %v3168, 4294901760
        %v3170 = vsub.f32 %v3168, %v3169
        %v3171 = vand.u32 %v3170, 4294901760
        %3172 = vmatprep.mubr.f32.mxu0 %v3171
        %v3173 = vand.u32 %v539, 4294901760
        %v3174 = vsub.f32 %v539, %v3173
        %v3175 = vand.u32 %v3174, 4294901760
        %v3176 = vsub.f32 %v3174, %v3175
        %v3177 = vand.u32 %v3176, 4294901760
        %3178 = vmatmul.mubr.f32.gmra.mrb[0].mxu0 %v3177
        %v3179 = vpop.f32.mrb[0].mxu0
        %v3180 = vadd.f32 %v2851, %v3179
        %v3181 = vpop.f32.mrb[0].mxu0
        %v3182 = vadd.f32 %v2853, %v3181
        %v3183 = vand.u32 %v544, 4294901760
        %v3184 = vsub.f32 %v544, %v3183
        %v3185 = vand.u32 %v3184, 4294901760
        %v3186 = vsub.f32 %v3184, %v3185
        %v3187 = vand.u32 %v3186, 4294901760
        %3188 = vmatprep.mubr.f32.mxu0 %v3187
        %v3189 = vand.u32 %v543, 4294901760
        %v3190 = vsub.f32 %v543, %v3189
        %v3191 = vand.u32 %v3190, 4294901760
        %v3192 = vsub.f32 %v3190, %v3191
        %v3193 = vand.u32 %v3192, 4294901760
        %3194 = vmatmul.mubr.f32.gmra.mrb[0].mxu0 %v3193
        %v3195 = vpop.f32.mrb[0].mxu0
        %v3196 = vadd.f32 %v2859, %v3195
        %v3197 = vpop.f32.mrb[0].mxu0
        %v3198 = vadd.f32 %v2861, %v3197
        %v3199 = vand.u32 %v548, 4294901760
        %v3200 = vsub.f32 %v548, %v3199
        %v3201 = vand.u32 %v3200, 4294901760
        %v3202 = vsub.f32 %v3200, %v3201
        %v3203 = vand.u32 %v3202, 4294901760
        %3204 = vmatprep.mubr.f32.mxu0 %v3203
        %v3205 = vand.u32 %v547, 4294901760
        %v3206 = vsub.f32 %v547, %v3205
        %v3207 = vand.u32 %v3206, 4294901760
        %v3208 = vsub.f32 %v3206, %v3207
        %v3209 = vand.u32 %v3208, 4294901760
        %3210 = vmatmul.mubr.f32.gmra.mrb[0].mxu0 %v3209
        %v3211 = vpop.f32.mrb[0].mxu0
        %v3212 = vadd.f32 %v2867, %v3211
        %v3213 = vpop.f32.mrb[0].mxu0
        %v3214 = vadd.f32 %v2869, %v3213
        %v3215 = vand.u32 %v552, 4294901760
        %v3216 = vsub.f32 %v552, %v3215
        %v3217 = vand.u32 %v3216, 4294901760
        %v3218 = vsub.f32 %v3216, %v3217
        %v3219 = vand.u32 %v3218, 4294901760
        %3220 = vmatprep.mubr.f32.mxu0 %v3219
        %v3221 = vand.u32 %v551, 4294901760
        %v3222 = vsub.f32 %v551, %v3221
        %v3223 = vand.u32 %v3222, 4294901760
        %v3224 = vsub.f32 %v3222, %v3223
        %v3225 = vand.u32 %v3224, 4294901760
        %3226 = vmatmul.mubr.f32.gmra.mrb[0].mxu0 %v3225
        %v3227 = vpop.f32.mrb[0].mxu0
        %v3228 = vadd.f32 %v2875, %v3227
        %v3229 = vpop.f32.mrb[0].mxu0
        %v3230 = vadd.f32 %v2877, %v3229
        %v3231 = vand.u32 %v556, 4294901760
        %v3232 = vsub.f32 %v556, %v3231
        %v3233 = vand.u32 %v3232, 4294901760
        %v3234 = vsub.f32 %v3232, %v3233
        %v3235 = vand.u32 %v3234, 4294901760
        %3236 = vmatprep.mubr.f32.mxu0 %v3235
        %v3237 = vand.u32 %v555, 4294901760
        %v3238 = vsub.f32 %v555, %v3237
        %v3239 = vand.u32 %v3238, 4294901760
        %v3240 = vsub.f32 %v3238, %v3239
        %v3241 = vand.u32 %v3240, 4294901760
        %3242 = vmatmul.mubr.f32.gmra.mrb[0].mxu0 %v3241
        %v3243 = vpop.f32.mrb[0].mxu0
        %v3244 = vadd.f32 %v2883, %v3243
        %v3245 = vpop.f32.mrb[0].mxu0
        %v3246 = vadd.f32 %v2885, %v3245
        %v3247 = vand.u32 %v560, 4294901760
        %v3248 = vsub.f32 %v560, %v3247
        %v3249 = vand.u32 %v3248, 4294901760
        %v3250 = vsub.f32 %v3248, %v3249
        %v3251 = vand.u32 %v3250, 4294901760
        %3252 = vmatprep.mubr.f32.mxu0 %v3251
        %v3253 = vand.u32 %v559, 4294901760
        %v3254 = vsub.f32 %v559, %v3253
        %v3255 = vand.u32 %v3254, 4294901760
        %v3256 = vsub.f32 %v3254, %v3255
        %v3257 = vand.u32 %v3256, 4294901760
        %3258 = vmatmul.mubr.f32.gmra.mrb[0].mxu0 %v3257
        %v3259 = vpop.f32.mrb[0].mxu0
        %v3260 = vadd.f32 %v2891, %v3259
        %v3261 = vpop.f32.mrb[0].mxu0
        %v3262 = vadd.f32 %v2893, %v3261
        %v3263 = vand.u32 %v564, 4294901760
        %v3264 = vsub.f32 %v564, %v3263
        %v3265 = vand.u32 %v3264, 4294901760
        %v3266 = vsub.f32 %v3264, %v3265
        %v3267 = vand.u32 %v3266, 4294901760
        %3268 = vmatprep.mubr.f32.mxu0 %v3267
        %v3269 = vand.u32 %v563, 4294901760
        %v3270 = vsub.f32 %v563, %v3269
        %v3271 = vand.u32 %v3270, 4294901760
        %v3272 = vsub.f32 %v3270, %v3271
        %v3273 = vand.u32 %v3272, 4294901760
        %3274 = vmatmul.mubr.f32.gmra.mrb[0].mxu0 %v3273
        %v3275 = vpop.f32.mrb[0].mxu0
        %v3276 = vadd.f32 %v2899, %v3275
        %v3277 = vpop.f32.mrb[0].mxu0
        %v3278 = vadd.f32 %v2901, %v3277
        %v3279 = vand.u32 %v568, 4294901760
        %v3280 = vsub.f32 %v568, %v3279
        %v3281 = vand.u32 %v3280, 4294901760
        %v3282 = vsub.f32 %v3280, %v3281
        %v3283 = vand.u32 %v3282, 4294901760
        %3284 = vmatprep.mubr.f32.mxu0 %v3283
        %v3285 = vand.u32 %v567, 4294901760
        %v3286 = vsub.f32 %v567, %v3285
        %v3287 = vand.u32 %v3286, 4294901760
        %v3288 = vsub.f32 %v3286, %v3287
        %v3289 = vand.u32 %v3288, 4294901760
        %3290 = vmatmul.mubr.f32.gmra.mrb[0].mxu0 %v3289
        %v3291 = vpop.f32.mrb[0].mxu0
        %v3292 = vadd.f32 %v2907, %v3291
        %v3293 = vpop.f32.mrb[0].mxu0
        %v3294 = vadd.f32 %v2909, %v3293
        %3295 = vdwg.mxu0
        %v3296 = vand.u32 %v634, 4294901760
        %v3297 = vsub.f32 %v634, %v3296
        %v3298 = vand.u32 %v3297, 4294901760
        %v3299 = vsub.f32 %v3297, %v3298
        %v3300 = vand.u32 %v3299, 4294901760
        %3301 = vmatprep.subr.mxu0 %v3300
        %v3302 = vand.u32 %v633, 4294901760
        %v3303 = vsub.f32 %v633, %v3302
        %v3304 = vand.u32 %v3303, 4294901760
        %v3305 = vsub.f32 %v3303, %v3304
        %v3306 = vand.u32 %v3305, 4294901760
        %3307 = vmatpush1.msra.mxu0 %v3306
        %v3308 = vand.u32 %v636, 4294901760
        %v3309 = vsub.f32 %v636, %v3308
        %v3310 = vand.u32 %v3309, 4294901760
        %v3311 = vsub.f32 %v3309, %v3310
        %v3312 = vand.u32 %v3311, 4294901760
        %3313 = vmatprep.subr.mxu0 %v3312
        %v3314 = vand.u32 %v635, 4294901760
        %v3315 = vsub.f32 %v635, %v3314
        %v3316 = vand.u32 %v3315, 4294901760
        %v3317 = vsub.f32 %v3315, %v3316
        %v3318 = vand.u32 %v3317, 4294901760
        %3319 = vmatpush1.msra.mxu0 %v3318
        %v3320 = vand.u32 %v638, 4294901760
        %v3321 = vsub.f32 %v638, %v3320
        %v3322 = vand.u32 %v3321, 4294901760
        %v3323 = vsub.f32 %v3321, %v3322
        %v3324 = vand.u32 %v3323, 4294901760
        %3325 = vmatprep.subr.mxu0 %v3324
        %v3326 = vand.u32 %v637, 4294901760
        %v3327 = vsub.f32 %v637, %v3326
        %v3328 = vand.u32 %v3327, 4294901760
        %v3329 = vsub.f32 %v3327, %v3328
        %v3330 = vand.u32 %v3329, 4294901760
        %3331 = vmatpush1.msra.mxu0 %v3330
        %v3332 = vand.u32 %v640, 4294901760
        %v3333 = vsub.f32 %v640, %v3332
        %v3334 = vand.u32 %v3333, 4294901760
        %v3335 = vsub.f32 %v3333, %v3334
        %v3336 = vand.u32 %v3335, 4294901760
        %3337 = vmatprep.subr.mxu0 %v3336
        %v3338 = vand.u32 %v639, 4294901760
        %v3339 = vsub.f32 %v639, %v3338
        %v3340 = vand.u32 %v3339, 4294901760
        %v3341 = vsub.f32 %v3339, %v3340
        %v3342 = vand.u32 %v3341, 4294901760
        %3343 = vmatpush1.msra.mxu0 %v3342
        %v3344 = vand.u32 %v642, 4294901760
        %v3345 = vsub.f32 %v642, %v3344
        %v3346 = vand.u32 %v3345, 4294901760
        %v3347 = vsub.f32 %v3345, %v3346
        %v3348 = vand.u32 %v3347, 4294901760
        %3349 = vmatprep.subr.mxu0 %v3348
        %v3350 = vand.u32 %v641, 4294901760
        %v3351 = vsub.f32 %v641, %v3350
        %v3352 = vand.u32 %v3351, 4294901760
        %v3353 = vsub.f32 %v3351, %v3352
        %v3354 = vand.u32 %v3353, 4294901760
        %3355 = vmatpush1.msra.mxu0 %v3354
        %v3356 = vand.u32 %v644, 4294901760
        %v3357 = vsub.f32 %v644, %v3356
        %v3358 = vand.u32 %v3357, 4294901760
        %v3359 = vsub.f32 %v3357, %v3358
        %v3360 = vand.u32 %v3359, 4294901760
        %3361 = vmatprep.subr.mxu0 %v3360
        %v3362 = vand.u32 %v643, 4294901760
        %v3363 = vsub.f32 %v643, %v3362
        %v3364 = vand.u32 %v3363, 4294901760
        %v3365 = vsub.f32 %v3363, %v3364
        %v3366 = vand.u32 %v3365, 4294901760
        %3367 = vmatpush1.msra.mxu0 %v3366
        %v3368 = vand.u32 %v646, 4294901760
        %v3369 = vsub.f32 %v646, %v3368
        %v3370 = vand.u32 %v3369, 4294901760
        %v3371 = vsub.f32 %v3369, %v3370
        %v3372 = vand.u32 %v3371, 4294901760
        %3373 = vmatprep.subr.mxu0 %v3372
        %v3374 = vand.u32 %v645, 4294901760
        %v3375 = vsub.f32 %v645, %v3374
        %v3376 = vand.u32 %v3375, 4294901760
        %v3377 = vsub.f32 %v3375, %v3376
        %v3378 = vand.u32 %v3377, 4294901760
        %3379 = vmatpush1.msra.mxu0 %v3378
        %v3380 = vand.u32 %v648, 4294901760
        %v3381 = vsub.f32 %v648, %v3380
        %v3382 = vand.u32 %v3381, 4294901760
        %v3383 = vsub.f32 %v3381, %v3382
        %v3384 = vand.u32 %v3383, 4294901760
        %3385 = vmatprep.subr.mxu0 %v3384
        %v3386 = vand.u32 %v647, 4294901760
        %v3387 = vsub.f32 %v647, %v3386
        %v3388 = vand.u32 %v3387, 4294901760
        %v3389 = vsub.f32 %v3387, %v3388
        %v3390 = vand.u32 %v3389, 4294901760
        %3391 = vmatpush1.msra.mxu0 %v3390
        %v3392 = vand.u32 %v650, 4294901760
        %v3393 = vsub.f32 %v650, %v3392
        %v3394 = vand.u32 %v3393, 4294901760
        %v3395 = vsub.f32 %v3393, %v3394
        %v3396 = vand.u32 %v3395, 4294901760
        %3397 = vmatprep.subr.mxu0 %v3396
        %v3398 = vand.u32 %v649, 4294901760
        %v3399 = vsub.f32 %v649, %v3398
        %v3400 = vand.u32 %v3399, 4294901760
        %v3401 = vsub.f32 %v3399, %v3400
        %v3402 = vand.u32 %v3401, 4294901760
        %3403 = vmatpush1.msra.mxu0 %v3402
        %v3404 = vand.u32 %v652, 4294901760
        %v3405 = vsub.f32 %v652, %v3404
        %v3406 = vand.u32 %v3405, 4294901760
        %v3407 = vsub.f32 %v3405, %v3406
        %v3408 = vand.u32 %v3407, 4294901760
        %3409 = vmatprep.subr.mxu0 %v3408
        %v3410 = vand.u32 %v651, 4294901760
        %v3411 = vsub.f32 %v651, %v3410
        %v3412 = vand.u32 %v3411, 4294901760
        %v3413 = vsub.f32 %v3411, %v3412
        %v3414 = vand.u32 %v3413, 4294901760
        %3415 = vmatpush1.msra.mxu0 %v3414
        %v3416 = vand.u32 %v654, 4294901760
        %v3417 = vsub.f32 %v654, %v3416
        %v3418 = vand.u32 %v3417, 4294901760
        %v3419 = vsub.f32 %v3417, %v3418
        %v3420 = vand.u32 %v3419, 4294901760
        %3421 = vmatprep.subr.mxu0 %v3420
        %v3422 = vand.u32 %v653, 4294901760
        %v3423 = vsub.f32 %v653, %v3422
        %v3424 = vand.u32 %v3423, 4294901760
        %v3425 = vsub.f32 %v3423, %v3424
        %v3426 = vand.u32 %v3425, 4294901760
        %3427 = vmatpush1.msra.mxu0 %v3426
        %v3428 = vand.u32 %v656, 4294901760
        %v3429 = vsub.f32 %v656, %v3428
        %v3430 = vand.u32 %v3429, 4294901760
        %v3431 = vsub.f32 %v3429, %v3430
        %v3432 = vand.u32 %v3431, 4294901760
        %3433 = vmatprep.subr.mxu0 %v3432
        %v3434 = vand.u32 %v655, 4294901760
        %v3435 = vsub.f32 %v655, %v3434
        %v3436 = vand.u32 %v3435, 4294901760
        %v3437 = vsub.f32 %v3435, %v3436
        %v3438 = vand.u32 %v3437, 4294901760
        %3439 = vmatpush1.msra.mxu0 %v3438
        %v3440 = vand.u32 %v658, 4294901760
        %v3441 = vsub.f32 %v658, %v3440
        %v3442 = vand.u32 %v3441, 4294901760
        %v3443 = vsub.f32 %v3441, %v3442
        %v3444 = vand.u32 %v3443, 4294901760
        %3445 = vmatprep.subr.mxu0 %v3444
        %v3446 = vand.u32 %v657, 4294901760
        %v3447 = vsub.f32 %v657, %v3446
        %v3448 = vand.u32 %v3447, 4294901760
        %v3449 = vsub.f32 %v3447, %v3448
        %v3450 = vand.u32 %v3449, 4294901760
        %3451 = vmatpush1.msra.mxu0 %v3450
        %v3452 = vand.u32 %v660, 4294901760
        %v3453 = vsub.f32 %v660, %v3452
        %v3454 = vand.u32 %v3453, 4294901760
        %v3455 = vsub.f32 %v3453, %v3454
        %v3456 = vand.u32 %v3455, 4294901760
        %3457 = vmatprep.subr.mxu0 %v3456
        %v3458 = vand.u32 %v659, 4294901760
        %v3459 = vsub.f32 %v659, %v3458
        %v3460 = vand.u32 %v3459, 4294901760
        %v3461 = vsub.f32 %v3459, %v3460
        %v3462 = vand.u32 %v3461, 4294901760
        %3463 = vmatpush1.msra.mxu0 %v3462
        %v3464 = vand.u32 %v662, 4294901760
        %v3465 = vsub.f32 %v662, %v3464
        %v3466 = vand.u32 %v3465, 4294901760
        %v3467 = vsub.f32 %v3465, %v3466
        %v3468 = vand.u32 %v3467, 4294901760
        %3469 = vmatprep.subr.mxu0 %v3468
        %v3470 = vand.u32 %v661, 4294901760
        %v3471 = vsub.f32 %v661, %v3470
        %v3472 = vand.u32 %v3471, 4294901760
        %v3473 = vsub.f32 %v3471, %v3472
        %v3474 = vand.u32 %v3473, 4294901760
        %3475 = vmatpush1.msra.mxu0 %v3474
        %v3476 = vand.u32 %v664, 4294901760
        %v3477 = vsub.f32 %v664, %v3476
        %v3478 = vand.u32 %v3477, 4294901760
        %v3479 = vsub.f32 %v3477, %v3478
        %v3480 = vand.u32 %v3479, 4294901760
        %3481 = vmatprep.subr.mxu0 %v3480
        %v3482 = vand.u32 %v663, 4294901760
        %v3483 = vsub.f32 %v663, %v3482
        %v3484 = vand.u32 %v3483, 4294901760
        %v3485 = vsub.f32 %v3483, %v3484
        %v3486 = vand.u32 %v3485, 4294901760
        %3487 = vmatpush1.msra.mxu0 %v3486
        %v3488 = vand.u32 %v666, 4294901760
        %v3489 = vsub.f32 %v666, %v3488
        %v3490 = vand.u32 %v3489, 4294901760
        %v3491 = vsub.f32 %v3489, %v3490
        %v3492 = vand.u32 %v3491, 4294901760
        %3493 = vmatprep.subr.mxu0 %v3492
        %v3494 = vand.u32 %v665, 4294901760
        %v3495 = vsub.f32 %v665, %v3494
        %v3496 = vand.u32 %v3495, 4294901760
        %v3497 = vsub.f32 %v3495, %v3496
        %v3498 = vand.u32 %v3497, 4294901760
        %3499 = vmatpush1.msra.mxu0 %v3498
        %v3500 = vand.u32 %v668, 4294901760
        %v3501 = vsub.f32 %v668, %v3500
        %v3502 = vand.u32 %v3501, 4294901760
        %v3503 = vsub.f32 %v3501, %v3502
        %v3504 = vand.u32 %v3503, 4294901760
        %3505 = vmatprep.subr.mxu0 %v3504
        %v3506 = vand.u32 %v667, 4294901760
        %v3507 = vsub.f32 %v667, %v3506
        %v3508 = vand.u32 %v3507, 4294901760
        %v3509 = vsub.f32 %v3507, %v3508
        %v3510 = vand.u32 %v3509, 4294901760
        %3511 = vmatpush1.msra.mxu0 %v3510
        %v3512 = vand.u32 %v670, 4294901760
        %v3513 = vsub.f32 %v670, %v3512
        %v3514 = vand.u32 %v3513, 4294901760
        %v3515 = vsub.f32 %v3513, %v3514
        %v3516 = vand.u32 %v3515, 4294901760
        %3517 = vmatprep.subr.mxu0 %v3516
        %v3518 = vand.u32 %v669, 4294901760
        %v3519 = vsub.f32 %v669, %v3518
        %v3520 = vand.u32 %v3519, 4294901760
        %v3521 = vsub.f32 %v3519, %v3520
        %v3522 = vand.u32 %v3521, 4294901760
        %3523 = vmatpush1.msra.mxu0 %v3522
        %v3524 = vand.u32 %v672, 4294901760
        %v3525 = vsub.f32 %v672, %v3524
        %v3526 = vand.u32 %v3525, 4294901760
        %v3527 = vsub.f32 %v3525, %v3526
        %v3528 = vand.u32 %v3527, 4294901760
        %3529 = vmatprep.subr.mxu0 %v3528
        %v3530 = vand.u32 %v671, 4294901760
        %v3531 = vsub.f32 %v671, %v3530
        %v3532 = vand.u32 %v3531, 4294901760
        %v3533 = vsub.f32 %v3531, %v3532
        %v3534 = vand.u32 %v3533, 4294901760
        %3535 = vmatpush1.msra.mxu0 %v3534
        %v3536 = vand.u32 %v674, 4294901760
        %v3537 = vsub.f32 %v674, %v3536
        %v3538 = vand.u32 %v3537, 4294901760
        %v3539 = vsub.f32 %v3537, %v3538
        %v3540 = vand.u32 %v3539, 4294901760
        %3541 = vmatprep.subr.mxu0 %v3540
        %v3542 = vand.u32 %v673, 4294901760
        %v3543 = vsub.f32 %v673, %v3542
        %v3544 = vand.u32 %v3543, 4294901760
        %v3545 = vsub.f32 %v3543, %v3544
        %v3546 = vand.u32 %v3545, 4294901760
        %3547 = vmatpush1.msra.mxu0 %v3546
        %v3548 = vand.u32 %v676, 4294901760
        %v3549 = vsub.f32 %v676, %v3548
        %v3550 = vand.u32 %v3549, 4294901760
        %v3551 = vsub.f32 %v3549, %v3550
        %v3552 = vand.u32 %v3551, 4294901760
        %3553 = vmatprep.subr.mxu0 %v3552
        %v3554 = vand.u32 %v675, 4294901760
        %v3555 = vsub.f32 %v675, %v3554
        %v3556 = vand.u32 %v3555, 4294901760
        %v3557 = vsub.f32 %v3555, %v3556
        %v3558 = vand.u32 %v3557, 4294901760
        %3559 = vmatpush1.msra.mxu0 %v3558
        %v3560 = vand.u32 %v678, 4294901760
        %v3561 = vsub.f32 %v678, %v3560
        %v3562 = vand.u32 %v3561, 4294901760
        %v3563 = vsub.f32 %v3561, %v3562
        %v3564 = vand.u32 %v3563, 4294901760
        %3565 = vmatprep.subr.mxu0 %v3564
        %v3566 = vand.u32 %v677, 4294901760
        %v3567 = vsub.f32 %v677, %v3566
        %v3568 = vand.u32 %v3567, 4294901760
        %v3569 = vsub.f32 %v3567, %v3568
        %v3570 = vand.u32 %v3569, 4294901760
        %3571 = vmatpush1.msra.mxu0 %v3570
        %v3572 = vand.u32 %v680, 4294901760
        %v3573 = vsub.f32 %v680, %v3572
        %v3574 = vand.u32 %v3573, 4294901760
        %v3575 = vsub.f32 %v3573, %v3574
        %v3576 = vand.u32 %v3575, 4294901760
        %3577 = vmatprep.subr.mxu0 %v3576
        %v3578 = vand.u32 %v679, 4294901760
        %v3579 = vsub.f32 %v679, %v3578
        %v3580 = vand.u32 %v3579, 4294901760
        %v3581 = vsub.f32 %v3579, %v3580
        %v3582 = vand.u32 %v3581, 4294901760
        %3583 = vmatpush1.msra.mxu0 %v3582
        %v3584 = vand.u32 %v682, 4294901760
        %v3585 = vsub.f32 %v682, %v3584
        %v3586 = vand.u32 %v3585, 4294901760
        %v3587 = vsub.f32 %v3585, %v3586
        %v3588 = vand.u32 %v3587, 4294901760
        %3589 = vmatprep.subr.mxu0 %v3588
        %v3590 = vand.u32 %v681, 4294901760
        %v3591 = vsub.f32 %v681, %v3590
        %v3592 = vand.u32 %v3591, 4294901760
        %v3593 = vsub.f32 %v3591, %v3592
        %v3594 = vand.u32 %v3593, 4294901760
        %3595 = vmatpush1.msra.mxu0 %v3594
        %v3596 = vand.u32 %v684, 4294901760
        %v3597 = vsub.f32 %v684, %v3596
        %v3598 = vand.u32 %v3597, 4294901760
        %v3599 = vsub.f32 %v3597, %v3598
        %v3600 = vand.u32 %v3599, 4294901760
        %3601 = vmatprep.subr.mxu0 %v3600
        %v3602 = vand.u32 %v683, 4294901760
        %v3603 = vsub.f32 %v683, %v3602
        %v3604 = vand.u32 %v3603, 4294901760
        %v3605 = vsub.f32 %v3603, %v3604
        %v3606 = vand.u32 %v3605, 4294901760
        %3607 = vmatpush1.msra.mxu0 %v3606
        %v3608 = vand.u32 %v686, 4294901760
        %v3609 = vsub.f32 %v686, %v3608
        %v3610 = vand.u32 %v3609, 4294901760
        %v3611 = vsub.f32 %v3609, %v3610
        %v3612 = vand.u32 %v3611, 4294901760
        %3613 = vmatprep.subr.mxu0 %v3612
        %v3614 = vand.u32 %v685, 4294901760
        %v3615 = vsub.f32 %v685, %v3614
        %v3616 = vand.u32 %v3615, 4294901760
        %v3617 = vsub.f32 %v3615, %v3616
        %v3618 = vand.u32 %v3617, 4294901760
        %3619 = vmatpush1.msra.mxu0 %v3618
        %v3620 = vand.u32 %v688, 4294901760
        %v3621 = vsub.f32 %v688, %v3620
        %v3622 = vand.u32 %v3621, 4294901760
        %v3623 = vsub.f32 %v3621, %v3622
        %v3624 = vand.u32 %v3623, 4294901760
        %3625 = vmatprep.subr.mxu0 %v3624
        %v3626 = vand.u32 %v687, 4294901760
        %v3627 = vsub.f32 %v687, %v3626
        %v3628 = vand.u32 %v3627, 4294901760
        %v3629 = vsub.f32 %v3627, %v3628
        %v3630 = vand.u32 %v3629, 4294901760
        %3631 = vmatpush1.msra.mxu0 %v3630
        %v3632 = vand.u32 %v690, 4294901760
        %v3633 = vsub.f32 %v690, %v3632
        %v3634 = vand.u32 %v3633, 4294901760
        %v3635 = vsub.f32 %v3633, %v3634
        %v3636 = vand.u32 %v3635, 4294901760
        %3637 = vmatprep.subr.mxu0 %v3636
        %v3638 = vand.u32 %v689, 4294901760
        %v3639 = vsub.f32 %v689, %v3638
        %v3640 = vand.u32 %v3639, 4294901760
        %v3641 = vsub.f32 %v3639, %v3640
        %v3642 = vand.u32 %v3641, 4294901760
        %3643 = vmatpush1.msra.mxu0 %v3642
        %v3644 = vand.u32 %v692, 4294901760
        %v3645 = vsub.f32 %v692, %v3644
        %v3646 = vand.u32 %v3645, 4294901760
        %v3647 = vsub.f32 %v3645, %v3646
        %v3648 = vand.u32 %v3647, 4294901760
        %3649 = vmatprep.subr.mxu0 %v3648
        %v3650 = vand.u32 %v691, 4294901760
        %v3651 = vsub.f32 %v691, %v3650
        %v3652 = vand.u32 %v3651, 4294901760
        %v3653 = vsub.f32 %v3651, %v3652
        %v3654 = vand.u32 %v3653, 4294901760
        %3655 = vmatpush1.msra.mxu0 %v3654
        %v3656 = vand.u32 %v694, 4294901760
        %v3657 = vsub.f32 %v694, %v3656
        %v3658 = vand.u32 %v3657, 4294901760
        %v3659 = vsub.f32 %v3657, %v3658
        %v3660 = vand.u32 %v3659, 4294901760
        %3661 = vmatprep.subr.mxu0 %v3660
        %v3662 = vand.u32 %v693, 4294901760
        %v3663 = vsub.f32 %v693, %v3662
        %v3664 = vand.u32 %v3663, 4294901760
        %v3665 = vsub.f32 %v3663, %v3664
        %v3666 = vand.u32 %v3665, 4294901760
        %3667 = vmatpush1.msra.mxu0 %v3666
        %v3668 = vand.u32 %v696, 4294901760
        %v3669 = vsub.f32 %v696, %v3668
        %v3670 = vand.u32 %v3669, 4294901760
        %v3671 = vsub.f32 %v3669, %v3670
        %v3672 = vand.u32 %v3671, 4294901760
        %3673 = vmatprep.subr.mxu0 %v3672
        %v3674 = vand.u32 %v695, 4294901760
        %v3675 = vsub.f32 %v695, %v3674
        %v3676 = vand.u32 %v3675, 4294901760
        %v3677 = vsub.f32 %v3675, %v3676
        %v3678 = vand.u32 %v3677, 4294901760
        %3679 = vmatpush1.msra.mxu0 %v3678
        %v3680 = vand.u32 %v508, 4294901760
        %3681 = vmatprep.mubr.f32.mxu0 %v3680
        %v3682 = vand.u32 %v507, 4294901760
        %3683 = vmatmul.mubr.f32.gmra.mrb[0].mxu0 %v3682
        %v3684 = vpop.f32.mrb[0].mxu0
        %v3685 = vadd.f32 %v3052, %v3684
        %v3686 = vpop.f32.mrb[0].mxu0
        %v3687 = vadd.f32 %v3054, %v3686
        %v3688 = vand.u32 %v512, 4294901760
        %3689 = vmatprep.mubr.f32.mxu0 %v3688
        %v3690 = vand.u32 %v511, 4294901760
        %3691 = vmatmul.mubr.f32.gmra.mrb[0].mxu0 %v3690
        %v3692 = vpop.f32.mrb[0].mxu0
        %v3693 = vadd.f32 %v3068, %v3692
        %v3694 = vpop.f32.mrb[0].mxu0
        %v3695 = vadd.f32 %v3070, %v3694
        %v3696 = vand.u32 %v516, 4294901760
        %3697 = vmatprep.mubr.f32.mxu0 %v3696
        %v3698 = vand.u32 %v515, 4294901760
        %3699 = vmatmul.mubr.f32.gmra.mrb[0].mxu0 %v3698
        %v3700 = vpop.f32.mrb[0].mxu0
        %v3701 = vadd.f32 %v3084, %v3700
        %v3702 = vpop.f32.mrb[0].mxu0
        %v3703 = vadd.f32 %v3086, %v3702
        %v3704 = vand.u32 %v520, 4294901760
        %3705 = vmatprep.mubr.f32.mxu0 %v3704
        %v3706 = vand.u32 %v519, 4294901760
        %3707 = vmatmul.mubr.f32.gmra.mrb[0].mxu0 %v3706
        %v3708 = vpop.f32.mrb[0].mxu0
        %v3709 = vadd.f32 %v3100, %v3708
        %v3710 = vpop.f32.mrb[0].mxu0
        %v3711 = vadd.f32 %v3102, %v3710
        %v3712 = vand.u32 %v524, 4294901760
        %3713 = vmatprep.mubr.f32.mxu0 %v3712
        %v3714 = vand.u32 %v523, 4294901760
        %3715 = vmatmul.mubr.f32.gmra.mrb[0].mxu0 %v3714
        %v3716 = vpop.f32.mrb[0].mxu0
        %v3717 = vadd.f32 %v3116, %v3716
        %v3718 = vpop.f32.mrb[0].mxu0
        %v3719 = vadd.f32 %v3118, %v3718
        %v3720 = vand.u32 %v528, 4294901760
        %3721 = vmatprep.mubr.f32.mxu0 %v3720
        %v3722 = vand.u32 %v527, 4294901760
        %3723 = vmatmul.mubr.f32.gmra.mrb[0].mxu0 %v3722
        %v3724 = vpop.f32.mrb[0].mxu0
        %v3725 = vadd.f32 %v3132, %v3724
        %v3726 = vpop.f32.mrb[0].mxu0
        %v3727 = vadd.f32 %v3134, %v3726
        %v3728 = vand.u32 %v532, 4294901760
        %3729 = vmatprep.mubr.f32.mxu0 %v3728
        %v3730 = vand.u32 %v531, 4294901760
        %3731 = vmatmul.mubr.f32.gmra.mrb[0].mxu0 %v3730
        %v3732 = vpop.f32.mrb[0].mxu0
        %v3733 = vadd.f32 %v3148, %v3732
        %v3734 = vpop.f32.mrb[0].mxu0
        %v3735 = vadd.f32 %v3150, %v3734
        %v3736 = vand.u32 %v536, 4294901760
        %3737 = vmatprep.mubr.f32.mxu0 %v3736
        %v3738 = vand.u32 %v535, 4294901760
        %3739 = vmatmul.mubr.f32.gmra.mrb[0].mxu0 %v3738
        %v3740 = vpop.f32.mrb[0].mxu0
        %v3741 = vadd.f32 %v3164, %v3740
        %v3742 = vpop.f32.mrb[0].mxu0
        %v3743 = vadd.f32 %v3166, %v3742
        %v3744 = vand.u32 %v540, 4294901760
        %3745 = vmatprep.mubr.f32.mxu0 %v3744
        %v3746 = vand.u32 %v539, 4294901760
        %3747 = vmatmul.mubr.f32.gmra.mrb[0].mxu0 %v3746
        %v3748 = vpop.f32.mrb[0].mxu0
        %v3749 = vadd.f32 %v3180, %v3748
        %v3750 = vpop.f32.mrb[0].mxu0
        %v3751 = vadd.f32 %v3182, %v3750
        %v3752 = vand.u32 %v544, 4294901760
        %3753 = vmatprep.mubr.f32.mxu0 %v3752
        %v3754 = vand.u32 %v543, 4294901760
        %3755 = vmatmul.mubr.f32.gmra.mrb[0].mxu0 %v3754
        %v3756 = vpop.f32.mrb[0].mxu0
        %v3757 = vadd.f32 %v3196, %v3756
        %v3758 = vpop.f32.mrb[0].mxu0
        %v3759 = vadd.f32 %v3198, %v3758
        %v3760 = vand.u32 %v548, 4294901760
        %3761 = vmatprep.mubr.f32.mxu0 %v3760
        %v3762 = vand.u32 %v547, 4294901760
        %3763 = vmatmul.mubr.f32.gmra.mrb[0].mxu0 %v3762
        %v3764 = vpop.f32.mrb[0].mxu0
        %v3765 = vadd.f32 %v3212, %v3764
        %v3766 = vpop.f32.mrb[0].mxu0
        %v3767 = vadd.f32 %v3214, %v3766
        %v3768 = vand.u32 %v552, 4294901760
        %3769 = vmatprep.mubr.f32.mxu0 %v3768
        %v3770 = vand.u32 %v551, 4294901760
        %3771 = vmatmul.mubr.f32.gmra.mrb[0].mxu0 %v3770
        %v3772 = vpop.f32.mrb[0].mxu0
        %v3773 = vadd.f32 %v3228, %v3772
        %v3774 = vpop.f32.mrb[0].mxu0
        %v3775 = vadd.f32 %v3230, %v3774
        %v3776 = vand.u32 %v556, 4294901760
        %3777 = vmatprep.mubr.f32.mxu0 %v3776
        %v3778 = vand.u32 %v555, 4294901760
        %3779 = vmatmul.mubr.f32.gmra.mrb[0].mxu0 %v3778
        %v3780 = vpop.f32.mrb[0].mxu0
        %v3781 = vadd.f32 %v3244, %v3780
        %v3782 = vpop.f32.mrb[0].mxu0
        %v3783 = vadd.f32 %v3246, %v3782
        %v3784 = vand.u32 %v560, 4294901760
        %3785 = vmatprep.mubr.f32.mxu0 %v3784
        %v3786 = vand.u32 %v559, 4294901760
        %3787 = vmatmul.mubr.f32.gmra.mrb[0].mxu0 %v3786
        %v3788 = vpop.f32.mrb[0].mxu0
        %v3789 = vadd.f32 %v3260, %v3788
        %v3790 = vpop.f32.mrb[0].mxu0
        %v3791 = vadd.f32 %v3262, %v3790
        %v3792 = vand.u32 %v564, 4294901760
        %3793 = vmatprep.mubr.f32.mxu0 %v3792
        %v3794 = vand.u32 %v563, 4294901760
        %3795 = vmatmul.mubr.f32.gmra.mrb[0].mxu0 %v3794
        %v3796 = vpop.f32.mrb[0].mxu0
        %v3797 = vadd.f32 %v3276, %v3796
        %v3798 = vpop.f32.mrb[0].mxu0
        %v3799 = vadd.f32 %v3278, %v3798
        %v3800 = vand.u32 %v568, 4294901760
        %3801 = vmatprep.mubr.f32.mxu0 %v3800
        %v3802 = vand.u32 %v567, 4294901760
        %3803 = vmatmul.mubr.f32.gmra.mrb[0].mxu0 %v3802
        %v3804 = vpop.f32.mrb[0].mxu0
        %v3805 = vadd.f32 %v3292, %v3804
        %v3806 = vpop.f32.mrb[0].mxu0
        %v3807 = vadd.f32 %v3294, %v3806
        %3808 = vdwg.mxu0
        %v3809 = vand.u32 %v634, 4294901760
        %v3810 = vsub.f32 %v634, %v3809
        %3811 = vmatprep.subr.mxu0 %v3810
        %v3812 = vand.u32 %v633, 4294901760
        %v3813 = vsub.f32 %v633, %v3812
        %3814 = vmatpush1.msra.mxu0 %v3813
        %v3815 = vand.u32 %v636, 4294901760
        %v3816 = vsub.f32 %v636, %v3815
        %3817 = vmatprep.subr.mxu0 %v3816
        %v3818 = vand.u32 %v635, 4294901760
        %v3819 = vsub.f32 %v635, %v3818
        %3820 = vmatpush1.msra.mxu0 %v3819
        %v3821 = vand.u32 %v638, 4294901760
        %v3822 = vsub.f32 %v638, %v3821
        %3823 = vmatprep.subr.mxu0 %v3822
        %v3824 = vand.u32 %v637, 4294901760
        %v3825 = vsub.f32 %v637, %v3824
        %3826 = vmatpush1.msra.mxu0 %v3825
        %v3827 = vand.u32 %v640, 4294901760
        %v3828 = vsub.f32 %v640, %v3827
        %3829 = vmatprep.subr.mxu0 %v3828
        %v3830 = vand.u32 %v639, 4294901760
        %v3831 = vsub.f32 %v639, %v3830
        %3832 = vmatpush1.msra.mxu0 %v3831
        %v3833 = vand.u32 %v642, 4294901760
        %v3834 = vsub.f32 %v642, %v3833
        %3835 = vmatprep.subr.mxu0 %v3834
        %v3836 = vand.u32 %v641, 4294901760
        %v3837 = vsub.f32 %v641, %v3836
        %3838 = vmatpush1.msra.mxu0 %v3837
        %v3839 = vand.u32 %v644, 4294901760
        %v3840 = vsub.f32 %v644, %v3839
        %3841 = vmatprep.subr.mxu0 %v3840
        %v3842 = vand.u32 %v643, 4294901760
        %v3843 = vsub.f32 %v643, %v3842
        %3844 = vmatpush1.msra.mxu0 %v3843
        %v3845 = vand.u32 %v646, 4294901760
        %v3846 = vsub.f32 %v646, %v3845
        %3847 = vmatprep.subr.mxu0 %v3846
        %v3848 = vand.u32 %v645, 4294901760
        %v3849 = vsub.f32 %v645, %v3848
        %3850 = vmatpush1.msra.mxu0 %v3849
        %v3851 = vand.u32 %v648, 4294901760
        %v3852 = vsub.f32 %v648, %v3851
        %3853 = vmatprep.subr.mxu0 %v3852
        %v3854 = vand.u32 %v647, 4294901760
        %v3855 = vsub.f32 %v647, %v3854
        %3856 = vmatpush1.msra.mxu0 %v3855
        %v3857 = vand.u32 %v650, 4294901760
        %v3858 = vsub.f32 %v650, %v3857
        %3859 = vmatprep.subr.mxu0 %v3858
        %v3860 = vand.u32 %v649, 4294901760
        %v3861 = vsub.f32 %v649, %v3860
        %3862 = vmatpush1.msra.mxu0 %v3861
        %v3863 = vand.u32 %v652, 4294901760
        %v3864 = vsub.f32 %v652, %v3863
        %3865 = vmatprep.subr.mxu0 %v3864
        %v3866 = vand.u32 %v651, 4294901760
        %v3867 = vsub.f32 %v651, %v3866
        %3868 = vmatpush1.msra.mxu0 %v3867
        %v3869 = vand.u32 %v654, 4294901760
        %v3870 = vsub.f32 %v654, %v3869
        %3871 = vmatprep.subr.mxu0 %v3870
        %v3872 = vand.u32 %v653, 4294901760
        %v3873 = vsub.f32 %v653, %v3872
        %3874 = vmatpush1.msra.mxu0 %v3873
        %v3875 = vand.u32 %v656, 4294901760
        %v3876 = vsub.f32 %v656, %v3875
        %3877 = vmatprep.subr.mxu0 %v3876
        %v3878 = vand.u32 %v655, 4294901760
        %v3879 = vsub.f32 %v655, %v3878
        %3880 = vmatpush1.msra.mxu0 %v3879
        %v3881 = vand.u32 %v658, 4294901760
        %v3882 = vsub.f32 %v658, %v3881
        %3883 = vmatprep.subr.mxu0 %v3882
        %v3884 = vand.u32 %v657, 4294901760
        %v3885 = vsub.f32 %v657, %v3884
        %3886 = vmatpush1.msra.mxu0 %v3885
        %v3887 = vand.u32 %v660, 4294901760
        %v3888 = vsub.f32 %v660, %v3887
        %3889 = vmatprep.subr.mxu0 %v3888
        %v3890 = vand.u32 %v659, 4294901760
        %v3891 = vsub.f32 %v659, %v3890
        %3892 = vmatpush1.msra.mxu0 %v3891
        %v3893 = vand.u32 %v662, 4294901760
        %v3894 = vsub.f32 %v662, %v3893
        %3895 = vmatprep.subr.mxu0 %v3894
        %v3896 = vand.u32 %v661, 4294901760
        %v3897 = vsub.f32 %v661, %v3896
        %3898 = vmatpush1.msra.mxu0 %v3897
        %v3899 = vand.u32 %v664, 4294901760
        %v3900 = vsub.f32 %v664, %v3899
        %3901 = vmatprep.subr.mxu0 %v3900
        %v3902 = vand.u32 %v663, 4294901760
        %v3903 = vsub.f32 %v663, %v3902
        %3904 = vmatpush1.msra.mxu0 %v3903
        %v3905 = vand.u32 %v666, 4294901760
        %v3906 = vsub.f32 %v666, %v3905
        %3907 = vmatprep.subr.mxu0 %v3906
        %v3908 = vand.u32 %v665, 4294901760
        %v3909 = vsub.f32 %v665, %v3908
        %3910 = vmatpush1.msra.mxu0 %v3909
        %v3911 = vand.u32 %v668, 4294901760
        %v3912 = vsub.f32 %v668, %v3911
        %3913 = vmatprep.subr.mxu0 %v3912
        %v3914 = vand.u32 %v667, 4294901760
        %v3915 = vsub.f32 %v667, %v3914
        %3916 = vmatpush1.msra.mxu0 %v3915
        %v3917 = vand.u32 %v670, 4294901760
        %v3918 = vsub.f32 %v670, %v3917
        %3919 = vmatprep.subr.mxu0 %v3918
        %v3920 = vand.u32 %v669, 4294901760
        %v3921 = vsub.f32 %v669, %v3920
        %3922 = vmatpush1.msra.mxu0 %v3921
        %v3923 = vand.u32 %v672, 4294901760
        %v3924 = vsub.f32 %v672, %v3923
        %3925 = vmatprep.subr.mxu0 %v3924
        %v3926 = vand.u32 %v671, 4294901760
        %v3927 = vsub.f32 %v671, %v3926
        %3928 = vmatpush1.msra.mxu0 %v3927
        %v3929 = vand.u32 %v674, 4294901760
        %v3930 = vsub.f32 %v674, %v3929
        %3931 = vmatprep.subr.mxu0 %v3930
        %v3932 = vand.u32 %v673, 4294901760
        %v3933 = vsub.f32 %v673, %v3932
        %3934 = vmatpush1.msra.mxu0 %v3933
        %v3935 = vand.u32 %v676, 4294901760
        %v3936 = vsub.f32 %v676, %v3935
        %3937 = vmatprep.subr.mxu0 %v3936
        %v3938 = vand.u32 %v675, 4294901760
        %v3939 = vsub.f32 %v675, %v3938
        %3940 = vmatpush1.msra.mxu0 %v3939
        %v3941 = vand.u32 %v678, 4294901760
        %v3942 = vsub.f32 %v678, %v3941
        %3943 = vmatprep.subr.mxu0 %v3942
        %v3944 = vand.u32 %v677, 4294901760
        %v3945 = vsub.f32 %v677, %v3944
        %3946 = vmatpush1.msra.mxu0 %v3945
        %v3947 = vand.u32 %v680, 4294901760
        %v3948 = vsub.f32 %v680, %v3947
        %3949 = vmatprep.subr.mxu0 %v3948
        %v3950 = vand.u32 %v679, 4294901760
        %v3951 = vsub.f32 %v679, %v3950
        %3952 = vmatpush1.msra.mxu0 %v3951
        %v3953 = vand.u32 %v682, 4294901760
        %v3954 = vsub.f32 %v682, %v3953
        %3955 = vmatprep.subr.mxu0 %v3954
        %v3956 = vand.u32 %v681, 4294901760
        %v3957 = vsub.f32 %v681, %v3956
        %3958 = vmatpush1.msra.mxu0 %v3957
        %v3959 = vand.u32 %v684, 4294901760
        %v3960 = vsub.f32 %v684, %v3959
        %3961 = vmatprep.subr.mxu0 %v3960
        %v3962 = vand.u32 %v683, 4294901760
        %v3963 = vsub.f32 %v683, %v3962
        %3964 = vmatpush1.msra.mxu0 %v3963
        %v3965 = vand.u32 %v686, 4294901760
        %v3966 = vsub.f32 %v686, %v3965
        %3967 = vmatprep.subr.mxu0 %v3966
        %v3968 = vand.u32 %v685, 4294901760
        %v3969 = vsub.f32 %v685, %v3968
        %3970 = vmatpush1.msra.mxu0 %v3969
        %v3971 = vand.u32 %v688, 4294901760
        %v3972 = vsub.f32 %v688, %v3971
        %3973 = vmatprep.subr.mxu0 %v3972
        %v3974 = vand.u32 %v687, 4294901760
        %v3975 = vsub.f32 %v687, %v3974
        %3976 = vmatpush1.msra.mxu0 %v3975
        %v3977 = vand.u32 %v690, 4294901760
        %v3978 = vsub.f32 %v690, %v3977
        %3979 = vmatprep.subr.mxu0 %v3978
        %v3980 = vand.u32 %v689, 4294901760
        %v3981 = vsub.f32 %v689, %v3980
        %3982 = vmatpush1.msra.mxu0 %v3981
        %v3983 = vand.u32 %v692, 4294901760
        %v3984 = vsub.f32 %v692, %v3983
        %3985 = vmatprep.subr.mxu0 %v3984
        %v3986 = vand.u32 %v691, 4294901760
        %v3987 = vsub.f32 %v691, %v3986
        %3988 = vmatpush1.msra.mxu0 %v3987
        %v3989 = vand.u32 %v694, 4294901760
        %v3990 = vsub.f32 %v694, %v3989
        %3991 = vmatprep.subr.mxu0 %v3990
        %v3992 = vand.u32 %v693, 4294901760
        %v3993 = vsub.f32 %v693, %v3992
        %3994 = vmatpush1.msra.mxu0 %v3993
        %v3995 = vand.u32 %v696, 4294901760
        %v3996 = vsub.f32 %v696, %v3995
        %3997 = vmatprep.subr.mxu0 %v3996
        %v3998 = vand.u32 %v695, 4294901760
        %v3999 = vsub.f32 %v695, %v3998
        %4000 = vmatpush1.msra.mxu0 %v3999
        %v4001 = vand.u32 %v508, 4294901760
        %v4002 = vsub.f32 %v508, %v4001
        %4003 = vmatprep.mubr.f32.mxu0 %v4002
        %v4004 = vand.u32 %v507, 4294901760
        %v4005 = vsub.f32 %v507, %v4004
        %4006 = vmatmul.mubr.f32.gmra.mrb[0].mxu0 %v4005
        %v4007 = vpop.f32.mrb[0].mxu0
        %v4008 = vadd.f32 %v3685, %v4007
        %v4009 = vpop.f32.mrb[0].mxu0
        %v4010 = vadd.f32 %v3687, %v4009
        %v4011 = vand.u32 %v512, 4294901760
        %v4012 = vsub.f32 %v512, %v4011
        %4013 = vmatprep.mubr.f32.mxu0 %v4012
        %v4014 = vand.u32 %v511, 4294901760
        %v4015 = vsub.f32 %v511, %v4014
        %4016 = vmatmul.mubr.f32.gmra.mrb[0].mxu0 %v4015
        %v4017 = vpop.f32.mrb[0].mxu0
        %v4018 = vadd.f32 %v3693, %v4017
        %v4019 = vpop.f32.mrb[0].mxu0
        %v4020 = vadd.f32 %v3695, %v4019
        %v4021 = vand.u32 %v516, 4294901760
        %v4022 = vsub.f32 %v516, %v4021
        %4023 = vmatprep.mubr.f32.mxu0 %v4022
        %v4024 = vand.u32 %v515, 4294901760
        %v4025 = vsub.f32 %v515, %v4024
        %4026 = vmatmul.mubr.f32.gmra.mrb[0].mxu0 %v4025
        %v4027 = vpop.f32.mrb[0].mxu0
        %v4028 = vadd.f32 %v3701, %v4027
        %v4029 = vpop.f32.mrb[0].mxu0
        %v4030 = vadd.f32 %v3703, %v4029
        %v4031 = vand.u32 %v520, 4294901760
        %v4032 = vsub.f32 %v520, %v4031
        %4033 = vmatprep.mubr.f32.mxu0 %v4032
        %v4034 = vand.u32 %v519, 4294901760
        %v4035 = vsub.f32 %v519, %v4034
        %4036 = vmatmul.mubr.f32.gmra.mrb[0].mxu0 %v4035
        %v4037 = vpop.f32.mrb[0].mxu0
        %v4038 = vadd.f32 %v3709, %v4037
        %v4039 = vpop.f32.mrb[0].mxu0
        %v4040 = vadd.f32 %v3711, %v4039
        %v4041 = vand.u32 %v524, 4294901760
        %v4042 = vsub.f32 %v524, %v4041
        %4043 = vmatprep.mubr.f32.mxu0 %v4042
        %v4044 = vand.u32 %v523, 4294901760
        %v4045 = vsub.f32 %v523, %v4044
        %4046 = vmatmul.mubr.f32.gmra.mrb[0].mxu0 %v4045
        %v4047 = vpop.f32.mrb[0].mxu0
        %v4048 = vadd.f32 %v3717, %v4047
        %v4049 = vpop.f32.mrb[0].mxu0
        %v4050 = vadd.f32 %v3719, %v4049
        %v4051 = vand.u32 %v528, 4294901760
        %v4052 = vsub.f32 %v528, %v4051
        %4053 = vmatprep.mubr.f32.mxu0 %v4052
        %v4054 = vand.u32 %v527, 4294901760
        %v4055 = vsub.f32 %v527, %v4054
        %4056 = vmatmul.mubr.f32.gmra.mrb[0].mxu0 %v4055
        %v4057 = vpop.f32.mrb[0].mxu0
        %v4058 = vadd.f32 %v3725, %v4057
        %v4059 = vpop.f32.mrb[0].mxu0
        %v4060 = vadd.f32 %v3727, %v4059
        %v4061 = vand.u32 %v532, 4294901760
        %v4062 = vsub.f32 %v532, %v4061
        %4063 = vmatprep.mubr.f32.mxu0 %v4062
        %v4064 = vand.u32 %v531, 4294901760
        %v4065 = vsub.f32 %v531, %v4064
        %4066 = vmatmul.mubr.f32.gmra.mrb[0].mxu0 %v4065
        %v4067 = vpop.f32.mrb[0].mxu0
        %v4068 = vadd.f32 %v3733, %v4067
        %v4069 = vpop.f32.mrb[0].mxu0
        %v4070 = vadd.f32 %v3735, %v4069
        %v4071 = vand.u32 %v536, 4294901760
        %v4072 = vsub.f32 %v536, %v4071
        %4073 = vmatprep.mubr.f32.mxu0 %v4072
        %v4074 = vand.u32 %v535, 4294901760
        %v4075 = vsub.f32 %v535, %v4074
        %4076 = vmatmul.mubr.f32.gmra.mrb[0].mxu0 %v4075
        %v4077 = vpop.f32.mrb[0].mxu0
        %v4078 = vadd.f32 %v3741, %v4077
        %v4079 = vpop.f32.mrb[0].mxu0
        %v4080 = vadd.f32 %v3743, %v4079
        %v4081 = vand.u32 %v540, 4294901760
        %v4082 = vsub.f32 %v540, %v4081
        %4083 = vmatprep.mubr.f32.mxu0 %v4082
        %v4084 = vand.u32 %v539, 4294901760
        %v4085 = vsub.f32 %v539, %v4084
        %4086 = vmatmul.mubr.f32.gmra.mrb[0].mxu0 %v4085
        %v4087 = vpop.f32.mrb[0].mxu0
        %v4088 = vadd.f32 %v3749, %v4087
        %v4089 = vpop.f32.mrb[0].mxu0
        %v4090 = vadd.f32 %v3751, %v4089
        %v4091 = vand.u32 %v544, 4294901760
        %v4092 = vsub.f32 %v544, %v4091
        %4093 = vmatprep.mubr.f32.mxu0 %v4092
        %v4094 = vand.u32 %v543, 4294901760
        %v4095 = vsub.f32 %v543, %v4094
        %4096 = vmatmul.mubr.f32.gmra.mrb[0].mxu0 %v4095
        %v4097 = vpop.f32.mrb[0].mxu0
        %v4098 = vadd.f32 %v3757, %v4097
        %v4099 = vpop.f32.mrb[0].mxu0
        %v4100 = vadd.f32 %v3759, %v4099
        %v4101 = vand.u32 %v548, 4294901760
        %v4102 = vsub.f32 %v548, %v4101
        %4103 = vmatprep.mubr.f32.mxu0 %v4102
        %v4104 = vand.u32 %v547, 4294901760
        %v4105 = vsub.f32 %v547, %v4104
        %4106 = vmatmul.mubr.f32.gmra.mrb[0].mxu0 %v4105
        %v4107 = vpop.f32.mrb[0].mxu0
        %v4108 = vadd.f32 %v3765, %v4107
        %v4109 = vpop.f32.mrb[0].mxu0
        %v4110 = vadd.f32 %v3767, %v4109
        %v4111 = vand.u32 %v552, 4294901760
        %v4112 = vsub.f32 %v552, %v4111
        %4113 = vmatprep.mubr.f32.mxu0 %v4112
        %v4114 = vand.u32 %v551, 4294901760
        %v4115 = vsub.f32 %v551, %v4114
        %4116 = vmatmul.mubr.f32.gmra.mrb[0].mxu0 %v4115
        %v4117 = vpop.f32.mrb[0].mxu0
        %v4118 = vadd.f32 %v3773, %v4117
        %v4119 = vpop.f32.mrb[0].mxu0
        %v4120 = vadd.f32 %v3775, %v4119
        %v4121 = vand.u32 %v556, 4294901760
        %v4122 = vsub.f32 %v556, %v4121
        %4123 = vmatprep.mubr.f32.mxu0 %v4122
        %v4124 = vand.u32 %v555, 4294901760
        %v4125 = vsub.f32 %v555, %v4124
        %4126 = vmatmul.mubr.f32.gmra.mrb[0].mxu0 %v4125
        %v4127 = vpop.f32.mrb[0].mxu0
        %v4128 = vadd.f32 %v3781, %v4127
        %v4129 = vpop.f32.mrb[0].mxu0
        %v4130 = vadd.f32 %v3783, %v4129
        %v4131 = vand.u32 %v560, 4294901760
        %v4132 = vsub.f32 %v560, %v4131
        %4133 = vmatprep.mubr.f32.mxu0 %v4132
        %v4134 = vand.u32 %v559, 4294901760
        %v4135 = vsub.f32 %v559, %v4134
        %4136 = vmatmul.mubr.f32.gmra.mrb[0].mxu0 %v4135
        %v4137 = vpop.f32.mrb[0].mxu0
        %v4138 = vadd.f32 %v3789, %v4137
        %v4139 = vpop.f32.mrb[0].mxu0
        %v4140 = vadd.f32 %v3791, %v4139
        %v4141 = vand.u32 %v564, 4294901760
        %v4142 = vsub.f32 %v564, %v4141
        %4143 = vmatprep.mubr.f32.mxu0 %v4142
        %v4144 = vand.u32 %v563, 4294901760
        %v4145 = vsub.f32 %v563, %v4144
        %4146 = vmatmul.mubr.f32.gmra.mrb[0].mxu0 %v4145
        %v4147 = vpop.f32.mrb[0].mxu0
        %v4148 = vadd.f32 %v3797, %v4147
        %v4149 = vpop.f32.mrb[0].mxu0
        %v4150 = vadd.f32 %v3799, %v4149
        %v4151 = vand.u32 %v568, 4294901760
        %v4152 = vsub.f32 %v568, %v4151
        %4153 = vmatprep.mubr.f32.mxu0 %v4152
        %v4154 = vand.u32 %v567, 4294901760
        %v4155 = vsub.f32 %v567, %v4154
        %4156 = vmatmul.mubr.f32.gmra.mrb[0].mxu0 %v4155
        %v4157 = vpop.f32.mrb[0].mxu0
        %v4158 = vadd.f32 %v3805, %v4157
        %v4159 = vpop.f32.mrb[0].mxu0
        %v4160 = vadd.f32 %v3807, %v4159
        %4161 = vdwg.mxu0
        %v4162 = vand.u32 %v634, 4294901760
        %4163 = vmatprep.subr.mxu0 %v4162
        %v4164 = vand.u32 %v633, 4294901760
        %4165 = vmatpush1.msra.mxu0 %v4164
        %v4166 = vand.u32 %v636, 4294901760
        %4167 = vmatprep.subr.mxu0 %v4166
        %v4168 = vand.u32 %v635, 4294901760
        %4169 = vmatpush1.msra.mxu0 %v4168
        %v4170 = vand.u32 %v638, 4294901760
        %4171 = vmatprep.subr.mxu0 %v4170
        %v4172 = vand.u32 %v637, 4294901760
        %4173 = vmatpush1.msra.mxu0 %v4172
        %v4174 = vand.u32 %v640, 4294901760
        %4175 = vmatprep.subr.mxu0 %v4174
        %v4176 = vand.u32 %v639, 4294901760
        %4177 = vmatpush1.msra.mxu0 %v4176
        %v4178 = vand.u32 %v642, 4294901760
        %4179 = vmatprep.subr.mxu0 %v4178
        %v4180 = vand.u32 %v641, 4294901760
        %4181 = vmatpush1.msra.mxu0 %v4180
        %v4182 = vand.u32 %v644, 4294901760
        %4183 = vmatprep.subr.mxu0 %v4182
        %v4184 = vand.u32 %v643, 4294901760
        %4185 = vmatpush1.msra.mxu0 %v4184
        %v4186 = vand.u32 %v646, 4294901760
        %4187 = vmatprep.subr.mxu0 %v4186
        %v4188 = vand.u32 %v645, 4294901760
        %4189 = vmatpush1.msra.mxu0 %v4188
        %v4190 = vand.u32 %v648, 4294901760
        %4191 = vmatprep.subr.mxu0 %v4190
        %v4192 = vand.u32 %v647, 4294901760
        %4193 = vmatpush1.msra.mxu0 %v4192
        %v4194 = vand.u32 %v650, 4294901760
        %4195 = vmatprep.subr.mxu0 %v4194
        %v4196 = vand.u32 %v649, 4294901760
        %4197 = vmatpush1.msra.mxu0 %v4196
        %v4198 = vand.u32 %v652, 4294901760
        %4199 = vmatprep.subr.mxu0 %v4198
        %v4200 = vand.u32 %v651, 4294901760
        %4201 = vmatpush1.msra.mxu0 %v4200
        %v4202 = vand.u32 %v654, 4294901760
        %4203 = vmatprep.subr.mxu0 %v4202
        %v4204 = vand.u32 %v653, 4294901760
        %4205 = vmatpush1.msra.mxu0 %v4204
        %v4206 = vand.u32 %v656, 4294901760
        %4207 = vmatprep.subr.mxu0 %v4206
        %v4208 = vand.u32 %v655, 4294901760
        %4209 = vmatpush1.msra.mxu0 %v4208
        %v4210 = vand.u32 %v658, 4294901760
        %4211 = vmatprep.subr.mxu0 %v4210
        %v4212 = vand.u32 %v657, 4294901760
        %4213 = vmatpush1.msra.mxu0 %v4212
        %v4214 = vand.u32 %v660, 4294901760
        %4215 = vmatprep.subr.mxu0 %v4214
        %v4216 = vand.u32 %v659, 4294901760
        %4217 = vmatpush1.msra.mxu0 %v4216
        %v4218 = vand.u32 %v662, 4294901760
        %4219 = vmatprep.subr.mxu0 %v4218
        %v4220 = vand.u32 %v661, 4294901760
        %4221 = vmatpush1.msra.mxu0 %v4220
        %v4222 = vand.u32 %v664, 4294901760
        %4223 = vmatprep.subr.mxu0 %v4222
        %v4224 = vand.u32 %v663, 4294901760
        %4225 = vmatpush1.msra.mxu0 %v4224
        %v4226 = vand.u32 %v666, 4294901760
        %4227 = vmatprep.subr.mxu0 %v4226
        %v4228 = vand.u32 %v665, 4294901760
        %4229 = vmatpush1.msra.mxu0 %v4228
        %v4230 = vand.u32 %v668, 4294901760
        %4231 = vmatprep.subr.mxu0 %v4230
        %v4232 = vand.u32 %v667, 4294901760
        %4233 = vmatpush1.msra.mxu0 %v4232
        %v4234 = vand.u32 %v670, 4294901760
        %4235 = vmatprep.subr.mxu0 %v4234
        %v4236 = vand.u32 %v669, 4294901760
        %4237 = vmatpush1.msra.mxu0 %v4236
        %v4238 = vand.u32 %v672, 4294901760
        %4239 = vmatprep.subr.mxu0 %v4238
        %v4240 = vand.u32 %v671, 4294901760
        %4241 = vmatpush1.msra.mxu0 %v4240
        %v4242 = vand.u32 %v674, 4294901760
        %4243 = vmatprep.subr.mxu0 %v4242
        %v4244 = vand.u32 %v673, 4294901760
        %4245 = vmatpush1.msra.mxu0 %v4244
        %v4246 = vand.u32 %v676, 4294901760
        %4247 = vmatprep.subr.mxu0 %v4246
        %v4248 = vand.u32 %v675, 4294901760
        %4249 = vmatpush1.msra.mxu0 %v4248
        %v4250 = vand.u32 %v678, 4294901760
        %4251 = vmatprep.subr.mxu0 %v4250
        %v4252 = vand.u32 %v677, 4294901760
        %4253 = vmatpush1.msra.mxu0 %v4252
        %v4254 = vand.u32 %v680, 4294901760
        %4255 = vmatprep.subr.mxu0 %v4254
        %v4256 = vand.u32 %v679, 4294901760
        %4257 = vmatpush1.msra.mxu0 %v4256
        %v4258 = vand.u32 %v682, 4294901760
        %4259 = vmatprep.subr.mxu0 %v4258
        %v4260 = vand.u32 %v681, 4294901760
        %4261 = vmatpush1.msra.mxu0 %v4260
        %v4262 = vand.u32 %v684, 4294901760
        %4263 = vmatprep.subr.mxu0 %v4262
        %v4264 = vand.u32 %v683, 4294901760
        %4265 = vmatpush1.msra.mxu0 %v4264
        %v4266 = vand.u32 %v686, 4294901760
        %4267 = vmatprep.subr.mxu0 %v4266
        %v4268 = vand.u32 %v685, 4294901760
        %4269 = vmatpush1.msra.mxu0 %v4268
        %v4270 = vand.u32 %v688, 4294901760
        %4271 = vmatprep.subr.mxu0 %v4270
        %v4272 = vand.u32 %v687, 4294901760
        %4273 = vmatpush1.msra.mxu0 %v4272
        %v4274 = vand.u32 %v690, 4294901760
        %4275 = vmatprep.subr.mxu0 %v4274
        %v4276 = vand.u32 %v689, 4294901760
        %4277 = vmatpush1.msra.mxu0 %v4276
        %v4278 = vand.u32 %v692, 4294901760
        %4279 = vmatprep.subr.mxu0 %v4278
        %v4280 = vand.u32 %v691, 4294901760
        %4281 = vmatpush1.msra.mxu0 %v4280
        %v4282 = vand.u32 %v694, 4294901760
        %4283 = vmatprep.subr.mxu0 %v4282
        %v4284 = vand.u32 %v693, 4294901760
        %4285 = vmatpush1.msra.mxu0 %v4284
        %v4286 = vand.u32 %v696, 4294901760
        %4287 = vmatprep.subr.mxu0 %v4286
        %v4288 = vand.u32 %v695, 4294901760
        %4289 = vmatpush1.msra.mxu0 %v4288
        %v4290 = vand.u32 %v508, 4294901760
        %v4291 = vsub.f32 %v508, %v4290
        %v4292 = vand.u32 %v4291, 4294901760
        %4293 = vmatprep.mubr.f32.mxu0 %v4292
        %v4294 = vand.u32 %v507, 4294901760
        %v4295 = vsub.f32 %v507, %v4294
        %v4296 = vand.u32 %v4295, 4294901760
        %4297 = vmatmul.mubr.f32.gmra.mrb[0].mxu0 %v4296
        %v4298 = vpop.f32.mrb[0].mxu0
        %v4299 = vadd.f32 %v4008, %v4298
        %v4300 = vpop.f32.mrb[0].mxu0
        %v4301 = vadd.f32 %v4010, %v4300
        %v4302 = vand.u32 %v512, 4294901760
        %v4303 = vsub.f32 %v512, %v4302
        %v4304 = vand.u32 %v4303, 4294901760
        %4305 = vmatprep.mubr.f32.mxu0 %v4304
        %v4306 = vand.u32 %v511, 4294901760
        %v4307 = vsub.f32 %v511, %v4306
        %v4308 = vand.u32 %v4307, 4294901760
        %4309 = vmatmul.mubr.f32.gmra.mrb[0].mxu0 %v4308
        %v4310 = vpop.f32.mrb[0].mxu0
        %v4311 = vadd.f32 %v4018, %v4310
        %v4312 = vpop.f32.mrb[0].mxu0
        %v4313 = vadd.f32 %v4020, %v4312
        %v4314 = vand.u32 %v516, 4294901760
        %v4315 = vsub.f32 %v516, %v4314
        %v4316 = vand.u32 %v4315, 4294901760
        %4317 = vmatprep.mubr.f32.mxu0 %v4316
        %v4318 = vand.u32 %v515, 4294901760
        %v4319 = vsub.f32 %v515, %v4318
        %v4320 = vand.u32 %v4319, 4294901760
        %4321 = vmatmul.mubr.f32.gmra.mrb[0].mxu0 %v4320
        %v4322 = vpop.f32.mrb[0].mxu0
        %v4323 = vadd.f32 %v4028, %v4322
        %v4324 = vpop.f32.mrb[0].mxu0
        %v4325 = vadd.f32 %v4030, %v4324
        %v4326 = vand.u32 %v520, 4294901760
        %v4327 = vsub.f32 %v520, %v4326
        %v4328 = vand.u32 %v4327, 4294901760
        %4329 = vmatprep.mubr.f32.mxu0 %v4328
        %v4330 = vand.u32 %v519, 4294901760
        %v4331 = vsub.f32 %v519, %v4330
        %v4332 = vand.u32 %v4331, 4294901760
        %4333 = vmatmul.mubr.f32.gmra.mrb[0].mxu0 %v4332
        %v4334 = vpop.f32.mrb[0].mxu0
        %v4335 = vadd.f32 %v4038, %v4334
        %v4336 = vpop.f32.mrb[0].mxu0
        %v4337 = vadd.f32 %v4040, %v4336
        %v4338 = vand.u32 %v524, 4294901760
        %v4339 = vsub.f32 %v524, %v4338
        %v4340 = vand.u32 %v4339, 4294901760
        %4341 = vmatprep.mubr.f32.mxu0 %v4340
        %v4342 = vand.u32 %v523, 4294901760
        %v4343 = vsub.f32 %v523, %v4342
        %v4344 = vand.u32 %v4343, 4294901760
        %4345 = vmatmul.mubr.f32.gmra.mrb[0].mxu0 %v4344
        %v4346 = vpop.f32.mrb[0].mxu0
        %v4347 = vadd.f32 %v4048, %v4346
        %v4348 = vpop.f32.mrb[0].mxu0
        %v4349 = vadd.f32 %v4050, %v4348
        %v4350 = vand.u32 %v528, 4294901760
        %v4351 = vsub.f32 %v528, %v4350
        %v4352 = vand.u32 %v4351, 4294901760
        %4353 = vmatprep.mubr.f32.mxu0 %v4352
        %v4354 = vand.u32 %v527, 4294901760
        %v4355 = vsub.f32 %v527, %v4354
        %v4356 = vand.u32 %v4355, 4294901760
        %4357 = vmatmul.mubr.f32.gmra.mrb[0].mxu0 %v4356
        %v4358 = vpop.f32.mrb[0].mxu0
        %v4359 = vadd.f32 %v4058, %v4358
        %v4360 = vpop.f32.mrb[0].mxu0
        %v4361 = vadd.f32 %v4060, %v4360
        %v4362 = vand.u32 %v532, 4294901760
        %v4363 = vsub.f32 %v532, %v4362
        %v4364 = vand.u32 %v4363, 4294901760
        %4365 = vmatprep.mubr.f32.mxu0 %v4364
        %v4366 = vand.u32 %v531, 4294901760
        %v4367 = vsub.f32 %v531, %v4366
        %v4368 = vand.u32 %v4367, 4294901760
        %4369 = vmatmul.mubr.f32.gmra.mrb[0].mxu0 %v4368
        %v4370 = vpop.f32.mrb[0].mxu0
        %v4371 = vadd.f32 %v4068, %v4370
        %v4372 = vpop.f32.mrb[0].mxu0
        %v4373 = vadd.f32 %v4070, %v4372
        %v4374 = vand.u32 %v536, 4294901760
        %v4375 = vsub.f32 %v536, %v4374
        %v4376 = vand.u32 %v4375, 4294901760
        %4377 = vmatprep.mubr.f32.mxu0 %v4376
        %v4378 = vand.u32 %v535, 4294901760
        %v4379 = vsub.f32 %v535, %v4378
        %v4380 = vand.u32 %v4379, 4294901760
        %4381 = vmatmul.mubr.f32.gmra.mrb[0].mxu0 %v4380
        %v4382 = vpop.f32.mrb[0].mxu0
        %v4383 = vadd.f32 %v4078, %v4382
        %v4384 = vpop.f32.mrb[0].mxu0
        %v4385 = vadd.f32 %v4080, %v4384
        %v4386 = vand.u32 %v540, 4294901760
        %v4387 = vsub.f32 %v540, %v4386
        %v4388 = vand.u32 %v4387, 4294901760
        %4389 = vmatprep.mubr.f32.mxu0 %v4388
        %v4390 = vand.u32 %v539, 4294901760
        %v4391 = vsub.f32 %v539, %v4390
        %v4392 = vand.u32 %v4391, 4294901760
        %4393 = vmatmul.mubr.f32.gmra.mrb[0].mxu0 %v4392
        %v4394 = vpop.f32.mrb[0].mxu0
        %v4395 = vadd.f32 %v4088, %v4394
        %v4396 = vpop.f32.mrb[0].mxu0
        %v4397 = vadd.f32 %v4090, %v4396
        %v4398 = vand.u32 %v544, 4294901760
        %v4399 = vsub.f32 %v544, %v4398
        %v4400 = vand.u32 %v4399, 4294901760
        %4401 = vmatprep.mubr.f32.mxu0 %v4400
        %v4402 = vand.u32 %v543, 4294901760
        %v4403 = vsub.f32 %v543, %v4402
        %v4404 = vand.u32 %v4403, 4294901760
        %4405 = vmatmul.mubr.f32.gmra.mrb[0].mxu0 %v4404
        %v4406 = vpop.f32.mrb[0].mxu0
        %v4407 = vadd.f32 %v4098, %v4406
        %v4408 = vpop.f32.mrb[0].mxu0
        %v4409 = vadd.f32 %v4100, %v4408
        %v4410 = vand.u32 %v548, 4294901760
        %v4411 = vsub.f32 %v548, %v4410
        %v4412 = vand.u32 %v4411, 4294901760
        %4413 = vmatprep.mubr.f32.mxu0 %v4412
        %v4414 = vand.u32 %v547, 4294901760
        %v4415 = vsub.f32 %v547, %v4414
        %v4416 = vand.u32 %v4415, 4294901760
        %4417 = vmatmul.mubr.f32.gmra.mrb[0].mxu0 %v4416
        %v4418 = vpop.f32.mrb[0].mxu0
        %v4419 = vadd.f32 %v4108, %v4418
        %v4420 = vpop.f32.mrb[0].mxu0
        %v4421 = vadd.f32 %v4110, %v4420
        %v4422 = vand.u32 %v552, 4294901760
        %v4423 = vsub.f32 %v552, %v4422
        %v4424 = vand.u32 %v4423, 4294901760
        %4425 = vmatprep.mubr.f32.mxu0 %v4424
        %v4426 = vand.u32 %v551, 4294901760
        %v4427 = vsub.f32 %v551, %v4426
        %v4428 = vand.u32 %v4427, 4294901760
        %4429 = vmatmul.mubr.f32.gmra.mrb[0].mxu0 %v4428
        %v4430 = vpop.f32.mrb[0].mxu0
        %v4431 = vadd.f32 %v4118, %v4430
        %v4432 = vpop.f32.mrb[0].mxu0
        %v4433 = vadd.f32 %v4120, %v4432
        %v4434 = vand.u32 %v556, 4294901760
        %v4435 = vsub.f32 %v556, %v4434
        %v4436 = vand.u32 %v4435, 4294901760
        %4437 = vmatprep.mubr.f32.mxu0 %v4436
        %v4438 = vand.u32 %v555, 4294901760
        %v4439 = vsub.f32 %v555, %v4438
        %v4440 = vand.u32 %v4439, 4294901760
        %4441 = vmatmul.mubr.f32.gmra.mrb[0].mxu0 %v4440
        %v4442 = vpop.f32.mrb[0].mxu0
        %v4443 = vadd.f32 %v4128, %v4442
        %v4444 = vpop.f32.mrb[0].mxu0
        %v4445 = vadd.f32 %v4130, %v4444
        %v4446 = vand.u32 %v560, 4294901760
        %v4447 = vsub.f32 %v560, %v4446
        %v4448 = vand.u32 %v4447, 4294901760
        %4449 = vmatprep.mubr.f32.mxu0 %v4448
        %v4450 = vand.u32 %v559, 4294901760
        %v4451 = vsub.f32 %v559, %v4450
        %v4452 = vand.u32 %v4451, 4294901760
        %4453 = vmatmul.mubr.f32.gmra.mrb[0].mxu0 %v4452
        %v4454 = vpop.f32.mrb[0].mxu0
        %v4455 = vadd.f32 %v4138, %v4454
        %v4456 = vpop.f32.mrb[0].mxu0
        %v4457 = vadd.f32 %v4140, %v4456
        %v4458 = vand.u32 %v564, 4294901760
        %v4459 = vsub.f32 %v564, %v4458
        %v4460 = vand.u32 %v4459, 4294901760
        %4461 = vmatprep.mubr.f32.mxu0 %v4460
        %v4462 = vand.u32 %v563, 4294901760
        %v4463 = vsub.f32 %v563, %v4462
        %v4464 = vand.u32 %v4463, 4294901760
        %4465 = vmatmul.mubr.f32.gmra.mrb[0].mxu0 %v4464
        %v4466 = vpop.f32.mrb[0].mxu0
        %v4467 = vadd.f32 %v4148, %v4466
        %v4468 = vpop.f32.mrb[0].mxu0
        %v4469 = vadd.f32 %v4150, %v4468
        %v4470 = vand.u32 %v568, 4294901760
        %v4471 = vsub.f32 %v568, %v4470
        %v4472 = vand.u32 %v4471, 4294901760
        %4473 = vmatprep.mubr.f32.mxu0 %v4472
        %v4474 = vand.u32 %v567, 4294901760
        %v4475 = vsub.f32 %v567, %v4474
        %v4476 = vand.u32 %v4475, 4294901760
        %4477 = vmatmul.mubr.f32.gmra.mrb[0].mxu0 %v4476
        %v4478 = vpop.f32.mrb[0].mxu0
        %v4479 = vadd.f32 %v4158, %v4478
        %v4480 = vpop.f32.mrb[0].mxu0
        %v4481 = vadd.f32 %v4160, %v4480
        %4482 = vdwg.mxu0
        %v4483 = vand.u32 %v634, 4294901760
        %v4484 = vsub.f32 %v634, %v4483
        %v4485 = vand.u32 %v4484, 4294901760
        %4486 = vmatprep.subr.mxu0 %v4485
        %v4487 = vand.u32 %v633, 4294901760
        %v4488 = vsub.f32 %v633, %v4487
        %v4489 = vand.u32 %v4488, 4294901760
        %4490 = vmatpush1.msra.mxu0 %v4489
        %v4491 = vand.u32 %v636, 4294901760
        %v4492 = vsub.f32 %v636, %v4491
        %v4493 = vand.u32 %v4492, 4294901760
        %4494 = vmatprep.subr.mxu0 %v4493
        %v4495 = vand.u32 %v635, 4294901760
        %v4496 = vsub.f32 %v635, %v4495
        %v4497 = vand.u32 %v4496, 4294901760
        %4498 = vmatpush1.msra.mxu0 %v4497
        %v4499 = vand.u32 %v638, 4294901760
        %v4500 = vsub.f32 %v638, %v4499
        %v4501 = vand.u32 %v4500, 4294901760
        %4502 = vmatprep.subr.mxu0 %v4501
        %v4503 = vand.u32 %v637, 4294901760
        %v4504 = vsub.f32 %v637, %v4503
        %v4505 = vand.u32 %v4504, 4294901760
        %4506 = vmatpush1.msra.mxu0 %v4505
        %v4507 = vand.u32 %v640, 4294901760
        %v4508 = vsub.f32 %v640, %v4507
        %v4509 = vand.u32 %v4508, 4294901760
        %4510 = vmatprep.subr.mxu0 %v4509
        %v4511 = vand.u32 %v639, 4294901760
        %v4512 = vsub.f32 %v639, %v4511
        %v4513 = vand.u32 %v4512, 4294901760
        %4514 = vmatpush1.msra.mxu0 %v4513
        %v4515 = vand.u32 %v642, 4294901760
        %v4516 = vsub.f32 %v642, %v4515
        %v4517 = vand.u32 %v4516, 4294901760
        %4518 = vmatprep.subr.mxu0 %v4517
        %v4519 = vand.u32 %v641, 4294901760
        %v4520 = vsub.f32 %v641, %v4519
        %v4521 = vand.u32 %v4520, 4294901760
        %4522 = vmatpush1.msra.mxu0 %v4521
        %v4523 = vand.u32 %v644, 4294901760
        %v4524 = vsub.f32 %v644, %v4523
        %v4525 = vand.u32 %v4524, 4294901760
        %4526 = vmatprep.subr.mxu0 %v4525
        %v4527 = vand.u32 %v643, 4294901760
        %v4528 = vsub.f32 %v643, %v4527
        %v4529 = vand.u32 %v4528, 4294901760
        %4530 = vmatpush1.msra.mxu0 %v4529
        %v4531 = vand.u32 %v646, 4294901760
        %v4532 = vsub.f32 %v646, %v4531
        %v4533 = vand.u32 %v4532, 4294901760
        %4534 = vmatprep.subr.mxu0 %v4533
        %v4535 = vand.u32 %v645, 4294901760
        %v4536 = vsub.f32 %v645, %v4535
        %v4537 = vand.u32 %v4536, 4294901760
        %4538 = vmatpush1.msra.mxu0 %v4537
        %v4539 = vand.u32 %v648, 4294901760
        %v4540 = vsub.f32 %v648, %v4539
        %v4541 = vand.u32 %v4540, 4294901760
        %4542 = vmatprep.subr.mxu0 %v4541
        %v4543 = vand.u32 %v647, 4294901760
        %v4544 = vsub.f32 %v647, %v4543
        %v4545 = vand.u32 %v4544, 4294901760
        %4546 = vmatpush1.msra.mxu0 %v4545
        %v4547 = vand.u32 %v650, 4294901760
        %v4548 = vsub.f32 %v650, %v4547
        %v4549 = vand.u32 %v4548, 4294901760
        %4550 = vmatprep.subr.mxu0 %v4549
        %v4551 = vand.u32 %v649, 4294901760
        %v4552 = vsub.f32 %v649, %v4551
        %v4553 = vand.u32 %v4552, 4294901760
        %4554 = vmatpush1.msra.mxu0 %v4553
        %v4555 = vand.u32 %v652, 4294901760
        %v4556 = vsub.f32 %v652, %v4555
        %v4557 = vand.u32 %v4556, 4294901760
        %4558 = vmatprep.subr.mxu0 %v4557
        %v4559 = vand.u32 %v651, 4294901760
        %v4560 = vsub.f32 %v651, %v4559
        %v4561 = vand.u32 %v4560, 4294901760
        %4562 = vmatpush1.msra.mxu0 %v4561
        %v4563 = vand.u32 %v654, 4294901760
        %v4564 = vsub.f32 %v654, %v4563
        %v4565 = vand.u32 %v4564, 4294901760
        %4566 = vmatprep.subr.mxu0 %v4565
        %v4567 = vand.u32 %v653, 4294901760
        %v4568 = vsub.f32 %v653, %v4567
        %v4569 = vand.u32 %v4568, 4294901760
        %4570 = vmatpush1.msra.mxu0 %v4569
        %v4571 = vand.u32 %v656, 4294901760
        %v4572 = vsub.f32 %v656, %v4571
        %v4573 = vand.u32 %v4572, 4294901760
        %4574 = vmatprep.subr.mxu0 %v4573
        %v4575 = vand.u32 %v655, 4294901760
        %v4576 = vsub.f32 %v655, %v4575
        %v4577 = vand.u32 %v4576, 4294901760
        %4578 = vmatpush1.msra.mxu0 %v4577
        %v4579 = vand.u32 %v658, 4294901760
        %v4580 = vsub.f32 %v658, %v4579
        %v4581 = vand.u32 %v4580, 4294901760
        %4582 = vmatprep.subr.mxu0 %v4581
        %v4583 = vand.u32 %v657, 4294901760
        %v4584 = vsub.f32 %v657, %v4583
        %v4585 = vand.u32 %v4584, 4294901760
        %4586 = vmatpush1.msra.mxu0 %v4585
        %v4587 = vand.u32 %v660, 4294901760
        %v4588 = vsub.f32 %v660, %v4587
        %v4589 = vand.u32 %v4588, 4294901760
        %4590 = vmatprep.subr.mxu0 %v4589
        %v4591 = vand.u32 %v659, 4294901760
        %v4592 = vsub.f32 %v659, %v4591
        %v4593 = vand.u32 %v4592, 4294901760
        %4594 = vmatpush1.msra.mxu0 %v4593
        %v4595 = vand.u32 %v662, 4294901760
        %v4596 = vsub.f32 %v662, %v4595
        %v4597 = vand.u32 %v4596, 4294901760
        %4598 = vmatprep.subr.mxu0 %v4597
        %v4599 = vand.u32 %v661, 4294901760
        %v4600 = vsub.f32 %v661, %v4599
        %v4601 = vand.u32 %v4600, 4294901760
        %4602 = vmatpush1.msra.mxu0 %v4601
        %v4603 = vand.u32 %v664, 4294901760
        %v4604 = vsub.f32 %v664, %v4603
        %v4605 = vand.u32 %v4604, 4294901760
        %4606 = vmatprep.subr.mxu0 %v4605
        %v4607 = vand.u32 %v663, 4294901760
        %v4608 = vsub.f32 %v663, %v4607
        %v4609 = vand.u32 %v4608, 4294901760
        %4610 = vmatpush1.msra.mxu0 %v4609
        %v4611 = vand.u32 %v666, 4294901760
        %v4612 = vsub.f32 %v666, %v4611
        %v4613 = vand.u32 %v4612, 4294901760
        %4614 = vmatprep.subr.mxu0 %v4613
        %v4615 = vand.u32 %v665, 4294901760
        %v4616 = vsub.f32 %v665, %v4615
        %v4617 = vand.u32 %v4616, 4294901760
        %4618 = vmatpush1.msra.mxu0 %v4617
        %v4619 = vand.u32 %v668, 4294901760
        %v4620 = vsub.f32 %v668, %v4619
        %v4621 = vand.u32 %v4620, 4294901760
        %4622 = vmatprep.subr.mxu0 %v4621
        %v4623 = vand.u32 %v667, 4294901760
        %v4624 = vsub.f32 %v667, %v4623
        %v4625 = vand.u32 %v4624, 4294901760
        %4626 = vmatpush1.msra.mxu0 %v4625
        %v4627 = vand.u32 %v670, 4294901760
        %v4628 = vsub.f32 %v670, %v4627
        %v4629 = vand.u32 %v4628, 4294901760
        %4630 = vmatprep.subr.mxu0 %v4629
        %v4631 = vand.u32 %v669, 4294901760
        %v4632 = vsub.f32 %v669, %v4631
        %v4633 = vand.u32 %v4632, 4294901760
        %4634 = vmatpush1.msra.mxu0 %v4633
        %v4635 = vand.u32 %v672, 4294901760
        %v4636 = vsub.f32 %v672, %v4635
        %v4637 = vand.u32 %v4636, 4294901760
        %4638 = vmatprep.subr.mxu0 %v4637
        %v4639 = vand.u32 %v671, 4294901760
        %v4640 = vsub.f32 %v671, %v4639
        %v4641 = vand.u32 %v4640, 4294901760
        %4642 = vmatpush1.msra.mxu0 %v4641
        %v4643 = vand.u32 %v674, 4294901760
        %v4644 = vsub.f32 %v674, %v4643
        %v4645 = vand.u32 %v4644, 4294901760
        %4646 = vmatprep.subr.mxu0 %v4645
        %v4647 = vand.u32 %v673, 4294901760
        %v4648 = vsub.f32 %v673, %v4647
        %v4649 = vand.u32 %v4648, 4294901760
        %4650 = vmatpush1.msra.mxu0 %v4649
        %v4651 = vand.u32 %v676, 4294901760
        %v4652 = vsub.f32 %v676, %v4651
        %v4653 = vand.u32 %v4652, 4294901760
        %4654 = vmatprep.subr.mxu0 %v4653
        %v4655 = vand.u32 %v675, 4294901760
        %v4656 = vsub.f32 %v675, %v4655
        %v4657 = vand.u32 %v4656, 4294901760
        %4658 = vmatpush1.msra.mxu0 %v4657
        %v4659 = vand.u32 %v678, 4294901760
        %v4660 = vsub.f32 %v678, %v4659
        %v4661 = vand.u32 %v4660, 4294901760
        %4662 = vmatprep.subr.mxu0 %v4661
        %v4663 = vand.u32 %v677, 4294901760
        %v4664 = vsub.f32 %v677, %v4663
        %v4665 = vand.u32 %v4664, 4294901760
        %4666 = vmatpush1.msra.mxu0 %v4665
        %v4667 = vand.u32 %v680, 4294901760
        %v4668 = vsub.f32 %v680, %v4667
        %v4669 = vand.u32 %v4668, 4294901760
        %4670 = vmatprep.subr.mxu0 %v4669
        %v4671 = vand.u32 %v679, 4294901760
        %v4672 = vsub.f32 %v679, %v4671
        %v4673 = vand.u32 %v4672, 4294901760
        %4674 = vmatpush1.msra.mxu0 %v4673
        %v4675 = vand.u32 %v682, 4294901760
        %v4676 = vsub.f32 %v682, %v4675
        %v4677 = vand.u32 %v4676, 4294901760
        %4678 = vmatprep.subr.mxu0 %v4677
        %v4679 = vand.u32 %v681, 4294901760
        %v4680 = vsub.f32 %v681, %v4679
        %v4681 = vand.u32 %v4680, 4294901760
        %4682 = vmatpush1.msra.mxu0 %v4681
        %v4683 = vand.u32 %v684, 4294901760
        %v4684 = vsub.f32 %v684, %v4683
        %v4685 = vand.u32 %v4684, 4294901760
        %4686 = vmatprep.subr.mxu0 %v4685
        %v4687 = vand.u32 %v683, 4294901760
        %v4688 = vsub.f32 %v683, %v4687
        %v4689 = vand.u32 %v4688, 4294901760
        %4690 = vmatpush1.msra.mxu0 %v4689
        %v4691 = vand.u32 %v686, 4294901760
        %v4692 = vsub.f32 %v686, %v4691
        %v4693 = vand.u32 %v4692, 4294901760
        %4694 = vmatprep.subr.mxu0 %v4693
        %v4695 = vand.u32 %v685, 4294901760
        %v4696 = vsub.f32 %v685, %v4695
        %v4697 = vand.u32 %v4696, 4294901760
        %4698 = vmatpush1.msra.mxu0 %v4697
        %v4699 = vand.u32 %v688, 4294901760
        %v4700 = vsub.f32 %v688, %v4699
        %v4701 = vand.u32 %v4700, 4294901760
        %4702 = vmatprep.subr.mxu0 %v4701
        %v4703 = vand.u32 %v687, 4294901760
        %v4704 = vsub.f32 %v687, %v4703
        %v4705 = vand.u32 %v4704, 4294901760
        %4706 = vmatpush1.msra.mxu0 %v4705
        %v4707 = vand.u32 %v690, 4294901760
        %v4708 = vsub.f32 %v690, %v4707
        %v4709 = vand.u32 %v4708, 4294901760
        %4710 = vmatprep.subr.mxu0 %v4709
        %v4711 = vand.u32 %v689, 4294901760
        %v4712 = vsub.f32 %v689, %v4711
        %v4713 = vand.u32 %v4712, 4294901760
        %4714 = vmatpush1.msra.mxu0 %v4713
        %v4715 = vand.u32 %v692, 4294901760
        %v4716 = vsub.f32 %v692, %v4715
        %v4717 = vand.u32 %v4716, 4294901760
        %4718 = vmatprep.subr.mxu0 %v4717
        %v4719 = vand.u32 %v691, 4294901760
        %v4720 = vsub.f32 %v691, %v4719
        %v4721 = vand.u32 %v4720, 4294901760
        %4722 = vmatpush1.msra.mxu0 %v4721
        %v4723 = vand.u32 %v694, 4294901760
        %v4724 = vsub.f32 %v694, %v4723
        %v4725 = vand.u32 %v4724, 4294901760
        %4726 = vmatprep.subr.mxu0 %v4725
        %v4727 = vand.u32 %v693, 4294901760
        %v4728 = vsub.f32 %v693, %v4727
        %v4729 = vand.u32 %v4728, 4294901760
        %4730 = vmatpush1.msra.mxu0 %v4729
        %v4731 = vand.u32 %v696, 4294901760
        %v4732 = vsub.f32 %v696, %v4731
        %v4733 = vand.u32 %v4732, 4294901760
        %4734 = vmatprep.subr.mxu0 %v4733
        %v4735 = vand.u32 %v695, 4294901760
        %v4736 = vsub.f32 %v695, %v4735
        %v4737 = vand.u32 %v4736, 4294901760
        %4738 = vmatpush1.msra.mxu0 %v4737
        %v4739 = vand.u32 %v508, 4294901760
        %4740 = vmatprep.mubr.f32.mxu0 %v4739
        %v4741 = vand.u32 %v507, 4294901760
        %4742 = vmatmul.mubr.f32.gmra.mrb[0].mxu0 %v4741
        %v4743 = vpop.f32.mrb[0].mxu0
        %v4744 = vadd.f32 %v4299, %v4743
        %v4745 = vpop.f32.mrb[0].mxu0
        %v4746 = vadd.f32 %v4301, %v4745
        %v4747 = vand.u32 %v512, 4294901760
        %4748 = vmatprep.mubr.f32.mxu0 %v4747
        %v4749 = vand.u32 %v511, 4294901760
        %4750 = vmatmul.mubr.f32.gmra.mrb[0].mxu0 %v4749
        %v4751 = vpop.f32.mrb[0].mxu0
        %v4752 = vadd.f32 %v4311, %v4751
        %v4753 = vpop.f32.mrb[0].mxu0
        %v4754 = vadd.f32 %v4313, %v4753
        %v4755 = vand.u32 %v516, 4294901760
        %4756 = vmatprep.mubr.f32.mxu0 %v4755
        %v4757 = vand.u32 %v515, 4294901760
        %4758 = vmatmul.mubr.f32.gmra.mrb[0].mxu0 %v4757
        %v4759 = vpop.f32.mrb[0].mxu0
        %v4760 = vadd.f32 %v4323, %v4759
        %v4761 = vpop.f32.mrb[0].mxu0
        %v4762 = vadd.f32 %v4325, %v4761
        %v4763 = vand.u32 %v520, 4294901760
        %4764 = vmatprep.mubr.f32.mxu0 %v4763
        %v4765 = vand.u32 %v519, 4294901760
        %4766 = vmatmul.mubr.f32.gmra.mrb[0].mxu0 %v4765
        %v4767 = vpop.f32.mrb[0].mxu0
        %v4768 = vadd.f32 %v4335, %v4767
        %v4769 = vpop.f32.mrb[0].mxu0
        %v4770 = vadd.f32 %v4337, %v4769
        %v4771 = vand.u32 %v524, 4294901760
        %4772 = vmatprep.mubr.f32.mxu0 %v4771
        %v4773 = vand.u32 %v523, 4294901760
        %4774 = vmatmul.mubr.f32.gmra.mrb[0].mxu0 %v4773
        %v4775 = vpop.f32.mrb[0].mxu0
        %v4776 = vadd.f32 %v4347, %v4775
        %v4777 = vpop.f32.mrb[0].mxu0
        %v4778 = vadd.f32 %v4349, %v4777
        %v4779 = vand.u32 %v528, 4294901760
        %4780 = vmatprep.mubr.f32.mxu0 %v4779
        %v4781 = vand.u32 %v527, 4294901760
        %4782 = vmatmul.mubr.f32.gmra.mrb[0].mxu0 %v4781
        %v4783 = vpop.f32.mrb[0].mxu0
        %v4784 = vadd.f32 %v4359, %v4783
        %v4785 = vpop.f32.mrb[0].mxu0
        %v4786 = vadd.f32 %v4361, %v4785
        %v4787 = vand.u32 %v532, 4294901760
        %4788 = vmatprep.mubr.f32.mxu0 %v4787
        %v4789 = vand.u32 %v531, 4294901760
        %4790 = vmatmul.mubr.f32.gmra.mrb[0].mxu0 %v4789
        %v4791 = vpop.f32.mrb[0].mxu0
        %v4792 = vadd.f32 %v4371, %v4791
        %v4793 = vpop.f32.mrb[0].mxu0
        %v4794 = vadd.f32 %v4373, %v4793
        %v4795 = vand.u32 %v536, 4294901760
        %4796 = vmatprep.mubr.f32.mxu0 %v4795
        %v4797 = vand.u32 %v535, 4294901760
        %4798 = vmatmul.mubr.f32.gmra.mrb[0].mxu0 %v4797
        %v4799 = vpop.f32.mrb[0].mxu0
        %v4800 = vadd.f32 %v4383, %v4799
        %v4801 = vpop.f32.mrb[0].mxu0
        %v4802 = vadd.f32 %v4385, %v4801
        %v4803 = vand.u32 %v540, 4294901760
        %4804 = vmatprep.mubr.f32.mxu0 %v4803
        %v4805 = vand.u32 %v539, 4294901760
        %4806 = vmatmul.mubr.f32.gmra.mrb[0].mxu0 %v4805
        %v4807 = vpop.f32.mrb[0].mxu0
        %v4808 = vadd.f32 %v4395, %v4807
        %v4809 = vpop.f32.mrb[0].mxu0
        %v4810 = vadd.f32 %v4397, %v4809
        %v4811 = vand.u32 %v544, 4294901760
        %4812 = vmatprep.mubr.f32.mxu0 %v4811
        %v4813 = vand.u32 %v543, 4294901760
        %4814 = vmatmul.mubr.f32.gmra.mrb[0].mxu0 %v4813
        %v4815 = vpop.f32.mrb[0].mxu0
        %v4816 = vadd.f32 %v4407, %v4815
        %v4817 = vpop.f32.mrb[0].mxu0
        %v4818 = vadd.f32 %v4409, %v4817
        %v4819 = vand.u32 %v548, 4294901760
        %4820 = vmatprep.mubr.f32.mxu0 %v4819
        %v4821 = vand.u32 %v547, 4294901760
        %4822 = vmatmul.mubr.f32.gmra.mrb[0].mxu0 %v4821
        %v4823 = vpop.f32.mrb[0].mxu0
        %v4824 = vadd.f32 %v4419, %v4823
        %v4825 = vpop.f32.mrb[0].mxu0
        %v4826 = vadd.f32 %v4421, %v4825
        %v4827 = vand.u32 %v552, 4294901760
        %4828 = vmatprep.mubr.f32.mxu0 %v4827
        %v4829 = vand.u32 %v551, 4294901760
        %4830 = vmatmul.mubr.f32.gmra.mrb[0].mxu0 %v4829
        %v4831 = vpop.f32.mrb[0].mxu0
        %v4832 = vadd.f32 %v4431, %v4831
        %v4833 = vpop.f32.mrb[0].mxu0
        %v4834 = vadd.f32 %v4433, %v4833
        %v4835 = vand.u32 %v556, 4294901760
        %4836 = vmatprep.mubr.f32.mxu0 %v4835
        %v4837 = vand.u32 %v555, 4294901760
        %4838 = vmatmul.mubr.f32.gmra.mrb[0].mxu0 %v4837
        %v4839 = vpop.f32.mrb[0].mxu0
        %v4840 = vadd.f32 %v4443, %v4839
        %v4841 = vpop.f32.mrb[0].mxu0
        %v4842 = vadd.f32 %v4445, %v4841
        %v4843 = vand.u32 %v560, 4294901760
        %4844 = vmatprep.mubr.f32.mxu0 %v4843
        %v4845 = vand.u32 %v559, 4294901760
        %4846 = vmatmul.mubr.f32.gmra.mrb[0].mxu0 %v4845
        %v4847 = vpop.f32.mrb[0].mxu0
        %v4848 = vadd.f32 %v4455, %v4847
        %v4849 = vpop.f32.mrb[0].mxu0
        %v4850 = vadd.f32 %v4457, %v4849
        %v4851 = vand.u32 %v564, 4294901760
        %4852 = vmatprep.mubr.f32.mxu0 %v4851
        %v4853 = vand.u32 %v563, 4294901760
        %4854 = vmatmul.mubr.f32.gmra.mrb[0].mxu0 %v4853
        %v4855 = vpop.f32.mrb[0].mxu0
        %v4856 = vadd.f32 %v4467, %v4855
        %v4857 = vpop.f32.mrb[0].mxu0
        %v4858 = vadd.f32 %v4469, %v4857
        %v4859 = vand.u32 %v568, 4294901760
        %4860 = vmatprep.mubr.f32.mxu0 %v4859
        %v4861 = vand.u32 %v567, 4294901760
        %4862 = vmatmul.mubr.f32.gmra.mrb[0].mxu0 %v4861
        %v4863 = vpop.f32.mrb[0].mxu0
        %v4864 = vadd.f32 %v4479, %v4863
        %v4865 = vpop.f32.mrb[0].mxu0
        %v4866 = vadd.f32 %v4481, %v4865
        %4867 = vdwg.mxu0
        %v4868 = vand.u32 %v634, 4294901760
        %4869 = vmatprep.subr.mxu0 %v4868
        %v4870 = vand.u32 %v633, 4294901760
        %4871 = vmatpush1.msra.mxu0 %v4870
        %v4872 = vand.u32 %v636, 4294901760
        %4873 = vmatprep.subr.mxu0 %v4872
        %v4874 = vand.u32 %v635, 4294901760
        %4875 = vmatpush1.msra.mxu0 %v4874
        %v4876 = vand.u32 %v638, 4294901760
        %4877 = vmatprep.subr.mxu0 %v4876
        %v4878 = vand.u32 %v637, 4294901760
        %4879 = vmatpush1.msra.mxu0 %v4878
        %v4880 = vand.u32 %v640, 4294901760
        %4881 = vmatprep.subr.mxu0 %v4880
        %v4882 = vand.u32 %v639, 4294901760
        %4883 = vmatpush1.msra.mxu0 %v4882
        %v4884 = vand.u32 %v642, 4294901760
        %4885 = vmatprep.subr.mxu0 %v4884
        %v4886 = vand.u32 %v641, 4294901760
        %4887 = vmatpush1.msra.mxu0 %v4886
        %v4888 = vand.u32 %v644, 4294901760
        %4889 = vmatprep.subr.mxu0 %v4888
        %v4890 = vand.u32 %v643, 4294901760
        %4891 = vmatpush1.msra.mxu0 %v4890
        %v4892 = vand.u32 %v646, 4294901760
        %4893 = vmatprep.subr.mxu0 %v4892
        %v4894 = vand.u32 %v645, 4294901760
        %4895 = vmatpush1.msra.mxu0 %v4894
        %v4896 = vand.u32 %v648, 4294901760
        %4897 = vmatprep.subr.mxu0 %v4896
        %v4898 = vand.u32 %v647, 4294901760
        %4899 = vmatpush1.msra.mxu0 %v4898
        %v4900 = vand.u32 %v650, 4294901760
        %4901 = vmatprep.subr.mxu0 %v4900
        %v4902 = vand.u32 %v649, 4294901760
        %4903 = vmatpush1.msra.mxu0 %v4902
        %v4904 = vand.u32 %v652, 4294901760
        %4905 = vmatprep.subr.mxu0 %v4904
        %v4906 = vand.u32 %v651, 4294901760
        %4907 = vmatpush1.msra.mxu0 %v4906
        %v4908 = vand.u32 %v654, 4294901760
        %4909 = vmatprep.subr.mxu0 %v4908
        %v4910 = vand.u32 %v653, 4294901760
        %4911 = vmatpush1.msra.mxu0 %v4910
        %v4912 = vand.u32 %v656, 4294901760
        %4913 = vmatprep.subr.mxu0 %v4912
        %v4914 = vand.u32 %v655, 4294901760
        %4915 = vmatpush1.msra.mxu0 %v4914
        %v4916 = vand.u32 %v658, 4294901760
        %4917 = vmatprep.subr.mxu0 %v4916
        %v4918 = vand.u32 %v657, 4294901760
        %4919 = vmatpush1.msra.mxu0 %v4918
        %v4920 = vand.u32 %v660, 4294901760
        %4921 = vmatprep.subr.mxu0 %v4920
        %v4922 = vand.u32 %v659, 4294901760
        %4923 = vmatpush1.msra.mxu0 %v4922
        %v4924 = vand.u32 %v662, 4294901760
        %4925 = vmatprep.subr.mxu0 %v4924
        %v4926 = vand.u32 %v661, 4294901760
        %4927 = vmatpush1.msra.mxu0 %v4926
        %v4928 = vand.u32 %v664, 4294901760
        %4929 = vmatprep.subr.mxu0 %v4928
        %v4930 = vand.u32 %v663, 4294901760
        %4931 = vmatpush1.msra.mxu0 %v4930
        %v4932 = vand.u32 %v666, 4294901760
        %4933 = vmatprep.subr.mxu0 %v4932
        %v4934 = vand.u32 %v665, 4294901760
        %4935 = vmatpush1.msra.mxu0 %v4934
        %v4936 = vand.u32 %v668, 4294901760
        %4937 = vmatprep.subr.mxu0 %v4936
        %v4938 = vand.u32 %v667, 4294901760
        %4939 = vmatpush1.msra.mxu0 %v4938
        %v4940 = vand.u32 %v670, 4294901760
        %4941 = vmatprep.subr.mxu0 %v4940
        %v4942 = vand.u32 %v669, 4294901760
        %4943 = vmatpush1.msra.mxu0 %v4942
        %v4944 = vand.u32 %v672, 4294901760
        %4945 = vmatprep.subr.mxu0 %v4944
        %v4946 = vand.u32 %v671, 4294901760
        %4947 = vmatpush1.msra.mxu0 %v4946
        %v4948 = vand.u32 %v674, 4294901760
        %4949 = vmatprep.subr.mxu0 %v4948
        %v4950 = vand.u32 %v673, 4294901760
        %4951 = vmatpush1.msra.mxu0 %v4950
        %v4952 = vand.u32 %v676, 4294901760
        %4953 = vmatprep.subr.mxu0 %v4952
        %v4954 = vand.u32 %v675, 4294901760
        %4955 = vmatpush1.msra.mxu0 %v4954
        %v4956 = vand.u32 %v678, 4294901760
        %4957 = vmatprep.subr.mxu0 %v4956
        %v4958 = vand.u32 %v677, 4294901760
        %4959 = vmatpush1.msra.mxu0 %v4958
        %v4960 = vand.u32 %v680, 4294901760
        %4961 = vmatprep.subr.mxu0 %v4960
        %v4962 = vand.u32 %v679, 4294901760
        %4963 = vmatpush1.msra.mxu0 %v4962
        %v4964 = vand.u32 %v682, 4294901760
        %4965 = vmatprep.subr.mxu0 %v4964
        %v4966 = vand.u32 %v681, 4294901760
        %4967 = vmatpush1.msra.mxu0 %v4966
        %v4968 = vand.u32 %v684, 4294901760
        %4969 = vmatprep.subr.mxu0 %v4968
        %v4970 = vand.u32 %v683, 4294901760
        %4971 = vmatpush1.msra.mxu0 %v4970
        %v4972 = vand.u32 %v686, 4294901760
        %4973 = vmatprep.subr.mxu0 %v4972
        %v4974 = vand.u32 %v685, 4294901760
        %4975 = vmatpush1.msra.mxu0 %v4974
        %v4976 = vand.u32 %v688, 4294901760
        %4977 = vmatprep.subr.mxu0 %v4976
        %v4978 = vand.u32 %v687, 4294901760
        %4979 = vmatpush1.msra.mxu0 %v4978
        %v4980 = vand.u32 %v690, 4294901760
        %4981 = vmatprep.subr.mxu0 %v4980
        %v4982 = vand.u32 %v689, 4294901760
        %4983 = vmatpush1.msra.mxu0 %v4982
        %v4984 = vand.u32 %v692, 4294901760
        %4985 = vmatprep.subr.mxu0 %v4984
        %v4986 = vand.u32 %v691, 4294901760
        %4987 = vmatpush1.msra.mxu0 %v4986
        %v4988 = vand.u32 %v694, 4294901760
        %4989 = vmatprep.subr.mxu0 %v4988
        %v4990 = vand.u32 %v693, 4294901760
        %4991 = vmatpush1.msra.mxu0 %v4990
        %v4992 = vand.u32 %v696, 4294901760
        %4993 = vmatprep.subr.mxu0 %v4992
        %v4994 = vand.u32 %v695, 4294901760
        %4995 = vmatpush1.msra.mxu0 %v4994
        %v4996 = vand.u32 %v508, 4294901760
        %4997 = vmatprep.mubr.f32.mxu0 %v4996
        %v4998 = vand.u32 %v507, 4294901760
        %4999 = vmatmul.mubr.f32.gmra.mrb[0].mxu0 %v4998
        %v5000 = vpop.f32.mrb[0].mxu0
        %v5001 = vadd.f32 %v4744, %v5000
        %v5002 = vpop.f32.mrb[0].mxu0
        %v5003 = vadd.f32 %v4746, %v5002
        %v5004 = vand.u32 %v512, 4294901760
        %5005 = vmatprep.mubr.f32.mxu0 %v5004
        %v5006 = vand.u32 %v511, 4294901760
        %5007 = vmatmul.mubr.f32.gmra.mrb[0].mxu0 %v5006
        %v5008 = vpop.f32.mrb[0].mxu0
        %v5009 = vadd.f32 %v4752, %v5008
        %v5010 = vpop.f32.mrb[0].mxu0
        %v5011 = vadd.f32 %v4754, %v5010
        %v5012 = vand.u32 %v516, 4294901760
        %5013 = vmatprep.mubr.f32.mxu0 %v5012
        %v5014 = vand.u32 %v515, 4294901760
        %5015 = vmatmul.mubr.f32.gmra.mrb[0].mxu0 %v5014
        %v5016 = vpop.f32.mrb[0].mxu0
        %v5017 = vadd.f32 %v4760, %v5016
        %v5018 = vpop.f32.mrb[0].mxu0
        %v5019 = vadd.f32 %v4762, %v5018
        %v5020 = vand.u32 %v520, 4294901760
        %5021 = vmatprep.mubr.f32.mxu0 %v5020
        %v5022 = vand.u32 %v519, 4294901760
        %5023 = vmatmul.mubr.f32.gmra.mrb[0].mxu0 %v5022
        %v5024 = vpop.f32.mrb[0].mxu0
        %v5025 = vadd.f32 %v4768, %v5024
        %v5026 = vpop.f32.mrb[0].mxu0
        %v5027 = vadd.f32 %v4770, %v5026
        %v5028 = vand.u32 %v524, 4294901760
        %5029 = vmatprep.mubr.f32.mxu0 %v5028
        %v5030 = vand.u32 %v523, 4294901760
        %5031 = vmatmul.mubr.f32.gmra.mrb[0].mxu0 %v5030
        %v5032 = vpop.f32.mrb[0].mxu0
        %v5033 = vadd.f32 %v4776, %v5032
        %v5034 = vpop.f32.mrb[0].mxu0
        %v5035 = vadd.f32 %v4778, %v5034
        %v5036 = vand.u32 %v528, 4294901760
        %5037 = vmatprep.mubr.f32.mxu0 %v5036
        %v5038 = vand.u32 %v527, 4294901760
        %5039 = vmatmul.mubr.f32.gmra.mrb[0].mxu0 %v5038
        %v5040 = vpop.f32.mrb[0].mxu0
        %v5041 = vadd.f32 %v4784, %v5040
        %v5042 = vpop.f32.mrb[0].mxu0
        %v5043 = vadd.f32 %v4786, %v5042
        %v5044 = vand.u32 %v532, 4294901760
        %5045 = vmatprep.mubr.f32.mxu0 %v5044
        %v5046 = vand.u32 %v531, 4294901760
        %5047 = vmatmul.mubr.f32.gmra.mrb[0].mxu0 %v5046
        %v5048 = vpop.f32.mrb[0].mxu0
        %v5049 = vadd.f32 %v4792, %v5048
        %v5050 = vpop.f32.mrb[0].mxu0
        %v5051 = vadd.f32 %v4794, %v5050
        %v5052 = vand.u32 %v536, 4294901760
        %5053 = vmatprep.mubr.f32.mxu0 %v5052
        %v5054 = vand.u32 %v535, 4294901760
        %5055 = vmatmul.mubr.f32.gmra.mrb[0].mxu0 %v5054
        %v5056 = vpop.f32.mrb[0].mxu0
        %v5057 = vadd.f32 %v4800, %v5056
        %v5058 = vpop.f32.mrb[0].mxu0
        %v5059 = vadd.f32 %v4802, %v5058
        %v5060 = vand.u32 %v540, 4294901760
        %5061 = vmatprep.mubr.f32.mxu0 %v5060
        %v5062 = vand.u32 %v539, 4294901760
        %5063 = vmatmul.mubr.f32.gmra.mrb[0].mxu0 %v5062
        %v5064 = vpop.f32.mrb[0].mxu0
        %v5065 = vadd.f32 %v4808, %v5064
        %v5066 = vpop.f32.mrb[0].mxu0
        %v5067 = vadd.f32 %v4810, %v5066
        %v5068 = vand.u32 %v544, 4294901760
        %5069 = vmatprep.mubr.f32.mxu0 %v5068
        %v5070 = vand.u32 %v543, 4294901760
        %5071 = vmatmul.mubr.f32.gmra.mrb[0].mxu0 %v5070
        %v5072 = vpop.f32.mrb[0].mxu0
        %v5073 = vadd.f32 %v4816, %v5072
        %v5074 = vpop.f32.mrb[0].mxu0
        %v5075 = vadd.f32 %v4818, %v5074
        %v5076 = vand.u32 %v548, 4294901760
        %5077 = vmatprep.mubr.f32.mxu0 %v5076
        %v5078 = vand.u32 %v547, 4294901760
        %5079 = vmatmul.mubr.f32.gmra.mrb[0].mxu0 %v5078
        %v5080 = vpop.f32.mrb[0].mxu0
        %v5081 = vadd.f32 %v4824, %v5080
        %v5082 = vpop.f32.mrb[0].mxu0
        %v5083 = vadd.f32 %v4826, %v5082
        %v5084 = vand.u32 %v552, 4294901760
        %5085 = vmatprep.mubr.f32.mxu0 %v5084
        %v5086 = vand.u32 %v551, 4294901760
        %5087 = vmatmul.mubr.f32.gmra.mrb[0].mxu0 %v5086
        %v5088 = vpop.f32.mrb[0].mxu0
        %v5089 = vadd.f32 %v4832, %v5088
        %v5090 = vpop.f32.mrb[0].mxu0
        %v5091 = vadd.f32 %v4834, %v5090
        %v5092 = vand.u32 %v556, 4294901760
        %5093 = vmatprep.mubr.f32.mxu0 %v5092
        %v5094 = vand.u32 %v555, 4294901760
        %5095 = vmatmul.mubr.f32.gmra.mrb[0].mxu0 %v5094
        %v5096 = vpop.f32.mrb[0].mxu0
        %v5097 = vadd.f32 %v4840, %v5096
        %v5098 = vpop.f32.mrb[0].mxu0
        %v5099 = vadd.f32 %v4842, %v5098
        %v5100 = vand.u32 %v560, 4294901760
        %5101 = vmatprep.mubr.f32.mxu0 %v5100
        %v5102 = vand.u32 %v559, 4294901760
        %5103 = vmatmul.mubr.f32.gmra.mrb[0].mxu0 %v5102
        %v5104 = vpop.f32.mrb[0].mxu0
        %v5105 = vadd.f32 %v4848, %v5104
        %v5106 = vpop.f32.mrb[0].mxu0
        %v5107 = vadd.f32 %v4850, %v5106
        %v5108 = vand.u32 %v564, 4294901760
        %5109 = vmatprep.mubr.f32.mxu0 %v5108
        %v5110 = vand.u32 %v563, 4294901760
        %5111 = vmatmul.mubr.f32.gmra.mrb[0].mxu0 %v5110
        %v5112 = vpop.f32.mrb[0].mxu0
        %v5113 = vadd.f32 %v4856, %v5112
        %v5114 = vpop.f32.mrb[0].mxu0
        %v5115 = vadd.f32 %v4858, %v5114
        %v5116 = vand.u32 %v568, 4294901760
        %5117 = vmatprep.mubr.f32.mxu0 %v5116
        %v5118 = vand.u32 %v567, 4294901760
        %5119 = vmatmul.mubr.f32.gmra.mrb[0].mxu0 %v5118
        %v5120 = vpop.f32.mrb[0].mxu0
        %v5121 = vadd.f32 %v4864, %v5120
        %v5122 = vpop.f32.mrb[0].mxu0
        %v5123 = vadd.f32 %v4866, %v5122
        %5124 = vdwg.mxu0
        %v5125 = vadd.f32 %v473, %v5001
        %v5126 = vadd.f32 %v474, %v5003
        %v5127 = vadd.f32 %v475, %v5009
        %v5128 = vadd.f32 %v476, %v5011
        %v5129 = vadd.f32 %v477, %v5017
        %v5130 = vadd.f32 %v478, %v5019
        %v5131 = vadd.f32 %v479, %v5025
        %v5132 = vadd.f32 %v480, %v5027
        %v5133 = vadd.f32 %v481, %v5033
        %v5134 = vadd.f32 %v482, %v5035
        %v5135 = vadd.f32 %v483, %v5041
        %v5136 = vadd.f32 %v484, %v5043
        %v5137 = vadd.f32 %v485, %v5049
        %v5138 = vadd.f32 %v486, %v5051
        %v5139 = vadd.f32 %v487, %v5057
        %v5140 = vadd.f32 %v488, %v5059
        %v5141 = vadd.f32 %v489, %v5065
        %v5142 = vadd.f32 %v490, %v5067
        %v5143 = vadd.f32 %v491, %v5073
        %v5144 = vadd.f32 %v492, %v5075
        %v5145 = vadd.f32 %v493, %v5081
        %v5146 = vadd.f32 %v494, %v5083
        %v5147 = vadd.f32 %v495, %v5089
        %v5148 = vadd.f32 %v496, %v5091
        %v5149 = vadd.f32 %v497, %v5097
        %v5150 = vadd.f32 %v498, %v5099
        %v5151 = vadd.f32 %v499, %v5105
        %v5152 = vadd.f32 %v500, %v5107
        %v5153 = vadd.f32 %v501, %v5113
        %v5154 = vadd.f32 %v502, %v5115
        %v5155 = vadd.f32 %v503, %v5121
        %v5156 = vadd.f32 %v504, %v5123
        %5157 = vst [vmem:[#allocation2] sm:$0xff] %v5125
        %5158 = vst [vmem:[#allocation2 + $0x8] sm:$0xff] %v5126
        %5159 = vst [vmem:[#allocation2 + $0x10] sm:$0xff] %v5127
        %5160 = vst [vmem:[#allocation2 + $0x18] sm:$0xff] %v5128
        %5161 = vst [vmem:[#allocation2 + $0x20] sm:$0xff] %v5129
        %5162 = vst [vmem:[#allocation2 + $0x28] sm:$0xff] %v5130
        %5163 = vst [vmem:[#allocation2 + $0x30] sm:$0xff] %v5131
        %5164 = vst [vmem:[#allocation2 + $0x38] sm:$0xff] %v5132
        %5165 = vst [vmem:[#allocation2 + $0x40] sm:$0xff] %v5133
        %5166 = vst [vmem:[#allocation2 + $0x48] sm:$0xff] %v5134
        %5167 = vst [vmem:[#allocation2 + $0x50] sm:$0xff] %v5135
        %5168 = vst [vmem:[#allocation2 + $0x58] sm:$0xff] %v5136
        %5169 = vst [vmem:[#allocation2 + $0x60] sm:$0xff] %v5137
        %5170 = vst [vmem:[#allocation2 + $0x68] sm:$0xff] %v5138
        %5171 = vst [vmem:[#allocation2 + $0x70] sm:$0xff] %v5139
        %5172 = vst [vmem:[#allocation2 + $0x78] sm:$0xff] %v5140
        %5173 = vst [vmem:[#allocation2 + $0x80] sm:$0xff] %v5141
        %5174 = vst [vmem:[#allocation2 + $0x88] sm:$0xff] %v5142
        %5175 = vst [vmem:[#allocation2 + $0x90] sm:$0xff] %v5143
        %5176 = vst [vmem:[#allocation2 + $0x98] sm:$0xff] %v5144
        %5177 = vst [vmem:[#allocation2 + $0xa0] sm:$0xff] %v5145
        %5178 = vst [vmem:[#allocation2 + $0xa8] sm:$0xff] %v5146
        %5179 = vst [vmem:[#allocation2 + $0xb0] sm:$0xff] %v5147
        %5180 = vst [vmem:[#allocation2 + $0xb8] sm:$0xff] %v5148
        %5181 = vst [vmem:[#allocation2 + $0xc0] sm:$0xff] %v5149
        %5182 = vst [vmem:[#allocation2 + $0xc8] sm:$0xff] %v5150
        %5183 = vst [vmem:[#allocation2 + $0xd0] sm:$0xff] %v5151
        %5184 = vst [vmem:[#allocation2 + $0xd8] sm:$0xff] %v5152
        %5185 = vst [vmem:[#allocation2 + $0xe0] sm:$0xff] %v5153
        %5186 = vst [vmem:[#allocation2 + $0xe8] sm:$0xff] %v5154
        %5187 = vst [vmem:[#allocation2 + $0xf0] sm:$0xff] %v5155
        %5188 = vst [vmem:[#allocation2 + $0xf8] sm:$0xff] %v5156
        // Predicated region
        $region65: #{tpu_custom_call.1} parent=39 // pred_check
          %p5189 = pneg %p437
        $region66: #{tpu_custom_call.1} parent=39 // pred_check_branch
          %5191 = sbr.rel (%p5189) target = $region68
        $region67: #{tpu_custom_call.1} parent=39 // pred_region
          %v5192 = vld [vmem:[#allocation2] sm:$0xff]
          %v5193 = vld [vmem:[#allocation2 + $0x8] sm:$0xff]
          %v5194 = vld [vmem:[#allocation2 + $0x10] sm:$0xff]
          %v5195 = vld [vmem:[#allocation2 + $0x18] sm:$0xff]
          %v5196 = vld [vmem:[#allocation2 + $0x20] sm:$0xff]
          %v5197 = vld [vmem:[#allocation2 + $0x28] sm:$0xff]
          %v5198 = vld [vmem:[#allocation2 + $0x30] sm:$0xff]
          %v5199 = vld [vmem:[#allocation2 + $0x38] sm:$0xff]
          %v5200 = vld [vmem:[#allocation2 + $0x40] sm:$0xff]
          %v5201 = vld [vmem:[#allocation2 + $0x48] sm:$0xff]
          %v5202 = vld [vmem:[#allocation2 + $0x50] sm:$0xff]
          %v5203 = vld [vmem:[#allocation2 + $0x58] sm:$0xff]
          %v5204 = vld [vmem:[#allocation2 + $0x60] sm:$0xff]
          %v5205 = vld [vmem:[#allocation2 + $0x68] sm:$0xff]
          %v5206 = vld [vmem:[#allocation2 + $0x70] sm:$0xff]
          %v5207 = vld [vmem:[#allocation2 + $0x78] sm:$0xff]
          %v5208 = vld [vmem:[#allocation2 + $0x80] sm:$0xff]
          %v5209 = vld [vmem:[#allocation2 + $0x88] sm:$0xff]
          %v5210 = vld [vmem:[#allocation2 + $0x90] sm:$0xff]
          %v5211 = vld [vmem:[#allocation2 + $0x98] sm:$0xff]
          %v5212 = vld [vmem:[#allocation2 + $0xa0] sm:$0xff]
          %v5213 = vld [vmem:[#allocation2 + $0xa8] sm:$0xff]
          %v5214 = vld [vmem:[#allocation2 + $0xb0] sm:$0xff]
          %v5215 = vld [vmem:[#allocation2 + $0xb8] sm:$0xff]
          %v5216 = vld [vmem:[#allocation2 + $0xc0] sm:$0xff]
          %v5217 = vld [vmem:[#allocation2 + $0xc8] sm:$0xff]
          %v5218 = vld [vmem:[#allocation2 + $0xd0] sm:$0xff]
          %v5219 = vld [vmem:[#allocation2 + $0xd8] sm:$0xff]
          %v5220 = vld [vmem:[#allocation2 + $0xe0] sm:$0xff]
          %v5221 = vld [vmem:[#allocation2 + $0xe8] sm:$0xff]
          %v5222 = vld [vmem:[#allocation2 + $0xf0] sm:$0xff]
          %v5223 = vld [vmem:[#allocation2 + $0xf8] sm:$0xff]
          %5224 = vrot.lane.b32.xlu0 %v5192, 64
          %v5225 = vpop.permute.xlu0 %5224
          %5226 = vrot.lane.b32.xlu0 %v5194, 64
          %v5227 = vpop.permute.xlu0 %5226
          %5228 = vrot.lane.b32.xlu0 %v5196, 64
          %v5229 = vpop.permute.xlu0 %5228
          %5230 = vrot.lane.b32.xlu0 %v5198, 64
          %v5231 = vpop.permute.xlu0 %5230
          %5232 = vrot.lane.b32.xlu0 %v5200, 64
          %v5233 = vpop.permute.xlu0 %5232
          %5234 = vrot.lane.b32.xlu0 %v5202, 64
          %v5235 = vpop.permute.xlu0 %5234
          %5236 = vrot.lane.b32.xlu0 %v5204, 64
          %v5237 = vpop.permute.xlu0 %5236
          %5238 = vrot.lane.b32.xlu0 %v5206, 64
          %v5239 = vpop.permute.xlu0 %5238
          %5240 = vrot.lane.b32.xlu0 %v5208, 64
          %v5241 = vpop.permute.xlu0 %5240
          %5242 = vrot.lane.b32.xlu0 %v5210, 64
          %v5243 = vpop.permute.xlu0 %5242
          %5244 = vrot.lane.b32.xlu0 %v5212, 64
          %v5245 = vpop.permute.xlu0 %5244
          %5246 = vrot.lane.b32.xlu0 %v5214, 64
          %v5247 = vpop.permute.xlu0 %5246
          %5248 = vrot.lane.b32.xlu0 %v5216, 64
          %v5249 = vpop.permute.xlu0 %5248
          %5250 = vrot.lane.b32.xlu0 %v5218, 64
          %v5251 = vpop.permute.xlu0 %5250
          %5252 = vrot.lane.b32.xlu0 %v5220, 64
          %v5253 = vpop.permute.xlu0 %5252
          %5254 = vrot.lane.b32.xlu0 %v5222, 64
          %v5255 = vpop.permute.xlu0 %5254
          %5256 = vrot.lane.b32.xlu0 %v5193, 64
          %v5257 = vpop.permute.xlu0 %5256
          %5258 = vrot.lane.b32.xlu0 %v5195, 64
          %v5259 = vpop.permute.xlu0 %5258
          %5260 = vrot.lane.b32.xlu0 %v5197, 64
          %v5261 = vpop.permute.xlu0 %5260
          %5262 = vrot.lane.b32.xlu0 %v5199, 64
          %v5263 = vpop.permute.xlu0 %5262
          %5264 = vrot.lane.b32.xlu0 %v5201, 64
          %v5265 = vpop.permute.xlu0 %5264
          %5266 = vrot.lane.b32.xlu0 %v5203, 64
          %v5267 = vpop.permute.xlu0 %5266
          %5268 = vrot.lane.b32.xlu0 %v5205, 64
          %v5269 = vpop.permute.xlu0 %5268
          %5270 = vrot.lane.b32.xlu0 %v5207, 64
          %v5271 = vpop.permute.xlu0 %5270
          %5272 = vrot.lane.b32.xlu0 %v5209, 64
          %v5273 = vpop.permute.xlu0 %5272
          %5274 = vrot.lane.b32.xlu0 %v5211, 64
          %v5275 = vpop.permute.xlu0 %5274
          %5276 = vrot.lane.b32.xlu0 %v5213, 64
          %v5277 = vpop.permute.xlu0 %5276
          %5278 = vrot.lane.b32.xlu0 %v5215, 64
          %v5279 = vpop.permute.xlu0 %5278
          %5280 = vrot.lane.b32.xlu0 %v5217, 64
          %v5281 = vpop.permute.xlu0 %5280
          %5282 = vrot.lane.b32.xlu0 %v5219, 64
          %v5283 = vpop.permute.xlu0 %5282
          %5284 = vrot.lane.b32.xlu0 %v5221, 64
          %v5285 = vpop.permute.xlu0 %5284
          %5286 = vrot.lane.b32.xlu0 %v5223, 64
          %v5287 = vpop.permute.xlu0 %5286
          %v5288 = vlaneseq
          %v5289 = vand.u32 %v5288, 127
          %vm5290 = vcmp.lt.s32.totalorder %v5289, 64
          %v5291 = vsel %vm5290, %v5225, %v5257
          %v5292 = vsel %vm5290, %v5227, %v5259
          %v5293 = vsel %vm5290, %v5229, %v5261
          %v5294 = vsel %vm5290, %v5231, %v5263
          %v5295 = vsel %vm5290, %v5233, %v5265
          %v5296 = vsel %vm5290, %v5235, %v5267
          %v5297 = vsel %vm5290, %v5237, %v5269
          %v5298 = vsel %vm5290, %v5239, %v5271
          %v5299 = vsel %vm5290, %v5241, %v5273
          %v5300 = vsel %vm5290, %v5243, %v5275
          %v5301 = vsel %vm5290, %v5245, %v5277
          %v5302 = vsel %vm5290, %v5247, %v5279
          %v5303 = vsel %vm5290, %v5249, %v5281
          %v5304 = vsel %vm5290, %v5251, %v5283
          %v5305 = vsel %vm5290, %v5253, %v5285
          %v5306 = vsel %vm5290, %v5255, %v5287
          %v5307 = vsel %vm5290, %v5257, %v5225
          %v5308 = vsel %vm5290, %v5259, %v5227
          %v5309 = vsel %vm5290, %v5261, %v5229
          %v5310 = vsel %vm5290, %v5263, %v5231
          %v5311 = vsel %vm5290, %v5265, %v5233
          %v5312 = vsel %vm5290, %v5267, %v5235
          %v5313 = vsel %vm5290, %v5269, %v5237
          %v5314 = vsel %vm5290, %v5271, %v5239
          %v5315 = vsel %vm5290, %v5273, %v5241
          %v5316 = vsel %vm5290, %v5275, %v5243
          %v5317 = vsel %vm5290, %v5277, %v5245
          %v5318 = vsel %vm5290, %v5279, %v5247
          %v5319 = vsel %vm5290, %v5281, %v5249
          %v5320 = vsel %vm5290, %v5283, %v5251
          %v5321 = vsel %vm5290, %v5285, %v5253
          %v5322 = vsel %vm5290, %v5287, %v5255
          %v5323 = vld [vmem:[%s363] sm:$0xff]
          %v5324 = vld [vmem:[%s363 + $0x8] sm:$0xff]
          %v5325 = vld [vmem:[%s363 + $0x10] sm:$0xff]
          %v5326 = vld [vmem:[%s363 + $0x18] sm:$0xff]
          %v5327 = vld [vmem:[%s363 + $0x20] sm:$0xff]
          %v5328 = vld [vmem:[%s363 + $0x28] sm:$0xff]
          %v5329 = vld [vmem:[%s363 + $0x30] sm:$0xff]
          %v5330 = vld [vmem:[%s363 + $0x38] sm:$0xff]
          %v5331 = vld [vmem:[%s363 + $0x40] sm:$0xff]
          %v5332 = vld [vmem:[%s363 + $0x48] sm:$0xff]
          %v5333 = vld [vmem:[%s363 + $0x50] sm:$0xff]
          %v5334 = vld [vmem:[%s363 + $0x58] sm:$0xff]
          %v5335 = vld [vmem:[%s363 + $0x60] sm:$0xff]
          %v5336 = vld [vmem:[%s363 + $0x68] sm:$0xff]
          %v5337 = vld [vmem:[%s363 + $0x70] sm:$0xff]
          %v5338 = vld [vmem:[%s363 + $0x78] sm:$0xff]
          %v5339 = vld [vmem:[%s363 + $0x80] sm:$0xff]
          %v5340 = vld [vmem:[%s363 + $0x88] sm:$0xff]
          %v5341 = vld [vmem:[%s363 + $0x90] sm:$0xff]
          %v5342 = vld [vmem:[%s363 + $0x98] sm:$0xff]
          %v5343 = vld [vmem:[%s363 + $0xa0] sm:$0xff]
          %v5344 = vld [vmem:[%s363 + $0xa8] sm:$0xff]
          %v5345 = vld [vmem:[%s363 + $0xb0] sm:$0xff]
          %v5346 = vld [vmem:[%s363 + $0xb8] sm:$0xff]
          %v5347 = vld [vmem:[%s363 + $0xc0] sm:$0xff]
          %v5348 = vld [vmem:[%s363 + $0xc8] sm:$0xff]
          %v5349 = vld [vmem:[%s363 + $0xd0] sm:$0xff]
          %v5350 = vld [vmem:[%s363 + $0xd8] sm:$0xff]
          %v5351 = vld [vmem:[%s363 + $0xe0] sm:$0xff]
          %v5352 = vld [vmem:[%s363 + $0xe8] sm:$0xff]
          %v5353 = vld [vmem:[%s363 + $0xf0] sm:$0xff]
          %v5354 = vld [vmem:[%s363 + $0xf8] sm:$0xff]
          %v5355 = vmul.f32 %v5192, %v5323
          %v5356 = vmul.f32 %v5193, %v5324
          %v5357 = vmul.f32 %v5194, %v5325
          %v5358 = vmul.f32 %v5195, %v5326
          %v5359 = vmul.f32 %v5196, %v5327
          %v5360 = vmul.f32 %v5197, %v5328
          %v5361 = vmul.f32 %v5198, %v5329
          %v5362 = vmul.f32 %v5199, %v5330
          %v5363 = vmul.f32 %v5200, %v5331
          %v5364 = vmul.f32 %v5201, %v5332
          %v5365 = vmul.f32 %v5202, %v5333
          %v5366 = vmul.f32 %v5203, %v5334
          %v5367 = vmul.f32 %v5204, %v5335
          %v5368 = vmul.f32 %v5205, %v5336
          %v5369 = vmul.f32 %v5206, %v5337
          %v5370 = vmul.f32 %v5207, %v5338
          %v5371 = vmul.f32 %v5208, %v5339
          %v5372 = vmul.f32 %v5209, %v5340
          %v5373 = vmul.f32 %v5210, %v5341
          %v5374 = vmul.f32 %v5211, %v5342
          %v5375 = vmul.f32 %v5212, %v5343
          %v5376 = vmul.f32 %v5213, %v5344
          %v5377 = vmul.f32 %v5214, %v5345
          %v5378 = vmul.f32 %v5215, %v5346
          %v5379 = vmul.f32 %v5216, %v5347
          %v5380 = vmul.f32 %v5217, %v5348
          %v5381 = vmul.f32 %v5218, %v5349
          %v5382 = vmul.f32 %v5219, %v5350
          %v5383 = vmul.f32 %v5220, %v5351
          %v5384 = vmul.f32 %v5221, %v5352
          %v5385 = vmul.f32 %v5222, %v5353
          %v5386 = vmul.f32 %v5223, %v5354
          %v5387 = vld [vmem:[%s372] sm:$0xff]
          %v5388 = vld [vmem:[%s372 + $0x8] sm:$0xff]
          %v5389 = vld [vmem:[%s372 + $0x10] sm:$0xff]
          %v5390 = vld [vmem:[%s372 + $0x18] sm:$0xff]
          %v5391 = vld [vmem:[%s372 + $0x20] sm:$0xff]
          %v5392 = vld [vmem:[%s372 + $0x28] sm:$0xff]
          %v5393 = vld [vmem:[%s372 + $0x30] sm:$0xff]
          %v5394 = vld [vmem:[%s372 + $0x38] sm:$0xff]
          %v5395 = vld [vmem:[%s372 + $0x40] sm:$0xff]
          %v5396 = vld [vmem:[%s372 + $0x48] sm:$0xff]
          %v5397 = vld [vmem:[%s372 + $0x50] sm:$0xff]
          %v5398 = vld [vmem:[%s372 + $0x58] sm:$0xff]
          %v5399 = vld [vmem:[%s372 + $0x60] sm:$0xff]
          %v5400 = vld [vmem:[%s372 + $0x68] sm:$0xff]
          %v5401 = vld [vmem:[%s372 + $0x70] sm:$0xff]
          %v5402 = vld [vmem:[%s372 + $0x78] sm:$0xff]
          %v5403 = vld [vmem:[%s372 + $0x80] sm:$0xff]
          %v5404 = vld [vmem:[%s372 + $0x88] sm:$0xff]
          %v5405 = vld [vmem:[%s372 + $0x90] sm:$0xff]
          %v5406 = vld [vmem:[%s372 + $0x98] sm:$0xff]
          %v5407 = vld [vmem:[%s372 + $0xa0] sm:$0xff]
          %v5408 = vld [vmem:[%s372 + $0xa8] sm:$0xff]
          %v5409 = vld [vmem:[%s372 + $0xb0] sm:$0xff]
          %v5410 = vld [vmem:[%s372 + $0xb8] sm:$0xff]
          %v5411 = vld [vmem:[%s372 + $0xc0] sm:$0xff]
          %v5412 = vld [vmem:[%s372 + $0xc8] sm:$0xff]
          %v5413 = vld [vmem:[%s372 + $0xd0] sm:$0xff]
          %v5414 = vld [vmem:[%s372 + $0xd8] sm:$0xff]
          %v5415 = vld [vmem:[%s372 + $0xe0] sm:$0xff]
          %v5416 = vld [vmem:[%s372 + $0xe8] sm:$0xff]
          %v5417 = vld [vmem:[%s372 + $0xf0] sm:$0xff]
          %v5418 = vld [vmem:[%s372 + $0xf8] sm:$0xff]
          %v5419 = vmul.f32 %v5291, %v5387
          %v5420 = vmul.f32 %v5307, %v5388
          %v5421 = vmul.f32 %v5292, %v5389
          %v5422 = vmul.f32 %v5308, %v5390
          %v5423 = vmul.f32 %v5293, %v5391
          %v5424 = vmul.f32 %v5309, %v5392
          %v5425 = vmul.f32 %v5294, %v5393
          %v5426 = vmul.f32 %v5310, %v5394
          %v5427 = vmul.f32 %v5295, %v5395
          %v5428 = vmul.f32 %v5311, %v5396
          %v5429 = vmul.f32 %v5296, %v5397
          %v5430 = vmul.f32 %v5312, %v5398
          %v5431 = vmul.f32 %v5297, %v5399
          %v5432 = vmul.f32 %v5313, %v5400
          %v5433 = vmul.f32 %v5298, %v5401
          %v5434 = vmul.f32 %v5314, %v5402
          %v5435 = vmul.f32 %v5299, %v5403
          %v5436 = vmul.f32 %v5315, %v5404
          %v5437 = vmul.f32 %v5300, %v5405
          %v5438 = vmul.f32 %v5316, %v5406
          %v5439 = vmul.f32 %v5301, %v5407
          %v5440 = vmul.f32 %v5317, %v5408
          %v5441 = vmul.f32 %v5302, %v5409
          %v5442 = vmul.f32 %v5318, %v5410
          %v5443 = vmul.f32 %v5303, %v5411
          %v5444 = vmul.f32 %v5319, %v5412
          %v5445 = vmul.f32 %v5304, %v5413
          %v5446 = vmul.f32 %v5320, %v5414
          %v5447 = vmul.f32 %v5305, %v5415
          %v5448 = vmul.f32 %v5321, %v5416
          %v5449 = vmul.f32 %v5306, %v5417
          %v5450 = vmul.f32 %v5322, %v5418
          %v5451 = vadd.f32 %v5355, %v5419
          %v5452 = vadd.f32 %v5356, %v5420
          %v5453 = vadd.f32 %v5357, %v5421
          %v5454 = vadd.f32 %v5358, %v5422
          %v5455 = vadd.f32 %v5359, %v5423
          %v5456 = vadd.f32 %v5360, %v5424
          %v5457 = vadd.f32 %v5361, %v5425
          %v5458 = vadd.f32 %v5362, %v5426
          %v5459 = vadd.f32 %v5363, %v5427
          %v5460 = vadd.f32 %v5364, %v5428
          %v5461 = vadd.f32 %v5365, %v5429
          %v5462 = vadd.f32 %v5366, %v5430
          %v5463 = vadd.f32 %v5367, %v5431
          %v5464 = vadd.f32 %v5368, %v5432
          %v5465 = vadd.f32 %v5369, %v5433
          %v5466 = vadd.f32 %v5370, %v5434
          %v5467 = vadd.f32 %v5371, %v5435
          %v5468 = vadd.f32 %v5372, %v5436
          %v5469 = vadd.f32 %v5373, %v5437
          %v5470 = vadd.f32 %v5374, %v5438
          %v5471 = vadd.f32 %v5375, %v5439
          %v5472 = vadd.f32 %v5376, %v5440
          %v5473 = vadd.f32 %v5377, %v5441
          %v5474 = vadd.f32 %v5378, %v5442
          %v5475 = vadd.f32 %v5379, %v5443
          %v5476 = vadd.f32 %v5380, %v5444
          %v5477 = vadd.f32 %v5381, %v5445
          %v5478 = vadd.f32 %v5382, %v5446
          %v5479 = vadd.f32 %v5383, %v5447
          %v5480 = vadd.f32 %v5384, %v5448
          %v5481 = vadd.f32 %v5385, %v5449
          %v5482 = vadd.f32 %v5386, %v5450
          %v5483 = vld [vmem:[%s381] sm:$0xff]
          %v5484 = vld [vmem:[%s381 + $0x8] sm:$0xff]
          %v5485 = vld [vmem:[%s381 + $0x10] sm:$0xff]
          %v5486 = vld [vmem:[%s381 + $0x18] sm:$0xff]
          %v5487 = vld [vmem:[%s381 + $0x20] sm:$0xff]
          %v5488 = vld [vmem:[%s381 + $0x28] sm:$0xff]
          %v5489 = vld [vmem:[%s381 + $0x30] sm:$0xff]
          %v5490 = vld [vmem:[%s381 + $0x38] sm:$0xff]
          %v5491 = vld [vmem:[%s381 + $0x40] sm:$0xff]
          %v5492 = vld [vmem:[%s381 + $0x48] sm:$0xff]
          %v5493 = vld [vmem:[%s381 + $0x50] sm:$0xff]
          %v5494 = vld [vmem:[%s381 + $0x58] sm:$0xff]
          %v5495 = vld [vmem:[%s381 + $0x60] sm:$0xff]
          %v5496 = vld [vmem:[%s381 + $0x68] sm:$0xff]
          %v5497 = vld [vmem:[%s381 + $0x70] sm:$0xff]
          %v5498 = vld [vmem:[%s381 + $0x78] sm:$0xff]
          %v5499 = vld [vmem:[%s381 + $0x80] sm:$0xff]
          %v5500 = vld [vmem:[%s381 + $0x88] sm:$0xff]
          %v5501 = vld [vmem:[%s381 + $0x90] sm:$0xff]
          %v5502 = vld [vmem:[%s381 + $0x98] sm:$0xff]
          %v5503 = vld [vmem:[%s381 + $0xa0] sm:$0xff]
          %v5504 = vld [vmem:[%s381 + $0xa8] sm:$0xff]
          %v5505 = vld [vmem:[%s381 + $0xb0] sm:$0xff]
          %v5506 = vld [vmem:[%s381 + $0xb8] sm:$0xff]
          %v5507 = vld [vmem:[%s381 + $0xc0] sm:$0xff]
          %v5508 = vld [vmem:[%s381 + $0xc8] sm:$0xff]
          %v5509 = vld [vmem:[%s381 + $0xd0] sm:$0xff]
          %v5510 = vld [vmem:[%s381 + $0xd8] sm:$0xff]
          %v5511 = vld [vmem:[%s381 + $0xe0] sm:$0xff]
          %v5512 = vld [vmem:[%s381 + $0xe8] sm:$0xff]
          %v5513 = vld [vmem:[%s381 + $0xf0] sm:$0xff]
          %v5514 = vld [vmem:[%s381 + $0xf8] sm:$0xff]
          %v5515 = vmul.f32 %v5307, %v5483
          %v5516 = vmul.f32 %v5291, %v5484
          %v5517 = vmul.f32 %v5308, %v5485
          %v5518 = vmul.f32 %v5292, %v5486
          %v5519 = vmul.f32 %v5309, %v5487
          %v5520 = vmul.f32 %v5293, %v5488
          %v5521 = vmul.f32 %v5310, %v5489
          %v5522 = vmul.f32 %v5294, %v5490
          %v5523 = vmul.f32 %v5311, %v5491
          %v5524 = vmul.f32 %v5295, %v5492
          %v5525 = vmul.f32 %v5312, %v5493
          %v5526 = vmul.f32 %v5296, %v5494
          %v5527 = vmul.f32 %v5313, %v5495
          %v5528 = vmul.f32 %v5297, %v5496
          %v5529 = vmul.f32 %v5314, %v5497
          %v5530 = vmul.f32 %v5298, %v5498
          %v5531 = vmul.f32 %v5315, %v5499
          %v5532 = vmul.f32 %v5299, %v5500
          %v5533 = vmul.f32 %v5316, %v5501
          %v5534 = vmul.f32 %v5300, %v5502
          %v5535 = vmul.f32 %v5317, %v5503
          %v5536 = vmul.f32 %v5301, %v5504
          %v5537 = vmul.f32 %v5318, %v5505
          %v5538 = vmul.f32 %v5302, %v5506
          %v5539 = vmul.f32 %v5319, %v5507
          %v5540 = vmul.f32 %v5303, %v5508
          %v5541 = vmul.f32 %v5320, %v5509
          %v5542 = vmul.f32 %v5304, %v5510
          %v5543 = vmul.f32 %v5321, %v5511
          %v5544 = vmul.f32 %v5305, %v5512
          %v5545 = vmul.f32 %v5322, %v5513
          %v5546 = vmul.f32 %v5306, %v5514
          %v5547 = vadd.f32 %v5451, %v5515
          %v5548 = vadd.f32 %v5452, %v5516
          %v5549 = vadd.f32 %v5453, %v5517
          %v5550 = vadd.f32 %v5454, %v5518
          %v5551 = vadd.f32 %v5455, %v5519
          %v5552 = vadd.f32 %v5456, %v5520
          %v5553 = vadd.f32 %v5457, %v5521
          %v5554 = vadd.f32 %v5458, %v5522
          %v5555 = vadd.f32 %v5459, %v5523
          %v5556 = vadd.f32 %v5460, %v5524
          %v5557 = vadd.f32 %v5461, %v5525
          %v5558 = vadd.f32 %v5462, %v5526
          %v5559 = vadd.f32 %v5463, %v5527
          %v5560 = vadd.f32 %v5464, %v5528
          %v5561 = vadd.f32 %v5465, %v5529
          %v5562 = vadd.f32 %v5466, %v5530
          %v5563 = vadd.f32 %v5467, %v5531
          %v5564 = vadd.f32 %v5468, %v5532
          %v5565 = vadd.f32 %v5469, %v5533
          %v5566 = vadd.f32 %v5470, %v5534
          %v5567 = vadd.f32 %v5471, %v5535
          %v5568 = vadd.f32 %v5472, %v5536
          %v5569 = vadd.f32 %v5473, %v5537
          %v5570 = vadd.f32 %v5474, %v5538
          %v5571 = vadd.f32 %v5475, %v5539
          %v5572 = vadd.f32 %v5476, %v5540
          %v5573 = vadd.f32 %v5477, %v5541
          %v5574 = vadd.f32 %v5478, %v5542
          %v5575 = vadd.f32 %v5479, %v5543
          %v5576 = vadd.f32 %v5480, %v5544
          %v5577 = vadd.f32 %v5481, %v5545
          %v5578 = vadd.f32 %v5482, %v5546
          %5579 = vst [vmem:[%s427] sm:$0xff] %v5547
          %5580 = vst [vmem:[%s427 + $0x8] sm:$0xff] %v5548
          %5581 = vst [vmem:[%s427 + $0x10] sm:$0xff] %v5549
          %5582 = vst [vmem:[%s427 + $0x18] sm:$0xff] %v5550
          %5583 = vst [vmem:[%s427 + $0x20] sm:$0xff] %v5551
          %5584 = vst [vmem:[%s427 + $0x28] sm:$0xff] %v5552
          %5585 = vst [vmem:[%s427 + $0x30] sm:$0xff] %v5553
          %5586 = vst [vmem:[%s427 + $0x38] sm:$0xff] %v5554
          %5587 = vst [vmem:[%s427 + $0x40] sm:$0xff] %v5555
          %5588 = vst [vmem:[%s427 + $0x48] sm:$0xff] %v5556
          %5589 = vst [vmem:[%s427 + $0x50] sm:$0xff] %v5557
          %5590 = vst [vmem:[%s427 + $0x58] sm:$0xff] %v5558
          %5591 = vst [vmem:[%s427 + $0x60] sm:$0xff] %v5559
          %5592 = vst [vmem:[%s427 + $0x68] sm:$0xff] %v5560
          %5593 = vst [vmem:[%s427 + $0x70] sm:$0xff] %v5561
          %5594 = vst [vmem:[%s427 + $0x78] sm:$0xff] %v5562
          %5595 = vst [vmem:[%s427 + $0x80] sm:$0xff] %v5563
          %5596 = vst [vmem:[%s427 + $0x88] sm:$0xff] %v5564
          %5597 = vst [vmem:[%s427 + $0x90] sm:$0xff] %v5565
          %5598 = vst [vmem:[%s427 + $0x98] sm:$0xff] %v5566
          %5599 = vst [vmem:[%s427 + $0xa0] sm:$0xff] %v5567
          %5600 = vst [vmem:[%s427 + $0xa8] sm:$0xff] %v5568
          %5601 = vst [vmem:[%s427 + $0xb0] sm:$0xff] %v5569
          %5602 = vst [vmem:[%s427 + $0xb8] sm:$0xff] %v5570
          %5603 = vst [vmem:[%s427 + $0xc0] sm:$0xff] %v5571
          %5604 = vst [vmem:[%s427 + $0xc8] sm:$0xff] %v5572
          %5605 = vst [vmem:[%s427 + $0xd0] sm:$0xff] %v5573
          %5606 = vst [vmem:[%s427 + $0xd8] sm:$0xff] %v5574
          %5607 = vst [vmem:[%s427 + $0xe0] sm:$0xff] %v5575
          %5608 = vst [vmem:[%s427 + $0xe8] sm:$0xff] %v5576
          %5609 = vst [vmem:[%s427 + $0xf0] sm:$0xff] %v5577
          %5610 = vst [vmem:[%s427 + $0xf8] sm:$0xff] %v5578
        $region68: #{tpu_custom_call.1} parent=39 // pred_fallthru
          _
        %s5611 = sand.u32 %s191, 1
        %s5612 = scalar_lea.sflag [#allocation5], %s5611
        %s5613 = sand.u32 %s191, 1
        %s5614 = smul.addr %s5613, 256
        %s5615 = scalar_lea.vmem [#allocation12], %s5614
        // Predicated region
        $region69: #{tpu_custom_call.1} parent=39 // pred_check
          %p5616 = pneg %p201
        $region70: #{tpu_custom_call.1} parent=39 // pred_check_branch
          %5618 = sbr.rel (%p5616) target = $region72
        $region71: #{tpu_custom_call.1} parent=39 // pred_region
          %s5619 = smul.u32 16, %s33
          %s5620 = smul.u32 2, %s34
          %s5622 = ssub.s32 4096, 4096
          %5623 = vsyncadd %s5612, %s5622
          %s5624 = smul.addr %s5619, 8
          %s5625 = sadd.s32 %s5620, %s5624
          %s5626 = smul.addr %s5625, 128
          %s5627 = scalar_lea.hbm %s5, %s5626
          %s5628 = sshll.u32 %s5615, 4
          %s5629 = int_to_ptr.vmem [resolvable:$true] %s5628
          %5634 = dma.vmem_to_hbm [thread:$0]  %s5629, 4096, %s5627, %s5612, 256, 1024, 16
        $region72: #{tpu_custom_call.1} parent=39 // pred_fallthru
          _
      $region40: #{tpu_custom_call.1} parent=5 // pred_fallthru
        _
      %p5635 = scmp.le.s32.totalorder 2, %s23
      // Predicated region
      $region73: #{tpu_custom_call.1} parent=5 // pred_check
        %p5636 = pneg %p5635
      $region74: #{tpu_custom_call.1} parent=5 // pred_check_branch
        %5638 = sbr.rel (%p5636) target = $region76
      $region75: #{tpu_custom_call.1} parent=5 // pred_region
        %s5639 = ssub.s32 %s23, 2
        // Predicated region
        $region77: #{tpu_custom_call.1} parent=75 // pred_check
          %p5640 = pneg %p207
        $region78: #{tpu_custom_call.1} parent=75 // pred_check_branch
          %5642 = sbr.rel (%p5640) target = $region80
        $region79: #{tpu_custom_call.1} parent=75 // pred_region
          %s5643 = sand.u32 %s192, 1
          %s5644 = scalar_lea.sflag [#allocation5], %s5643
          %s5645 = sand.u32 %s192, 1
          %s5646 = smul.addr %s5645, 256
          %s5647 = scalar_lea.vmem [#allocation12], %s5646
          %5648 = dma.done %s5644, 4096
        $region80: #{tpu_custom_call.1} parent=75 // pred_fallthru
          _
      $region76: #{tpu_custom_call.1} parent=5 // pred_fallthru
        _
    $region6: #{tpu_custom_call.1} parent=1 // loop_footer
      %s27 = sadd.s32 1, %s23
    $region7: #{tpu_custom_call.1} parent=1 // loop_footer_branch
      %22 = sbr.rel target = $region3
    $region8: #{tpu_custom_call.1} parent=1 // loop_exit
      _
    %5649 = vsyncpa [#allocation4], 1
    %s5650 = scalar_lea.sflag [#allocation4], 1
    %5651 = vsyncpa %s5650, 1
    %5652 = vsyncpa [#allocation7], 1
    %s5653 = scalar_lea.sflag [#allocation7], 1
    %5654 = vsyncpa %s5653, 1
    %5655 = vsyncpa [#allocation10], 1
    %s5656 = scalar_lea.sflag [#allocation10], 1
    %5657 = vsyncpa %s5656, 1
    %5658 = vsyncpa [#allocation5], 1
    %s5659 = scalar_lea.sflag [#allocation5], 1
    %5660 = vsyncpa %s5659, 1

</llo_original>
